<compile_context>
chip_gen: v7x
topology: tpu7x:2x2x1
jax: 0.10.0
libtpu: 0.0.40
codegen_flags: <defaults>
</compile_context>

<pallas_src>
import numpy as np
import jax
import jax.numpy as jnp
from jax.experimental import pallas as pl
from jax.experimental.pallas import tpu as pltpu

# ---- model dimensions (small, consistent with the SAM forward) -------------
IMG = 32                        # input image spatial size
PATCH = 8                       # patch size -> 4x4 embedding grid
GRID = IMG // PATCH             # 4
NTOK = GRID * GRID              # 16 image tokens
D = 32                          # embedding dim
ENC_MLP = 64
NUM_MASK_TOKENS = 4             # num_multimask_outputs + 1 (SAM default)
NUM_OUT_TOKENS = 1 + NUM_MASK_TOKENS   # iou token + mask tokens = 5
UP1 = 16                        # upscale channels D -> UP1 -> UP2
UP2 = 8
LOW_RES = GRID * 4              # 16x16 low-res masks
PATCH_DIM = 3 * PATCH * PATCH   # 192
UPCOLS = 16 * UP2               # 128 fused upscale columns: col = s1*32 + s2*8 + c2

# Rows of the packed f32 constant table (biases, LN params, small constants).
_CONST_ROWS = (
    ("patch_b", D), ("enc_bqkv", 3 * D), ("enc_bo", D),
    ("enc_mlp1_b", ENC_MLP), ("enc_mlp2_b", D),
    ("dec_bq", D), ("dec_bkv", 2 * D), ("dec_bo", D),
    ("dec_mlp1_b", 2 * D), ("dec_mlp2_b", D),
    ("up1_b", 4 * UP1), ("up2_b", UPCOLS), ("hyp1_b", D), ("hyp2_b", UPCOLS),
    ("no_mask", D),
    ("ln1_g", D), ("ln1_b", D), ("ln2_g", D), ("ln2_b", D),
    ("dln1_g", D), ("dln1_b", D), ("dln2_g", D), ("dln2_b", D),
)
_ROW_IDX = {name: i for i, (name, _) in enumerate(_CONST_ROWS)}
_ROW_WIDTH = dict(_CONST_ROWS)

# Order of the weight operands passed to the fused kernel (must match signature).
_WEIGHT_ORDER = (
    "const",
    "patch_w", "pos_emb", "pe_k",
    "enc_wqkv", "enc_wo", "enc_mlp1_w", "enc_mlp2_w",
    "dec_wq", "dec_wkv", "dec_wo", "dec_mlp1_w", "dec_mlp2_w",
    "up1_w", "up2_w", "hyp1_w", "hyp2_w", "ssum",
)


# ---------------------------------------------------------------------------
# Fused Pallas kernel: whole SAM forward for one batch element per grid step.
# ---------------------------------------------------------------------------
def _sam_fused_kernel(
    # per-batch activations (blocked over the batch grid axis)
    patches_ref, tokens_ref,
    # shared constants / weights (whole-array VMEM residents)
    const_ref,
    patch_w_ref, pos_emb_ref, pe_k_ref,
    enc_wqkv_ref, enc_wo_ref, enc_mlp1_w_ref, enc_mlp2_w_ref,
    dec_wq_ref, dec_wkv_ref, dec_wo_ref, dec_mlp1_w_ref, dec_mlp2_w_ref,
    up1_w_ref, up2_w_ref, hyp1_w_ref, hyp2_w_ref, ssum_ref,
    # output: (16 grid pixels, 16 sub-pixel mask values); depth-to-space in wrapper
    mask_ref,
):
    f32, bf16 = jnp.float32, jnp.bfloat16

    def cst(name):
        r = _ROW_IDX[name]
        return const_ref[r:r + 1, : _ROW_WIDTH[name]]     # (1, W) f32, lane offset 0

    def mm(x, w_ref, bias_name):
        # bf16 MXU pass, f32 accumulation, f32 bias epilogue.
        return jnp.dot(x.astype(bf16), w_ref[...],
                       preferred_element_type=f32) + cst(bias_name)

    def layer_norm(x, gname, bname):
        mu = jnp.mean(x, axis=-1, keepdims=True)
        xc = x - mu
        var = jnp.mean(xc * xc, axis=-1, keepdims=True)
        return xc * jax.lax.rsqrt(var + 1e-6) * cst(gname) + cst(bname)

    def gelu(x):
        return jax.nn.gelu(x, approximate=True)

    def attention(q, k, v):
        # 1/sqrt(D) is pre-folded into the Q projection weights (wrapper-side).
        s = jax.lax.dot_general(q.astype(bf16), k.astype(bf16),
                                (((1,), (1,)), ((), ())),
                                preferred_element_type=f32)
        m = jnp.max(s, axis=-1, keepdims=True)
        e = jnp.exp(s - m)
        p = e * pl.reciprocal(jnp.sum(e, axis=-1, keepdims=True), approx=True)
        return jnp.dot(p.astype(bf16), v.astype(bf16), preferred_element_type=f32)

    # --- image encoder: patch embed + pre-LN transformer block ---------------
    x = mm(patches_ref[...], patch_w_ref, "patch_b") + pos_emb_ref[...]      # (16, D)
    h = layer_norm(x, "ln1_g", "ln1_b")
    qkv = mm(h, enc_wqkv_ref, "enc_bqkv")                                    # (16, 3D)
    a = attention(qkv[:, 0:D], qkv[:, D:2 * D], qkv[:, 2 * D:3 * D])
    x = x + mm(a, enc_wo_ref, "enc_bo")
    h = layer_norm(x, "ln2_g", "ln2_b")
    x = x + mm(gelu(mm(h, enc_mlp1_w_ref, "enc_mlp1_b")),
               enc_mlp2_w_ref, "enc_mlp2_b")                                 # (16, D)

    # --- mask decoder ---------------------------------------------------------
    src = x + cst("no_mask")             # + dense (no-mask) prompt embedding
    tok = tokens_ref[...]                # (7, D): iou, 4 mask, 2 box-corner tokens

    # cross-attention: tokens -> image embedding.  K/V share one fused matmul;
    # the dense-PE contribution (pos_pe @ Wk) is a precomputed constant.
    q = mm(tok, dec_wq_ref, "dec_bq")
    kv = mm(src, dec_wkv_ref, "dec_bkv")                                     # (16, 2D)
    k = kv[:, 0:D] + pe_k_ref[...]
    v = kv[:, D:2 * D]
    a = attention(q, k, v)
    tok = layer_norm(tok + mm(a, dec_wo_ref, "dec_bo"), "dln1_g", "dln1_b")
    tok = layer_norm(tok + mm(gelu(mm(tok, dec_mlp1_w_ref, "dec_mlp1_b")),
                              dec_mlp2_w_ref, "dec_mlp2_b"), "dln2_g", "dln2_b")

    # hypernetwork on the first mask token (multimask_output=False); second
    # layer is pre-tiled so the output already lives in the 128-wide upscale
    # column layout (col = s1*32 + s2*8 + c2  ->  value hvec[c2]).
    mask_tok = tok[1:2, :]                                                   # (1, D)
    hb = mm(gelu(mm(mask_tok, hyp1_w_ref, "hyp1_b")), hyp2_w_ref, "hyp2_b")  # (1, 128)

    # Fused upscaling: two exact ConvTranspose2d(k=2,s=2) as matmuls.
    #   up1_w cols : s1*UP1 + c1                   (s1 = dy*2+dx, tconv1 sub-pixel)
    #   up2_w      : block-diagonal (64,128); block s1 cols = s2*UP2 + c2
    # Hypernet product is one full-width (16,128) VPU multiply; the sum over the
    # UP2 channels is one matmul with the constant 0/1 matrix S (128,16).
    u1 = gelu(mm(src, up1_w_ref, "up1_b"))                                   # (16, 64)
    g2 = gelu(mm(u1, up2_w_ref, "up2_b"))                                    # (16, 128)
    prod = (g2 * hb).astype(bf16)                                            # (16, 128)
    mask_ref[...] = jnp.dot(prod, ssum_ref[...],
                            preferred_element_type=f32)                      # (16, 16)


# ---------------------------------------------------------------------------
# Plain-JAX helpers (input / output layout plumbing, runs once per call)
# ---------------------------------------------------------------------------
def _pe_encode(gauss, coords01):
    """SAM PositionEmbeddingRandom: coords in [0,1], (..., 2) -> (..., D)."""
    c = 2.0 * coords01 - 1.0
    c = c @ gauss
    c = 2.0 * jnp.pi * c
    return jnp.concatenate([jnp.sin(c), jnp.cos(c)], axis=-1)


# ---------------------------------------------------------------------------
# Parameters (deterministic synthetic init — identical to the reference model)
# ---------------------------------------------------------------------------
def init_params(key):
    keys = iter(jax.random.split(key, 40))

    def w(shape, scale=0.05):
        return (scale * jax.random.normal(next(keys), shape)).astype(jnp.float32)

    z = lambda n: jnp.zeros((n,), jnp.float32)
    o = lambda n: jnp.ones((n,), jnp.float32)

    p = {}
    # --- image encoder (patch embed + 1 transformer block) ---
    p["patch_w"], p["patch_b"] = w((PATCH_DIM, D)), z(D)
    p["pos_emb"] = w((NTOK, D))
    p["ln1_g"], p["ln1_b"] = o(D), z(D)
    p["enc_wq"], p["enc_bq"] = w((D, D)), z(D)
    p["enc_wk"], p["enc_bk"] = w((D, D)), z(D)
    p["enc_wv"], p["enc_bv"] = w((D, D)), z(D)
    p["enc_wo"], p["enc_bo"] = w((D, D)), z(D)
    p["ln2_g"], p["ln2_b"] = o(D), z(D)
    p["enc_mlp1_w"], p["enc_mlp1_b"] = w((D, ENC_MLP)), z(ENC_MLP)
    p["enc_mlp2_w"], p["enc_mlp2_b"] = w((ENC_MLP, D)), z(D)
    # --- prompt encoder ---
    p["pe_gauss"] = w((2, D // 2), scale=1.0)
    p["point_emb"] = w((4, D))          # indices 2,3 used for box corners
    p["no_mask_embed"] = w((D,))
    # --- mask decoder ---
    p["iou_token"] = w((1, D))
    p["mask_tokens"] = w((NUM_MASK_TOKENS, D))
    p["dec_wq"], p["dec_bq"] = w((D, D)), z(D)
    p["dec_wk"], p["dec_bk"] = w((D, D)), z(D)
    p["dec_wv"], p["dec_bv"] = w((D, D)), z(D)
    p["dec_wo"], p["dec_bo"] = w((D, D)), z(D)
    p["dec_ln1_g"], p["dec_ln1_b"] = o(D), z(D)
    p["dec_mlp1_w"], p["dec_mlp1_b"] = w((D, 2 * D)), z(2 * D)
    p["dec_mlp2_w"], p["dec_mlp2_b"] = w((2 * D, D)), z(D)
    p["dec_ln2_g"], p["dec_ln2_b"] = o(D), z(D)
    p["up1_w"], p["up1_b"] = w((D, UP1 * 4)), z(UP1 * 4)        # cols: c1*4 + dy*2+dx
    p["up2_w"], p["up2_b"] = w((UP1, UP2 * 4)), z(UP2 * 4)      # cols: c2*4 + ey*2+ex
    p["hyper1_w"], p["hyper1_b"] = w((D, D)), z(D)
    p["hyper2_w"], p["hyper2_b"] = w((D, UP2)), z(UP2)
    return p


def prepare_inference_params(p):
    """One-time (outside the jit hot path) packing/casting of parameters:
    bf16 MXU weights, fused QKV / KV, 1/sqrt(D) folded into the Q weights,
    all biases + LN params packed into one (rows,128) f32 table, block-diagonal
    tconv2 weight, tiled hypernet output layer, the 0/1 channel-sum matrix, and
    the constant dense-PE key contribution pos_pe @ Wk."""
    bf16, f32 = jnp.bfloat16, jnp.float32
    scale = 1.0 / (D ** 0.5)
    cw = lambda a: jnp.asarray(a).astype(bf16)   # matmul weight -> bf16

    w = {}
    # --- image encoder ---
    w["patch_w"] = cw(p["patch_w"])
    w["pos_emb"] = p["pos_emb"].astype(f32)
    w["enc_wqkv"] = cw(jnp.concatenate(
        [p["enc_wq"] * scale, p["enc_wk"], p["enc_wv"]], axis=1))
    enc_bqkv = jnp.concatenate([p["enc_bq"] * scale, p["enc_bk"], p["enc_bv"]])
    w["enc_wo"] = cw(p["enc_wo"])
    w["enc_mlp1_w"] = cw(p["enc_mlp1_w"])
    w["enc_mlp2_w"] = cw(p["enc_mlp2_w"])
    # --- mask decoder ---
    w["dec_wq"] = cw(p["dec_wq"] * scale)
    dec_bq = p["dec_bq"] * scale
    w["dec_wkv"] = cw(jnp.concatenate([p["dec_wk"], p["dec_wv"]], axis=1))
    dec_bkv = jnp.concatenate([p["dec_bk"], p["dec_bv"]])
    w["dec_wo"] = cw(p["dec_wo"])
    w["dec_mlp1_w"] = cw(p["dec_mlp1_w"])
    w["dec_mlp2_w"] = cw(p["dec_mlp2_w"])
    w["hyp1_w"] = cw(p["hyper1_w"])
    # hypernet layer 2 tiled to the 128-wide upscale layout (col = k*UP2 + c2).
    w["hyp2_w"] = cw(jnp.tile(p["hyper2_w"], (1, 16)))
    hyp2_b = jnp.tile(p["hyper2_b"], 16)
    # tconv1 columns re-ordered sub-pixel-major ((dy*2+dx)*UP1 + c1).
    up1_w = p["up1_w"].reshape(D, UP1, 4).transpose(0, 2, 1).reshape(D, 4 * UP1)
    up1_b = p["up1_b"].reshape(UP1, 4).T.reshape(-1)
    w["up1_w"] = cw(up1_w)
    # tconv2 columns re-ordered sub-pixel-major (s2*UP2 + c2), then laid out as a
    # block-diagonal (64,128) so all four tconv1 sub-pixels go through one matmul.
    up2_r = np.asarray(p["up2_w"].reshape(UP1, UP2, 4)
                       .transpose(0, 2, 1).reshape(UP1, 4 * UP2))
    up2b_r = np.asarray(p["up2_b"].reshape(UP2, 4).T.reshape(-1))
    up2_block = np.zeros((4 * UP1, UPCOLS), np.float32)
    for s1 in range(4):
        up2_block[s1 * UP1:(s1 + 1) * UP1, s1 * 4 * UP2:(s1 + 1) * 4 * UP2] = up2_r
    w["up2_w"] = cw(up2_block)
    up2_b_full = jnp.asarray(np.tile(up2b_r, 4), f32)
    # channel-sum matrix S: (128,16), S[s1*32 + s2*8 + c2, s1*4 + s2] = 1.
    rows = np.arange(UPCOLS)
    S = np.zeros((UPCOLS, 16), np.float32)
    S[rows, (rows // 32) * 4 + (rows % 32) // UP2] = 1.0
    w["ssum"] = jnp.asarray(S).astype(bf16)
    # prompt-encoder constants (wrapper-side)
    w["pe_gauss"] = p["pe_gauss"].astype(f32)
    w["point_emb_box"] = p["point_emb"][2:4].astype(f32)                      # (2, D)
    w["output_tokens"] = jnp.concatenate([p["iou_token"], p["mask_tokens"]], 0).astype(f32)
    # constant dense positional encoding of the 4x4 feature grid, pre-multiplied
    # by the decoder key projection (hoists a constant matmul out of the kernel).
    ys = (jnp.arange(GRID, dtype=f32) + 0.5) / GRID
    xs = (jnp.arange(GRID, dtype=f32) + 0.5) / GRID
    gy, gx = jnp.meshgrid(ys, xs, indexing="ij")
    coords = jnp.stack([gx, gy], axis=-1).reshape(NTOK, 2)
    pos_pe = _pe_encode(w["pe_gauss"], coords)                                # (NTOK, D)
    w["pe_k"] = (pos_pe @ p["dec_wk"]).astype(f32)
    # --- packed f32 constant table (one VMEM resident instead of ~16) ---
    const_vals = {
        "patch_b": p["patch_b"], "enc_bqkv": enc_bqkv, "enc_bo": p["enc_bo"],
        "enc_mlp1_b": p["enc_mlp1_b"], "enc_mlp2_b": p["enc_mlp2_b"],
        "dec_bq": dec_bq, "dec_bkv": dec_bkv, "dec_bo": p["dec_bo"],
        "dec_mlp1_b": p["dec_mlp1_b"], "dec_mlp2_b": p["dec_mlp2_b"],
        "up1_b": up1_b, "up2_b": up2_b_full, "hyp1_b": p["hyper1_b"], "hyp2_b": hyp2_b,
        "no_mask": p["no_mask_embed"],
        "ln1_g": p["ln1_g"], "ln1_b": p["ln1_b"], "ln2_g": p["ln2_g"], "ln2_b": p["ln2_b"],
        "dln1_g": p["dec_ln1_g"], "dln1_b": p["dec_ln1_b"],
        "dln2_g": p["dec_ln2_g"], "dln2_b": p["dec_ln2_b"],
    }

    def pad128(v):
        v = jnp.asarray(v, f32).reshape(-1)
        return jnp.pad(v, (0, 128 - v.shape[0]))

    w["const"] = jnp.stack([pad128(const_vals[name]) for name, _ in _CONST_ROWS])
    return w


# ---------------------------------------------------------------------------
# SAM_with_bbox forward: one fused pallas_call + layout plumbing
# ---------------------------------------------------------------------------
def sam_with_bbox_forward(w, image, bbox):
    B = image.shape[0]
    f32 = jnp.float32

    # --- input layout plumbing (XLA): patchify NCHW image -> (B, NTOK, 192) ---
    patches = image.reshape(B, 3, GRID, PATCH, GRID, PATCH)
    patches = patches.transpose(0, 2, 4, 1, 3, 5).reshape(B, NTOK, PATCH_DIM).astype(f32)

    # prompt encoder: Fourier PE of the two box corners -> 2 sparse tokens (tiny)
    corners = (bbox.reshape(B, 2, 2) + 0.5) / IMG
    sparse = _pe_encode(w["pe_gauss"], corners) + w["point_emb_box"][None]   # (B, 2, D)
    tokens = jnp.concatenate(
        [jnp.broadcast_to(w["output_tokens"][None], (B, NUM_OUT_TOKENS, D)), sparse],
        axis=1).astype(f32)                                                  # (B, 7, D)

    weight_args = [w[name] for name in _WEIGHT_ORDER]

    def batch_spec(arr):
        nd = arr.ndim
        return pl.BlockSpec((None,) + arr.shape[1:],
                            lambda b, nd=nd: (b,) + (0,) * (nd - 1))

    def resident_spec(arr):
        nd = arr.ndim
        return pl.BlockSpec(arr.shape, lambda b, nd=nd: (0,) * nd)

    mask_pre = pl.pallas_call(
        _sam_fused_kernel,
        out_shape=jax.ShapeDtypeStruct((B, NTOK, 16), f32),
        grid=(B,),
        in_specs=[batch_spec(patches), batch_spec(tokens)]
                 + [resident_spec(a) for a in weight_args],
        out_specs=pl.BlockSpec((None, NTOK, 16), lambda b: (b, 0, 0)),
        compiler_params=pltpu.CompilerParams(
            dimension_semantics=("parallel",)),   # batch sharded across TCs on v7x
    )(patches, tokens, *weight_args)

    # --- output layout plumbing (XLA): depth-to-space to (B, 1, 16, 16) -------
    # kernel column index = dy*8 + dx*4 + ey*2 + ex
    m = mask_pre.reshape(B, GRID, GRID, 2, 2, 2, 2)      # (b, gy, gx, dy, dx, ey, ex)
    m = m.transpose(0, 1, 3, 5, 2, 4, 6).reshape(B, LOW_RES, LOW_RES)
    return m[:, None, :, :]


# ---------------------------------------------------------------------------
if __name__ == "__main__":
    key = jax.random.PRNGKey(0)
    pkey, ikey = jax.random.split(key)
    params = init_params(pkey)
    w = prepare_inference_params(params)     # one-time bf16 cast / packing

    image = jax.random.normal(ikey, (2, 3, IMG, IMG), jnp.float32)   # NCHW
    bbox = jnp.array([[4.0, 5.0, 20.0, 25.0],
                      [2.0, 8.0, 30.0, 28.0]], jnp.float32)          # (B, 4) x1,y1,x2,y2

    fwd = jax.jit(sam_with_bbox_forward)
    out = jax.block_until_ready(fwd(w, image, bbox))
    assert out.shape == (2, 1, LOW_RES, LOW_RES) and out.dtype == jnp.float32
    assert bool(jnp.isfinite(out).all())
    print("KERNEL_OK")
</pallas_src>

<mosaic_0001>
module attributes {stable_mosaic.version = 11 : i64} {
  func.func @_sam_fused_kernel(%arg0: i32, %arg1: memref<1x16x192xf32, #tpu.memory_space<vmem>>, %arg2: memref<1x7x32xf32, #tpu.memory_space<vmem>>, %arg3: memref<23x128xf32, #tpu.memory_space<vmem>>, %arg4: memref<192x32xbf16, #tpu.memory_space<vmem>>, %arg5: memref<16x32xf32, #tpu.memory_space<vmem>>, %arg6: memref<16x32xf32, #tpu.memory_space<vmem>>, %arg7: memref<32x96xbf16, #tpu.memory_space<vmem>>, %arg8: memref<32x32xbf16, #tpu.memory_space<vmem>>, %arg9: memref<32x64xbf16, #tpu.memory_space<vmem>>, %arg10: memref<64x32xbf16, #tpu.memory_space<vmem>>, %arg11: memref<32x32xbf16, #tpu.memory_space<vmem>>, %arg12: memref<32x64xbf16, #tpu.memory_space<vmem>>, %arg13: memref<32x32xbf16, #tpu.memory_space<vmem>>, %arg14: memref<32x64xbf16, #tpu.memory_space<vmem>>, %arg15: memref<64x32xbf16, #tpu.memory_space<vmem>>, %arg16: memref<32x64xbf16, #tpu.memory_space<vmem>>, %arg17: memref<64x128xbf16, #tpu.memory_space<vmem>>, %arg18: memref<32x32xbf16, #tpu.memory_space<vmem>>, %arg19: memref<32x128xbf16, #tpu.memory_space<vmem>>, %arg20: memref<128x16xbf16, #tpu.memory_space<vmem>>, %arg21: memref<1x16x16xf32, #tpu.memory_space<vmem>>) attributes {dimension_semantics = [#tpu.dimension_semantics<parallel>], iteration_bounds = array<i64: 2>, scalar_prefetch = 0 : i64, scratch_operands = 0 : i64, tpu.core_type = #tpu.core_type<tc>, window_params = [{transform_indices = @transform_0, window_bounds = array<i64: 1, 16, 192>}, {transform_indices = @transform_1, window_bounds = array<i64: 1, 7, 32>}, {pipeline_mode = #tpu.pipeline_mode<synchronous>, transform_indices = @transform_2, window_bounds = array<i64: 23, 128>}, {pipeline_mode = #tpu.pipeline_mode<synchronous>, transform_indices = @transform_3, window_bounds = array<i64: 192, 32>}, {pipeline_mode = #tpu.pipeline_mode<synchronous>, transform_indices = @transform_4, window_bounds = array<i64: 16, 32>}, {pipeline_mode = #tpu.pipeline_mode<synchronous>, transform_indices = @transform_5, window_bounds = array<i64: 16, 32>}, {pipeline_mode = #tpu.pipeline_mode<synchronous>, transform_indices = @transform_6, window_bounds = array<i64: 32, 96>}, {pipeline_mode = #tpu.pipeline_mode<synchronous>, transform_indices = @transform_7, window_bounds = array<i64: 32, 32>}, {pipeline_mode = #tpu.pipeline_mode<synchronous>, transform_indices = @transform_8, window_bounds = array<i64: 32, 64>}, {pipeline_mode = #tpu.pipeline_mode<synchronous>, transform_indices = @transform_9, window_bounds = array<i64: 64, 32>}, {pipeline_mode = #tpu.pipeline_mode<synchronous>, transform_indices = @transform_10, window_bounds = array<i64: 32, 32>}, {pipeline_mode = #tpu.pipeline_mode<synchronous>, transform_indices = @transform_11, window_bounds = array<i64: 32, 64>}, {pipeline_mode = #tpu.pipeline_mode<synchronous>, transform_indices = @transform_12, window_bounds = array<i64: 32, 32>}, {pipeline_mode = #tpu.pipeline_mode<synchronous>, transform_indices = @transform_13, window_bounds = array<i64: 32, 64>}, {pipeline_mode = #tpu.pipeline_mode<synchronous>, transform_indices = @transform_14, window_bounds = array<i64: 64, 32>}, {pipeline_mode = #tpu.pipeline_mode<synchronous>, transform_indices = @transform_15, window_bounds = array<i64: 32, 64>}, {pipeline_mode = #tpu.pipeline_mode<synchronous>, transform_indices = @transform_16, window_bounds = array<i64: 64, 128>}, {pipeline_mode = #tpu.pipeline_mode<synchronous>, transform_indices = @transform_17, window_bounds = array<i64: 32, 32>}, {pipeline_mode = #tpu.pipeline_mode<synchronous>, transform_indices = @transform_18, window_bounds = array<i64: 32, 128>}, {pipeline_mode = #tpu.pipeline_mode<synchronous>, transform_indices = @transform_19, window_bounds = array<i64: 128, 16>}, {transform_indices = @transform_20, window_bounds = array<i64: 1, 16, 16>}]} {
    %c0 = arith.constant 0 : index
    %c0_0 = arith.constant 0 : index
    %c0_1 = arith.constant 0 : index
    %0 = vector.load %arg1[%c0, %c0_0, %c0_1] : memref<1x16x192xf32, #tpu.memory_space<vmem>>, vector<1x16x192xf32>
    %1 = vector.shape_cast %0 : vector<1x16x192xf32> to vector<16x192xf32>
    %2 = arith.truncf %1 : vector<16x192xf32> to vector<16x192xbf16>
    %c0_2 = arith.constant 0 : index
    %c0_3 = arith.constant 0 : index
    %3 = vector.load %arg4[%c0_2, %c0_3] : memref<192x32xbf16, #tpu.memory_space<vmem>>, vector<192x32xbf16>
    %cst = arith.constant dense<0.000000e+00> : vector<16x32xf32>
    %4 = tpu.matmul %2, %3, %cst {dimension_numbers = #tpu.dot_dimension_numbers<[1], [0], [0], [1], [0, 0, 1, 1], [], []>} : vector<16x192xbf16>, vector<192x32xbf16>, vector<16x32xf32> -> vector<16x32xf32>
    %c0_4 = arith.constant 0 : index
    %c0_5 = arith.constant 0 : index
    %5 = vector.load %arg3[%c0_4, %c0_5] : memref<23x128xf32, #tpu.memory_space<vmem>>, vector<1x32xf32>
    %6 = vector.broadcast %5 : vector<1x32xf32> to vector<16x32xf32>
    %7 = arith.addf %4, %6 : vector<16x32xf32>
    %c0_6 = arith.constant 0 : index
    %c0_7 = arith.constant 0 : index
    %8 = vector.load %arg5[%c0_6, %c0_7] : memref<16x32xf32, #tpu.memory_space<vmem>>, vector<16x32xf32>
    %9 = arith.addf %7, %8 : vector<16x32xf32>
    %cst_8 = arith.constant dense<0.000000e+00> : vector<16xf32>
    %10 = vector.multi_reduction <add>, %9, %cst_8 [1] : vector<16x32xf32> to vector<16xf32>
    %11 = vector.shape_cast %10 : vector<16xf32> to vector<16x1xf32>
    %cst_9 = arith.constant 3.200000e+01 : f32
    %12 = vector.broadcast %cst_9 : f32 to vector<16x1xf32>
    %13 = arith.divf %11, %12 : vector<16x1xf32>
    %14 = vector.broadcast %13 : vector<16x1xf32> to vector<16x32xf32>
    %15 = arith.subf %9, %14 : vector<16x32xf32>
    %16 = arith.mulf %15, %15 : vector<16x32xf32>
    %cst_10 = arith.constant dense<0.000000e+00> : vector<16xf32>
    %17 = vector.multi_reduction <add>, %16, %cst_10 [1] : vector<16x32xf32> to vector<16xf32>
    %18 = vector.shape_cast %17 : vector<16xf32> to vector<16x1xf32>
    %cst_11 = arith.constant 3.200000e+01 : f32
    %19 = vector.broadcast %cst_11 : f32 to vector<16x1xf32>
    %20 = arith.divf %18, %19 : vector<16x1xf32>
    %cst_12 = arith.constant 9.99999997E-7 : f32
    %21 = vector.broadcast %cst_12 : f32 to vector<16x1xf32>
    %22 = arith.addf %20, %21 : vector<16x1xf32>
    %23 = math.rsqrt %22 : vector<16x1xf32>
    %24 = vector.broadcast %23 : vector<16x1xf32> to vector<16x32xf32>
    %25 = arith.mulf %15, %24 : vector<16x32xf32>
    %c15 = arith.constant 15 : index
    %c0_13 = arith.constant 0 : index
    %26 = vector.load %arg3[%c15, %c0_13] : memref<23x128xf32, #tpu.memory_space<vmem>>, vector<1x32xf32>
    %27 = vector.broadcast %26 : vector<1x32xf32> to vector<16x32xf32>
    %28 = arith.mulf %25, %27 : vector<16x32xf32>
    %c16 = arith.constant 16 : index
    %c0_14 = arith.constant 0 : index
    %29 = vector.load %arg3[%c16, %c0_14] : memref<23x128xf32, #tpu.memory_space<vmem>>, vector<1x32xf32>
    %30 = vector.broadcast %29 : vector<1x32xf32> to vector<16x32xf32>
    %31 = arith.addf %28, %30 : vector<16x32xf32>
    %32 = arith.truncf %31 : vector<16x32xf32> to vector<16x32xbf16>
    %c0_15 = arith.constant 0 : index
    %c0_16 = arith.constant 0 : index
    %33 = vector.load %arg7[%c0_15, %c0_16] : memref<32x96xbf16, #tpu.memory_space<vmem>>, vector<32x96xbf16>
    %cst_17 = arith.constant dense<0.000000e+00> : vector<16x96xf32>
    %34 = tpu.matmul %32, %33, %cst_17 {dimension_numbers = #tpu.dot_dimension_numbers<[1], [0], [0], [1], [0, 0, 1, 1], [], []>} : vector<16x32xbf16>, vector<32x96xbf16>, vector<16x96xf32> -> vector<16x96xf32>
    %c1 = arith.constant 1 : index
    %c0_18 = arith.constant 0 : index
    %35 = vector.load %arg3[%c1, %c0_18] : memref<23x128xf32, #tpu.memory_space<vmem>>, vector<1x96xf32>
    %36 = vector.broadcast %35 : vector<1x96xf32> to vector<16x96xf32>
    %37 = arith.addf %34, %36 : vector<16x96xf32>
    %38 = vector.extract_strided_slice %37 {offsets = [0, 0], sizes = [16, 32], strides = [1, 1]} : vector<16x96xf32> to vector<16x32xf32>
    %39 = vector.extract_strided_slice %37 {offsets = [0, 32], sizes = [16, 32], strides = [1, 1]} : vector<16x96xf32> to vector<16x32xf32>
    %40 = vector.extract_strided_slice %37 {offsets = [0, 64], sizes = [16, 32], strides = [1, 1]} : vector<16x96xf32> to vector<16x32xf32>
    %41 = arith.truncf %38 : vector<16x32xf32> to vector<16x32xbf16>
    %42 = arith.truncf %39 : vector<16x32xf32> to vector<16x32xbf16>
    %cst_19 = arith.constant dense<0.000000e+00> : vector<16x16xf32>
    %43 = tpu.matmul %41, %42, %cst_19 {dimension_numbers = #tpu.dot_dimension_numbers<[1], [1], [0], [0], [0, 0, 1, 0], [], []>} : vector<16x32xbf16>, vector<16x32xbf16>, vector<16x16xf32> -> vector<16x16xf32>
    %cst_20 = arith.constant dense<0xFF800000> : vector<16xf32>
    %44 = vector.multi_reduction <maximumf>, %43, %cst_20 [1] : vector<16x16xf32> to vector<16xf32>
    %45 = vector.shape_cast %44 : vector<16xf32> to vector<16x1xf32>
    %46 = vector.broadcast %45 : vector<16x1xf32> to vector<16x16xf32>
    %47 = arith.subf %43, %46 : vector<16x16xf32>
    %48 = math.exp %47 : vector<16x16xf32>
    %cst_21 = arith.constant dense<0.000000e+00> : vector<16xf32>
    %49 = vector.multi_reduction <add>, %48, %cst_21 [1] : vector<16x16xf32> to vector<16xf32>
    %50 = vector.shape_cast %49 : vector<16xf32> to vector<16x1xf32>
    %51 = tpu.reciprocal %50 {approx = true} : vector<16x1xf32> -> vector<16x1xf32>
    %52 = vector.broadcast %51 : vector<16x1xf32> to vector<16x16xf32>
    %53 = arith.mulf %48, %52 : vector<16x16xf32>
    %54 = arith.truncf %53 : vector<16x16xf32> to vector<16x16xbf16>
    %55 = arith.truncf %40 : vector<16x32xf32> to vector<16x32xbf16>
    %cst_22 = arith.constant dense<0.000000e+00> : vector<16x32xf32>
    %56 = tpu.matmul %54, %55, %cst_22 {dimension_numbers = #tpu.dot_dimension_numbers<[1], [0], [0], [1], [0, 0, 1, 1], [], []>} : vector<16x16xbf16>, vector<16x32xbf16>, vector<16x32xf32> -> vector<16x32xf32>
    %57 = arith.truncf %56 : vector<16x32xf32> to vector<16x32xbf16>
    %c0_23 = arith.constant 0 : index
    %c0_24 = arith.constant 0 : index
    %58 = vector.load %arg8[%c0_23, %c0_24] : memref<32x32xbf16, #tpu.memory_space<vmem>>, vector<32x32xbf16>
    %cst_25 = arith.constant dense<0.000000e+00> : vector<16x32xf32>
    %59 = tpu.matmul %57, %58, %cst_25 {dimension_numbers = #tpu.dot_dimension_numbers<[1], [0], [0], [1], [0, 0, 1, 1], [], []>} : vector<16x32xbf16>, vector<32x32xbf16>, vector<16x32xf32> -> vector<16x32xf32>
    %c2 = arith.constant 2 : index
    %c0_26 = arith.constant 0 : index
    %60 = vector.load %arg3[%c2, %c0_26] : memref<23x128xf32, #tpu.memory_space<vmem>>, vector<1x32xf32>
    %61 = vector.broadcast %60 : vector<1x32xf32> to vector<16x32xf32>
    %62 = arith.addf %59, %61 : vector<16x32xf32>
    %63 = arith.addf %9, %62 : vector<16x32xf32>
    %cst_27 = arith.constant dense<0.000000e+00> : vector<16xf32>
    %64 = vector.multi_reduction <add>, %63, %cst_27 [1] : vector<16x32xf32> to vector<16xf32>
    %65 = vector.shape_cast %64 : vector<16xf32> to vector<16x1xf32>
    %cst_28 = arith.constant 3.200000e+01 : f32
    %66 = vector.broadcast %cst_28 : f32 to vector<16x1xf32>
    %67 = arith.divf %65, %66 : vector<16x1xf32>
    %68 = vector.broadcast %67 : vector<16x1xf32> to vector<16x32xf32>
    %69 = arith.subf %63, %68 : vector<16x32xf32>
    %70 = arith.mulf %69, %69 : vector<16x32xf32>
    %cst_29 = arith.constant dense<0.000000e+00> : vector<16xf32>
    %71 = vector.multi_reduction <add>, %70, %cst_29 [1] : vector<16x32xf32> to vector<16xf32>
    %72 = vector.shape_cast %71 : vector<16xf32> to vector<16x1xf32>
    %cst_30 = arith.constant 3.200000e+01 : f32
    %73 = vector.broadcast %cst_30 : f32 to vector<16x1xf32>
    %74 = arith.divf %72, %73 : vector<16x1xf32>
    %cst_31 = arith.constant 9.99999997E-7 : f32
    %75 = vector.broadcast %cst_31 : f32 to vector<16x1xf32>
    %76 = arith.addf %74, %75 : vector<16x1xf32>
    %77 = math.rsqrt %76 : vector<16x1xf32>
    %78 = vector.broadcast %77 : vector<16x1xf32> to vector<16x32xf32>
    %79 = arith.mulf %69, %78 : vector<16x32xf32>
    %c17 = arith.constant 17 : index
    %c0_32 = arith.constant 0 : index
    %80 = vector.load %arg3[%c17, %c0_32] : memref<23x128xf32, #tpu.memory_space<vmem>>, vector<1x32xf32>
    %81 = vector.broadcast %80 : vector<1x32xf32> to vector<16x32xf32>
    %82 = arith.mulf %79, %81 : vector<16x32xf32>
    %c18 = arith.constant 18 : index
    %c0_33 = arith.constant 0 : index
    %83 = vector.load %arg3[%c18, %c0_33] : memref<23x128xf32, #tpu.memory_space<vmem>>, vector<1x32xf32>
    %84 = vector.broadcast %83 : vector<1x32xf32> to vector<16x32xf32>
    %85 = arith.addf %82, %84 : vector<16x32xf32>
    %86 = arith.truncf %85 : vector<16x32xf32> to vector<16x32xbf16>
    %c0_34 = arith.constant 0 : index
    %c0_35 = arith.constant 0 : index
    %87 = vector.load %arg9[%c0_34, %c0_35] : memref<32x64xbf16, #tpu.memory_space<vmem>>, vector<32x64xbf16>
    %cst_36 = arith.constant dense<0.000000e+00> : vector<16x64xf32>
    %88 = tpu.matmul %86, %87, %cst_36 {dimension_numbers = #tpu.dot_dimension_numbers<[1], [0], [0], [1], [0, 0, 1, 1], [], []>} : vector<16x32xbf16>, vector<32x64xbf16>, vector<16x64xf32> -> vector<16x64xf32>
    %c3 = arith.constant 3 : index
    %c0_37 = arith.constant 0 : index
    %89 = vector.load %arg3[%c3, %c0_37] : memref<23x128xf32, #tpu.memory_space<vmem>>, vector<1x64xf32>
    %90 = vector.broadcast %89 : vector<1x64xf32> to vector<16x64xf32>
    %91 = arith.addf %88, %90 : vector<16x64xf32>
    %92 = arith.mulf %91, %91 : vector<16x64xf32>
    %93 = arith.mulf %91, %92 : vector<16x64xf32>
    %cst_38 = arith.constant 4.471500e-02 : f32
    %94 = vector.broadcast %cst_38 : f32 to vector<16x64xf32>
    %95 = arith.mulf %94, %93 : vector<16x64xf32>
    %96 = arith.addf %91, %95 : vector<16x64xf32>
    %cst_39 = arith.constant 0.797884583 : f32
    %97 = vector.broadcast %cst_39 : f32 to vector<16x64xf32>
    %98 = arith.mulf %97, %96 : vector<16x64xf32>
    %99 = math.tanh %98 : vector<16x64xf32>
    %cst_40 = arith.constant 1.000000e+00 : f32
    %100 = vector.broadcast %cst_40 : f32 to vector<16x64xf32>
    %101 = arith.addf %100, %99 : vector<16x64xf32>
    %cst_41 = arith.constant 5.000000e-01 : f32
    %102 = vector.broadcast %cst_41 : f32 to vector<16x64xf32>
    %103 = arith.mulf %102, %101 : vector<16x64xf32>
    %104 = arith.mulf %91, %103 : vector<16x64xf32>
    %105 = arith.truncf %104 : vector<16x64xf32> to vector<16x64xbf16>
    %c0_42 = arith.constant 0 : index
    %c0_43 = arith.constant 0 : index
    %106 = vector.load %arg10[%c0_42, %c0_43] : memref<64x32xbf16, #tpu.memory_space<vmem>>, vector<64x32xbf16>
    %cst_44 = arith.constant dense<0.000000e+00> : vector<16x32xf32>
    %107 = tpu.matmul %105, %106, %cst_44 {dimension_numbers = #tpu.dot_dimension_numbers<[1], [0], [0], [1], [0, 0, 1, 1], [], []>} : vector<16x64xbf16>, vector<64x32xbf16>, vector<16x32xf32> -> vector<16x32xf32>
    %c4 = arith.constant 4 : index
    %c0_45 = arith.constant 0 : index
    %108 = vector.load %arg3[%c4, %c0_45] : memref<23x128xf32, #tpu.memory_space<vmem>>, vector<1x32xf32>
    %109 = vector.broadcast %108 : vector<1x32xf32> to vector<16x32xf32>
    %110 = arith.addf %107, %109 : vector<16x32xf32>
    %111 = arith.addf %63, %110 : vector<16x32xf32>
    %c14 = arith.constant 14 : index
    %c0_46 = arith.constant 0 : index
    %112 = vector.load %arg3[%c14, %c0_46] : memref<23x128xf32, #tpu.memory_space<vmem>>, vector<1x32xf32>
    %113 = vector.broadcast %112 : vector<1x32xf32> to vector<16x32xf32>
    %114 = arith.addf %111, %113 : vector<16x32xf32>
    %c0_47 = arith.constant 0 : index
    %c0_48 = arith.constant 0 : index
    %c0_49 = arith.constant 0 : index
    %115 = vector.load %arg2[%c0_47, %c0_48, %c0_49] : memref<1x7x32xf32, #tpu.memory_space<vmem>>, vector<1x7x32xf32>
    %116 = vector.shape_cast %115 : vector<1x7x32xf32> to vector<7x32xf32>
    %117 = arith.truncf %116 : vector<7x32xf32> to vector<7x32xbf16>
    %c0_50 = arith.constant 0 : index
    %c0_51 = arith.constant 0 : index
    %118 = vector.load %arg11[%c0_50, %c0_51] : memref<32x32xbf16, #tpu.memory_space<vmem>>, vector<32x32xbf16>
    %cst_52 = arith.constant dense<0.000000e+00> : vector<7x32xf32>
    %119 = tpu.matmul %117, %118, %cst_52 {dimension_numbers = #tpu.dot_dimension_numbers<[1], [0], [0], [1], [0, 0, 1, 1], [], []>} : vector<7x32xbf16>, vector<32x32xbf16>, vector<7x32xf32> -> vector<7x32xf32>
    %c5 = arith.constant 5 : index
    %c0_53 = arith.constant 0 : index
    %120 = vector.load %arg3[%c5, %c0_53] : memref<23x128xf32, #tpu.memory_space<vmem>>, vector<1x32xf32>
    %121 = vector.broadcast %120 : vector<1x32xf32> to vector<7x32xf32>
    %122 = arith.addf %119, %121 : vector<7x32xf32>
    %123 = arith.truncf %114 : vector<16x32xf32> to vector<16x32xbf16>
    %c0_54 = arith.constant 0 : index
    %c0_55 = arith.constant 0 : index
    %124 = vector.load %arg12[%c0_54, %c0_55] : memref<32x64xbf16, #tpu.memory_space<vmem>>, vector<32x64xbf16>
    %cst_56 = arith.constant dense<0.000000e+00> : vector<16x64xf32>
    %125 = tpu.matmul %123, %124, %cst_56 {dimension_numbers = #tpu.dot_dimension_numbers<[1], [0], [0], [1], [0, 0, 1, 1], [], []>} : vector<16x32xbf16>, vector<32x64xbf16>, vector<16x64xf32> -> vector<16x64xf32>
    %c6 = arith.constant 6 : index
    %c0_57 = arith.constant 0 : index
    %126 = vector.load %arg3[%c6, %c0_57] : memref<23x128xf32, #tpu.memory_space<vmem>>, vector<1x64xf32>
    %127 = vector.broadcast %126 : vector<1x64xf32> to vector<16x64xf32>
    %128 = arith.addf %125, %127 : vector<16x64xf32>
    %129 = vector.extract_strided_slice %128 {offsets = [0, 0], sizes = [16, 32], strides = [1, 1]} : vector<16x64xf32> to vector<16x32xf32>
    %c0_58 = arith.constant 0 : index
    %c0_59 = arith.constant 0 : index
    %130 = vector.load %arg6[%c0_58, %c0_59] : memref<16x32xf32, #tpu.memory_space<vmem>>, vector<16x32xf32>
    %131 = arith.addf %129, %130 : vector<16x32xf32>
    %132 = vector.extract_strided_slice %128 {offsets = [0, 32], sizes = [16, 32], strides = [1, 1]} : vector<16x64xf32> to vector<16x32xf32>
    %133 = arith.truncf %122 : vector<7x32xf32> to vector<7x32xbf16>
    %134 = arith.truncf %131 : vector<16x32xf32> to vector<16x32xbf16>
    %cst_60 = arith.constant dense<0.000000e+00> : vector<7x16xf32>
    %135 = tpu.matmul %133, %134, %cst_60 {dimension_numbers = #tpu.dot_dimension_numbers<[1], [1], [0], [0], [0, 0, 1, 0], [], []>} : vector<7x32xbf16>, vector<16x32xbf16>, vector<7x16xf32> -> vector<7x16xf32>
    %cst_61 = arith.constant dense<0xFF800000> : vector<7xf32>
    %136 = vector.multi_reduction <maximumf>, %135, %cst_61 [1] : vector<7x16xf32> to vector<7xf32>
    %137 = vector.shape_cast %136 : vector<7xf32> to vector<7x1xf32>
    %138 = vector.broadcast %137 : vector<7x1xf32> to vector<7x16xf32>
    %139 = arith.subf %135, %138 : vector<7x16xf32>
    %140 = math.exp %139 : vector<7x16xf32>
    %cst_62 = arith.constant dense<0.000000e+00> : vector<7xf32>
    %141 = vector.multi_reduction <add>, %140, %cst_62 [1] : vector<7x16xf32> to vector<7xf32>
    %142 = vector.shape_cast %141 : vector<7xf32> to vector<7x1xf32>
    %143 = tpu.reciprocal %142 {approx = true} : vector<7x1xf32> -> vector<7x1xf32>
    %144 = vector.broadcast %143 : vector<7x1xf32> to vector<7x16xf32>
    %145 = arith.mulf %140, %144 : vector<7x16xf32>
    %146 = arith.truncf %145 : vector<7x16xf32> to vector<7x16xbf16>
    %147 = arith.truncf %132 : vector<16x32xf32> to vector<16x32xbf16>
    %cst_63 = arith.constant dense<0.000000e+00> : vector<7x32xf32>
    %148 = tpu.matmul %146, %147, %cst_63 {dimension_numbers = #tpu.dot_dimension_numbers<[1], [0], [0], [1], [0, 0, 1, 1], [], []>} : vector<7x16xbf16>, vector<16x32xbf16>, vector<7x32xf32> -> vector<7x32xf32>
    %149 = arith.truncf %148 : vector<7x32xf32> to vector<7x32xbf16>
    %c0_64 = arith.constant 0 : index
    %c0_65 = arith.constant 0 : index
    %150 = vector.load %arg13[%c0_64, %c0_65] : memref<32x32xbf16, #tpu.memory_space<vmem>>, vector<32x32xbf16>
    %cst_66 = arith.constant dense<0.000000e+00> : vector<7x32xf32>
    %151 = tpu.matmul %149, %150, %cst_66 {dimension_numbers = #tpu.dot_dimension_numbers<[1], [0], [0], [1], [0, 0, 1, 1], [], []>} : vector<7x32xbf16>, vector<32x32xbf16>, vector<7x32xf32> -> vector<7x32xf32>
    %c7 = arith.constant 7 : index
    %c0_67 = arith.constant 0 : index
    %152 = vector.load %arg3[%c7, %c0_67] : memref<23x128xf32, #tpu.memory_space<vmem>>, vector<1x32xf32>
    %153 = vector.broadcast %152 : vector<1x32xf32> to vector<7x32xf32>
    %154 = arith.addf %151, %153 : vector<7x32xf32>
    %155 = arith.addf %116, %154 : vector<7x32xf32>
    %cst_68 = arith.constant dense<0.000000e+00> : vector<7xf32>
    %156 = vector.multi_reduction <add>, %155, %cst_68 [1] : vector<7x32xf32> to vector<7xf32>
    %157 = vector.shape_cast %156 : vector<7xf32> to vector<7x1xf32>
    %cst_69 = arith.constant 3.200000e+01 : f32
    %158 = vector.broadcast %cst_69 : f32 to vector<7x1xf32>
    %159 = arith.divf %157, %158 : vector<7x1xf32>
    %160 = vector.broadcast %159 : vector<7x1xf32> to vector<7x32xf32>
    %161 = arith.subf %155, %160 : vector<7x32xf32>
    %162 = arith.mulf %161, %161 : vector<7x32xf32>
    %cst_70 = arith.constant dense<0.000000e+00> : vector<7xf32>
    %163 = vector.multi_reduction <add>, %162, %cst_70 [1] : vector<7x32xf32> to vector<7xf32>
    %164 = vector.shape_cast %163 : vector<7xf32> to vector<7x1xf32>
    %cst_71 = arith.constant 3.200000e+01 : f32
    %165 = vector.broadcast %cst_71 : f32 to vector<7x1xf32>
    %166 = arith.divf %164, %165 : vector<7x1xf32>
    %cst_72 = arith.constant 9.99999997E-7 : f32
    %167 = vector.broadcast %cst_72 : f32 to vector<7x1xf32>
    %168 = arith.addf %166, %167 : vector<7x1xf32>
    %169 = math.rsqrt %168 : vector<7x1xf32>
    %170 = vector.broadcast %169 : vector<7x1xf32> to vector<7x32xf32>
    %171 = arith.mulf %161, %170 : vector<7x32xf32>
    %c19 = arith.constant 19 : index
    %c0_73 = arith.constant 0 : index
    %172 = vector.load %arg3[%c19, %c0_73] : memref<23x128xf32, #tpu.memory_space<vmem>>, vector<1x32xf32>
    %173 = vector.broadcast %172 : vector<1x32xf32> to vector<7x32xf32>
    %174 = arith.mulf %171, %173 : vector<7x32xf32>
    %c20 = arith.constant 20 : index
    %c0_74 = arith.constant 0 : index
    %175 = vector.load %arg3[%c20, %c0_74] : memref<23x128xf32, #tpu.memory_space<vmem>>, vector<1x32xf32>
    %176 = vector.broadcast %175 : vector<1x32xf32> to vector<7x32xf32>
    %177 = arith.addf %174, %176 : vector<7x32xf32>
    %178 = arith.truncf %177 : vector<7x32xf32> to vector<7x32xbf16>
    %c0_75 = arith.constant 0 : index
    %c0_76 = arith.constant 0 : index
    %179 = vector.load %arg14[%c0_75, %c0_76] : memref<32x64xbf16, #tpu.memory_space<vmem>>, vector<32x64xbf16>
    %cst_77 = arith.constant dense<0.000000e+00> : vector<7x64xf32>
    %180 = tpu.matmul %178, %179, %cst_77 {dimension_numbers = #tpu.dot_dimension_numbers<[1], [0], [0], [1], [0, 0, 1, 1], [], []>} : vector<7x32xbf16>, vector<32x64xbf16>, vector<7x64xf32> -> vector<7x64xf32>
    %c8 = arith.constant 8 : index
    %c0_78 = arith.constant 0 : index
    %181 = vector.load %arg3[%c8, %c0_78] : memref<23x128xf32, #tpu.memory_space<vmem>>, vector<1x64xf32>
    %182 = vector.broadcast %181 : vector<1x64xf32> to vector<7x64xf32>
    %183 = arith.addf %180, %182 : vector<7x64xf32>
    %184 = arith.mulf %183, %183 : vector<7x64xf32>
    %185 = arith.mulf %183, %184 : vector<7x64xf32>
    %cst_79 = arith.constant 4.471500e-02 : f32
    %186 = vector.broadcast %cst_79 : f32 to vector<7x64xf32>
    %187 = arith.mulf %186, %185 : vector<7x64xf32>
    %188 = arith.addf %183, %187 : vector<7x64xf32>
    %cst_80 = arith.constant 0.797884583 : f32
    %189 = vector.broadcast %cst_80 : f32 to vector<7x64xf32>
    %190 = arith.mulf %189, %188 : vector<7x64xf32>
    %191 = math.tanh %190 : vector<7x64xf32>
    %cst_81 = arith.constant 1.000000e+00 : f32
    %192 = vector.broadcast %cst_81 : f32 to vector<7x64xf32>
    %193 = arith.addf %192, %191 : vector<7x64xf32>
    %cst_82 = arith.constant 5.000000e-01 : f32
    %194 = vector.broadcast %cst_82 : f32 to vector<7x64xf32>
    %195 = arith.mulf %194, %193 : vector<7x64xf32>
    %196 = arith.mulf %183, %195 : vector<7x64xf32>
    %197 = arith.truncf %196 : vector<7x64xf32> to vector<7x64xbf16>
    %c0_83 = arith.constant 0 : index
    %c0_84 = arith.constant 0 : index
    %198 = vector.load %arg15[%c0_83, %c0_84] : memref<64x32xbf16, #tpu.memory_space<vmem>>, vector<64x32xbf16>
    %cst_85 = arith.constant dense<0.000000e+00> : vector<7x32xf32>
    %199 = tpu.matmul %197, %198, %cst_85 {dimension_numbers = #tpu.dot_dimension_numbers<[1], [0], [0], [1], [0, 0, 1, 1], [], []>} : vector<7x64xbf16>, vector<64x32xbf16>, vector<7x32xf32> -> vector<7x32xf32>
    %c9 = arith.constant 9 : index
    %c0_86 = arith.constant 0 : index
    %200 = vector.load %arg3[%c9, %c0_86] : memref<23x128xf32, #tpu.memory_space<vmem>>, vector<1x32xf32>
    %201 = vector.broadcast %200 : vector<1x32xf32> to vector<7x32xf32>
    %202 = arith.addf %199, %201 : vector<7x32xf32>
    %203 = arith.addf %177, %202 : vector<7x32xf32>
    %cst_87 = arith.constant dense<0.000000e+00> : vector<7xf32>
    %204 = vector.multi_reduction <add>, %203, %cst_87 [1] : vector<7x32xf32> to vector<7xf32>
    %205 = vector.shape_cast %204 : vector<7xf32> to vector<7x1xf32>
    %cst_88 = arith.constant 3.200000e+01 : f32
    %206 = vector.broadcast %cst_88 : f32 to vector<7x1xf32>
    %207 = arith.divf %205, %206 : vector<7x1xf32>
    %208 = vector.broadcast %207 : vector<7x1xf32> to vector<7x32xf32>
    %209 = arith.subf %203, %208 : vector<7x32xf32>
    %210 = arith.mulf %209, %209 : vector<7x32xf32>
    %cst_89 = arith.constant dense<0.000000e+00> : vector<7xf32>
    %211 = vector.multi_reduction <add>, %210, %cst_89 [1] : vector<7x32xf32> to vector<7xf32>
    %212 = vector.shape_cast %211 : vector<7xf32> to vector<7x1xf32>
    %cst_90 = arith.constant 3.200000e+01 : f32
    %213 = vector.broadcast %cst_90 : f32 to vector<7x1xf32>
    %214 = arith.divf %212, %213 : vector<7x1xf32>
    %cst_91 = arith.constant 9.99999997E-7 : f32
    %215 = vector.broadcast %cst_91 : f32 to vector<7x1xf32>
    %216 = arith.addf %214, %215 : vector<7x1xf32>
    %217 = math.rsqrt %216 : vector<7x1xf32>
    %218 = vector.broadcast %217 : vector<7x1xf32> to vector<7x32xf32>
    %219 = arith.mulf %209, %218 : vector<7x32xf32>
    %c21 = arith.constant 21 : index
    %c0_92 = arith.constant 0 : index
    %220 = vector.load %arg3[%c21, %c0_92] : memref<23x128xf32, #tpu.memory_space<vmem>>, vector<1x32xf32>
    %221 = vector.broadcast %220 : vector<1x32xf32> to vector<7x32xf32>
    %222 = arith.mulf %219, %221 : vector<7x32xf32>
    %c22 = arith.constant 22 : index
    %c0_93 = arith.constant 0 : index
    %223 = vector.load %arg3[%c22, %c0_93] : memref<23x128xf32, #tpu.memory_space<vmem>>, vector<1x32xf32>
    %224 = vector.broadcast %223 : vector<1x32xf32> to vector<7x32xf32>
    %225 = arith.addf %222, %224 : vector<7x32xf32>
    %226 = vector.extract_strided_slice %225 {offsets = [1, 0], sizes = [1, 32], strides = [1, 1]} : vector<7x32xf32> to vector<1x32xf32>
    %227 = arith.truncf %226 : vector<1x32xf32> to vector<1x32xbf16>
    %c0_94 = arith.constant 0 : index
    %c0_95 = arith.constant 0 : index
    %228 = vector.load %arg18[%c0_94, %c0_95] : memref<32x32xbf16, #tpu.memory_space<vmem>>, vector<32x32xbf16>
    %cst_96 = arith.constant dense<0.000000e+00> : vector<1x32xf32>
    %229 = tpu.matmul %227, %228, %cst_96 {dimension_numbers = #tpu.dot_dimension_numbers<[1], [0], [0], [1], [0, 0, 1, 1], [], []>} : vector<1x32xbf16>, vector<32x32xbf16>, vector<1x32xf32> -> vector<1x32xf32>
    %c12 = arith.constant 12 : index
    %c0_97 = arith.constant 0 : index
    %230 = vector.load %arg3[%c12, %c0_97] : memref<23x128xf32, #tpu.memory_space<vmem>>, vector<1x32xf32>
    %231 = arith.addf %229, %230 : vector<1x32xf32>
    %232 = arith.mulf %231, %231 : vector<1x32xf32>
    %233 = arith.mulf %231, %232 : vector<1x32xf32>
    %cst_98 = arith.constant 4.471500e-02 : f32
    %234 = vector.broadcast %cst_98 : f32 to vector<1x32xf32>
    %235 = arith.mulf %234, %233 : vector<1x32xf32>
    %236 = arith.addf %231, %235 : vector<1x32xf32>
    %cst_99 = arith.constant 0.797884583 : f32
    %237 = vector.broadcast %cst_99 : f32 to vector<1x32xf32>
    %238 = arith.mulf %237, %236 : vector<1x32xf32>
    %239 = math.tanh %238 : vector<1x32xf32>
    %cst_100 = arith.constant 1.000000e+00 : f32
    %240 = vector.broadcast %cst_100 : f32 to vector<1x32xf32>
    %241 = arith.addf %240, %239 : vector<1x32xf32>
    %cst_101 = arith.constant 5.000000e-01 : f32
    %242 = vector.broadcast %cst_101 : f32 to vector<1x32xf32>
    %243 = arith.mulf %242, %241 : vector<1x32xf32>
    %244 = arith.mulf %231, %243 : vector<1x32xf32>
    %245 = arith.truncf %244 : vector<1x32xf32> to vector<1x32xbf16>
    %c0_102 = arith.constant 0 : index
    %c0_103 = arith.constant 0 : index
    %246 = vector.load %arg19[%c0_102, %c0_103] : memref<32x128xbf16, #tpu.memory_space<vmem>>, vector<32x128xbf16>
    %cst_104 = arith.constant dense<0.000000e+00> : vector<1x128xf32>
    %247 = tpu.matmul %245, %246, %cst_104 {dimension_numbers = #tpu.dot_dimension_numbers<[1], [0], [0], [1], [0, 0, 1, 1], [], []>} : vector<1x32xbf16>, vector<32x128xbf16>, vector<1x128xf32> -> vector<1x128xf32>
    %c13 = arith.constant 13 : index
    %c0_105 = arith.constant 0 : index
    %248 = vector.load %arg3[%c13, %c0_105] : memref<23x128xf32, #tpu.memory_space<vmem>>, vector<1x128xf32>
    %249 = arith.addf %247, %248 : vector<1x128xf32>
    %250 = arith.truncf %114 : vector<16x32xf32> to vector<16x32xbf16>
    %c0_106 = arith.constant 0 : index
    %c0_107 = arith.constant 0 : index
    %251 = vector.load %arg16[%c0_106, %c0_107] : memref<32x64xbf16, #tpu.memory_space<vmem>>, vector<32x64xbf16>
    %cst_108 = arith.constant dense<0.000000e+00> : vector<16x64xf32>
    %252 = tpu.matmul %250, %251, %cst_108 {dimension_numbers = #tpu.dot_dimension_numbers<[1], [0], [0], [1], [0, 0, 1, 1], [], []>} : vector<16x32xbf16>, vector<32x64xbf16>, vector<16x64xf32> -> vector<16x64xf32>
    %c10 = arith.constant 10 : index
    %c0_109 = arith.constant 0 : index
    %253 = vector.load %arg3[%c10, %c0_109] : memref<23x128xf32, #tpu.memory_space<vmem>>, vector<1x64xf32>
    %254 = vector.broadcast %253 : vector<1x64xf32> to vector<16x64xf32>
    %255 = arith.addf %252, %254 : vector<16x64xf32>
    %256 = arith.mulf %255, %255 : vector<16x64xf32>
    %257 = arith.mulf %255, %256 : vector<16x64xf32>
    %cst_110 = arith.constant 4.471500e-02 : f32
    %258 = vector.broadcast %cst_110 : f32 to vector<16x64xf32>
    %259 = arith.mulf %258, %257 : vector<16x64xf32>
    %260 = arith.addf %255, %259 : vector<16x64xf32>
    %cst_111 = arith.constant 0.797884583 : f32
    %261 = vector.broadcast %cst_111 : f32 to vector<16x64xf32>
    %262 = arith.mulf %261, %260 : vector<16x64xf32>
    %263 = math.tanh %262 : vector<16x64xf32>
    %cst_112 = arith.constant 1.000000e+00 : f32
    %264 = vector.broadcast %cst_112 : f32 to vector<16x64xf32>
    %265 = arith.addf %264, %263 : vector<16x64xf32>
    %cst_113 = arith.constant 5.000000e-01 : f32
    %266 = vector.broadcast %cst_113 : f32 to vector<16x64xf32>
    %267 = arith.mulf %266, %265 : vector<16x64xf32>
    %268 = arith.mulf %255, %267 : vector<16x64xf32>
    %269 = arith.truncf %268 : vector<16x64xf32> to vector<16x64xbf16>
    %c0_114 = arith.constant 0 : index
    %c0_115 = arith.constant 0 : index
    %270 = vector.load %arg17[%c0_114, %c0_115] : memref<64x128xbf16, #tpu.memory_space<vmem>>, vector<64x128xbf16>
    %cst_116 = arith.constant dense<0.000000e+00> : vector<16x128xf32>
    %271 = tpu.matmul %269, %270, %cst_116 {dimension_numbers = #tpu.dot_dimension_numbers<[1], [0], [0], [1], [0, 0, 1, 1], [], []>} : vector<16x64xbf16>, vector<64x128xbf16>, vector<16x128xf32> -> vector<16x128xf32>
    %c11 = arith.constant 11 : index
    %c0_117 = arith.constant 0 : index
    %272 = vector.load %arg3[%c11, %c0_117] : memref<23x128xf32, #tpu.memory_space<vmem>>, vector<1x128xf32>
    %273 = vector.broadcast %272 : vector<1x128xf32> to vector<16x128xf32>
    %274 = arith.addf %271, %273 : vector<16x128xf32>
    %275 = arith.mulf %274, %274 : vector<16x128xf32>
    %276 = arith.mulf %274, %275 : vector<16x128xf32>
    %cst_118 = arith.constant 4.471500e-02 : f32
    %277 = vector.broadcast %cst_118 : f32 to vector<16x128xf32>
    %278 = arith.mulf %277, %276 : vector<16x128xf32>
    %279 = arith.addf %274, %278 : vector<16x128xf32>
    %cst_119 = arith.constant 0.797884583 : f32
    %280 = vector.broadcast %cst_119 : f32 to vector<16x128xf32>
    %281 = arith.mulf %280, %279 : vector<16x128xf32>
    %282 = math.tanh %281 : vector<16x128xf32>
    %cst_120 = arith.constant 1.000000e+00 : f32
    %283 = vector.broadcast %cst_120 : f32 to vector<16x128xf32>
    %284 = arith.addf %283, %282 : vector<16x128xf32>
    %cst_121 = arith.constant 5.000000e-01 : f32
    %285 = vector.broadcast %cst_121 : f32 to vector<16x128xf32>
    %286 = arith.mulf %285, %284 : vector<16x128xf32>
    %287 = arith.mulf %274, %286 : vector<16x128xf32>
    %288 = vector.broadcast %249 : vector<1x128xf32> to vector<16x128xf32>
    %289 = arith.mulf %287, %288 : vector<16x128xf32>
    %290 = arith.truncf %289 : vector<16x128xf32> to vector<16x128xbf16>
    %c0_122 = arith.constant 0 : index
    %c0_123 = arith.constant 0 : index
    %291 = vector.load %arg20[%c0_122, %c0_123] : memref<128x16xbf16, #tpu.memory_space<vmem>>, vector<128x16xbf16>
    %cst_124 = arith.constant dense<0.000000e+00> : vector<16x16xf32>
    %292 = tpu.matmul %290, %291, %cst_124 {dimension_numbers = #tpu.dot_dimension_numbers<[1], [0], [0], [1], [0, 0, 1, 1], [], []>} : vector<16x128xbf16>, vector<128x16xbf16>, vector<16x16xf32> -> vector<16x16xf32>
    %c0_125 = arith.constant 0 : index
    %c0_126 = arith.constant 0 : index
    %c0_127 = arith.constant 0 : index
    %293 = vector.load %arg21[%c0_125, %c0_126, %c0_127] : memref<1x16x16xf32, #tpu.memory_space<vmem>>, vector<1x16x16xf32>
    %294 = vector.shape_cast %293 : vector<1x16x16xf32> to vector<16x16xf32>
    %295 = vector.shape_cast %292 : vector<16x16xf32> to vector<1x16x16xf32>
    tpu.vector_store %arg21[%c0_125, %c0_126, %c0_127], %295 {strides = array<i32>} : memref<1x16x16xf32, #tpu.memory_space<vmem>>, vector<1x16x16xf32>,
    return
  }
  func.func @transform_0(%arg0: i32) -> (i32, i32, i32) {
    %c0_i32 = arith.constant 0 : i32
    %c0_i32_0 = arith.constant 0 : i32
    %c0_i32_1 = arith.constant 0 : i32
    return %arg0, %c0_i32, %c0_i32_0 : i32, i32, i32
  }
  func.func @transform_1(%arg0: i32) -> (i32, i32, i32) {
    %c0_i32 = arith.constant 0 : i32
    %c0_i32_0 = arith.constant 0 : i32
    %c0_i32_1 = arith.constant 0 : i32
    return %arg0, %c0_i32, %c0_i32_0 : i32, i32, i32
  }
  func.func @transform_2(%arg0: i32) -> (i32, i32) {
    %c0_i32 = arith.constant 0 : i32
    %c0_i32_0 = arith.constant 0 : i32
    %c0_i32_1 = arith.constant 0 : i32
    return %c0_i32, %c0_i32_0 : i32, i32
  }
  func.func @transform_3(%arg0: i32) -> (i32, i32) {
    %c0_i32 = arith.constant 0 : i32
    %c0_i32_0 = arith.constant 0 : i32
    %c0_i32_1 = arith.constant 0 : i32
    return %c0_i32, %c0_i32_0 : i32, i32
  }
  func.func @transform_4(%arg0: i32) -> (i32, i32) {
    %c0_i32 = arith.constant 0 : i32
    %c0_i32_0 = arith.constant 0 : i32
    %c0_i32_1 = arith.constant 0 : i32
    return %c0_i32, %c0_i32_0 : i32, i32
  }
  func.func @transform_5(%arg0: i32) -> (i32, i32) {
    %c0_i32 = arith.constant 0 : i32
    %c0_i32_0 = arith.constant 0 : i32
    %c0_i32_1 = arith.constant 0 : i32
    return %c0_i32, %c0_i32_0 : i32, i32
  }
  func.func @transform_6(%arg0: i32) -> (i32, i32) {
    %c0_i32 = arith.constant 0 : i32
    %c0_i32_0 = arith.constant 0 : i32
    %c0_i32_1 = arith.constant 0 : i32
    return %c0_i32, %c0_i32_0 : i32, i32
  }
  func.func @transform_7(%arg0: i32) -> (i32, i32) {
    %c0_i32 = arith.constant 0 : i32
    %c0_i32_0 = arith.constant 0 : i32
    %c0_i32_1 = arith.constant 0 : i32
    return %c0_i32, %c0_i32_0 : i32, i32
  }
  func.func @transform_8(%arg0: i32) -> (i32, i32) {
    %c0_i32 = arith.constant 0 : i32
    %c0_i32_0 = arith.constant 0 : i32
    %c0_i32_1 = arith.constant 0 : i32
    return %c0_i32, %c0_i32_0 : i32, i32
  }
  func.func @transform_9(%arg0: i32) -> (i32, i32) {
    %c0_i32 = arith.constant 0 : i32
    %c0_i32_0 = arith.constant 0 : i32
    %c0_i32_1 = arith.constant 0 : i32
    return %c0_i32, %c0_i32_0 : i32, i32
  }
  func.func @transform_10(%arg0: i32) -> (i32, i32) {
    %c0_i32 = arith.constant 0 : i32
    %c0_i32_0 = arith.constant 0 : i32
    %c0_i32_1 = arith.constant 0 : i32
    return %c0_i32, %c0_i32_0 : i32, i32
  }
  func.func @transform_11(%arg0: i32) -> (i32, i32) {
    %c0_i32 = arith.constant 0 : i32
    %c0_i32_0 = arith.constant 0 : i32
    %c0_i32_1 = arith.constant 0 : i32
    return %c0_i32, %c0_i32_0 : i32, i32
  }
  func.func @transform_12(%arg0: i32) -> (i32, i32) {
    %c0_i32 = arith.constant 0 : i32
    %c0_i32_0 = arith.constant 0 : i32
    %c0_i32_1 = arith.constant 0 : i32
    return %c0_i32, %c0_i32_0 : i32, i32
  }
  func.func @transform_13(%arg0: i32) -> (i32, i32) {
    %c0_i32 = arith.constant 0 : i32
    %c0_i32_0 = arith.constant 0 : i32
    %c0_i32_1 = arith.constant 0 : i32
    return %c0_i32, %c0_i32_0 : i32, i32
  }
  func.func @transform_14(%arg0: i32) -> (i32, i32) {
    %c0_i32 = arith.constant 0 : i32
    %c0_i32_0 = arith.constant 0 : i32
    %c0_i32_1 = arith.constant 0 : i32
    return %c0_i32, %c0_i32_0 : i32, i32
  }
  func.func @transform_15(%arg0: i32) -> (i32, i32) {
    %c0_i32 = arith.constant 0 : i32
    %c0_i32_0 = arith.constant 0 : i32
    %c0_i32_1 = arith.constant 0 : i32
    return %c0_i32, %c0_i32_0 : i32, i32
  }
  func.func @transform_16(%arg0: i32) -> (i32, i32) {
    %c0_i32 = arith.constant 0 : i32
    %c0_i32_0 = arith.constant 0 : i32
    %c0_i32_1 = arith.constant 0 : i32
    return %c0_i32, %c0_i32_0 : i32, i32
  }
  func.func @transform_17(%arg0: i32) -> (i32, i32) {
    %c0_i32 = arith.constant 0 : i32
    %c0_i32_0 = arith.constant 0 : i32
    %c0_i32_1 = arith.constant 0 : i32
    return %c0_i32, %c0_i32_0 : i32, i32
  }
  func.func @transform_18(%arg0: i32) -> (i32, i32) {
    %c0_i32 = arith.constant 0 : i32
    %c0_i32_0 = arith.constant 0 : i32
    %c0_i32_1 = arith.constant 0 : i32
    return %c0_i32, %c0_i32_0 : i32, i32
  }
  func.func @transform_19(%arg0: i32) -> (i32, i32) {
    %c0_i32 = arith.constant 0 : i32
    %c0_i32_0 = arith.constant 0 : i32
    %c0_i32_1 = arith.constant 0 : i32
    return %c0_i32, %c0_i32_0 : i32, i32
  }
  func.func @transform_20(%arg0: i32) -> (i32, i32, i32) {
    %c0_i32 = arith.constant 0 : i32
    %c0_i32_0 = arith.constant 0 : i32
    %c0_i32_1 = arith.constant 0 : i32
    return %arg0, %c0_i32, %c0_i32_0 : i32, i32, i32
  }
}

</mosaic_0001>

<llo_original>
// kernel: sam_with_bbox_forward.1
$region0: #{sam_with_bbox_forward.1}
  #allocation0 [shape = 'u32[]', space=smem, size = 0x4, offset = 0x4, fixed_abs, tag = 'smem constant byte address 0x4 - core index']
  #allocation1 [shape = 'u32[144,128]{1,0:T(1,128)}', space=vmem, size = 0x12000, scoped, tag = 'internal scratch']
  %s0 = inlined_call_operand.vmem [shape: f32[2,16,192], index: 0, kind: input, shape index: {}]
  %s1 = inlined_call_operand.vmem [shape: f32[2,7,32], index: 1, kind: input, shape index: {}]
  %s2 = inlined_call_operand.vmem [shape: f32[23,128], index: 2, kind: input, shape index: {}]
  %s3 = inlined_call_operand.vmem [shape: bf16[192,32], index: 3, kind: input, shape index: {}]
  %s4 = inlined_call_operand.vmem [shape: f32[16,32], index: 4, kind: input, shape index: {}]
  %s5 = inlined_call_operand.vmem [shape: f32[16,32], index: 5, kind: input, shape index: {}]
  %s6 = inlined_call_operand.vmem [shape: bf16[32,96], index: 6, kind: input, shape index: {}]
  %s7 = inlined_call_operand.vmem [shape: bf16[32,32], index: 7, kind: input, shape index: {}]
  %s8 = inlined_call_operand.vmem [shape: bf16[32,64], index: 8, kind: input, shape index: {}]
  %s9 = inlined_call_operand.vmem [shape: bf16[64,32], index: 9, kind: input, shape index: {}]
  %s10 = inlined_call_operand.vmem [shape: bf16[32,32], index: 10, kind: input, shape index: {}]
  %s11 = inlined_call_operand.vmem [shape: bf16[32,64], index: 11, kind: input, shape index: {}]
  %s12 = inlined_call_operand.vmem [shape: bf16[32,32], index: 12, kind: input, shape index: {}]
  %s13 = inlined_call_operand.vmem [shape: bf16[32,64], index: 13, kind: input, shape index: {}]
  %s14 = inlined_call_operand.vmem [shape: bf16[64,32], index: 14, kind: input, shape index: {}]
  %s15 = inlined_call_operand.vmem [shape: bf16[32,64], index: 15, kind: input, shape index: {}]
  %s16 = inlined_call_operand.vmem [shape: bf16[64,128], index: 16, kind: input, shape index: {}]
  %s17 = inlined_call_operand.vmem [shape: bf16[32,32], index: 17, kind: input, shape index: {}]
  %s18 = inlined_call_operand.vmem [shape: bf16[32,128], index: 18, kind: input, shape index: {}]
  %s19 = inlined_call_operand.vmem [shape: bf16[128,16], index: 19, kind: input, shape index: {}]
  %s20 = inlined_call_operand.vmem [shape: f32[2,16,16], index: 20, kind: output, shape index: {}]
  %s21 = sld [smem:[#allocation0]]
  $region113: #{sam_with_bbox_forward.1} parent=0
    _
  %s23 = ssub.s32 1, %s21
  %s24 = scalar_select 0, %s23, %s21
  loop: start=0, step=1, limit=4
  $region2: #{sam_with_bbox_forward.1} parent=0 // loop_pre_header
    _
  $region3: #{sam_with_bbox_forward.1} parent=0 // loop_header
    %s26 = sphi 0, %s30
    %p27 = scmp.ge.s32.totalorder %s26, 4
    %s36 = sphi 0, %s38
    %s39 = sphi 0, %s36
    %s40 = sphi 0, %s39
    %s56 = sphi 0, %s40
    %s62 = sphi 0, %s64
    %s65 = sphi 0, %s62
    %s66 = sphi 0, %s65
    %s82 = sphi 0, %s66
    %s86 = sphi 0, %s86
    %s88 = sphi 0, %s86
    %s89 = sphi 0, %s88
    %s103 = sphi 0, %s89
    %s107 = sphi 0, %s107
    %s109 = sphi 0, %s107
    %s110 = sphi 0, %s109
    %s124 = sphi 0, %s110
    %s128 = sphi 0, %s128
    %s130 = sphi 0, %s128
    %s131 = sphi 0, %s130
    %s145 = sphi 0, %s131
    %s149 = sphi 0, %s149
    %s151 = sphi 0, %s149
    %s152 = sphi 0, %s151
    %s166 = sphi 0, %s152
    %s170 = sphi 0, %s170
    %s172 = sphi 0, %s170
    %s173 = sphi 0, %s172
    %s187 = sphi 0, %s173
    %s191 = sphi 0, %s191
    %s193 = sphi 0, %s191
    %s194 = sphi 0, %s193
    %s208 = sphi 0, %s194
    %s212 = sphi 0, %s212
    %s214 = sphi 0, %s212
    %s215 = sphi 0, %s214
    %s229 = sphi 0, %s215
    %s233 = sphi 0, %s233
    %s235 = sphi 0, %s233
    %s236 = sphi 0, %s235
    %s250 = sphi 0, %s236
    %s254 = sphi 0, %s254
    %s256 = sphi 0, %s254
    %s257 = sphi 0, %s256
    %s271 = sphi 0, %s257
    %s275 = sphi 0, %s275
    %s277 = sphi 0, %s275
    %s278 = sphi 0, %s277
    %s292 = sphi 0, %s278
    %s296 = sphi 0, %s296
    %s298 = sphi 0, %s296
    %s299 = sphi 0, %s298
    %s313 = sphi 0, %s299
    %s317 = sphi 0, %s317
    %s319 = sphi 0, %s317
    %s320 = sphi 0, %s319
    %s334 = sphi 0, %s320
    %s338 = sphi 0, %s338
    %s340 = sphi 0, %s338
    %s341 = sphi 0, %s340
    %s355 = sphi 0, %s341
    %s359 = sphi 0, %s359
    %s361 = sphi 0, %s359
    %s362 = sphi 0, %s361
    %s376 = sphi 0, %s362
    %s380 = sphi 0, %s380
    %s382 = sphi 0, %s380
    %s383 = sphi 0, %s382
    %s397 = sphi 0, %s383
    %s401 = sphi 0, %s401
    %s403 = sphi 0, %s401
    %s404 = sphi 0, %s403
    %s418 = sphi 0, %s404
    %s422 = sphi 0, %s422
    %s424 = sphi 0, %s422
    %s425 = sphi 0, %s424
    %s439 = sphi 0, %s425
    %s443 = sphi 0, %s443
    %s445 = sphi 0, %s443
    %s446 = sphi 0, %s445
    %s460 = sphi 0, %s446
    %s466 = sphi 0, %s468
    %s469 = sphi 0, %s466
    %s470 = sphi 0, %s469
    %s486 = sphi 0, %s470
  $region4: #{sam_with_bbox_forward.1} parent=0 // loop_header_branch
    %29 = sbr.rel (%p27) target = $region8
  $region5: #{sam_with_bbox_forward.1} parent=0 // loop_body
    %s31 = ssub.s32 %s26, 1
    %s32 = ssub.s32 %s26, 2
    %s33 = sadd.s32 %s26, 1
    %s34 = ssub.s32 %s26, %s33
    %p35 = scmp.eq.s32.totalorder %s34, 0
    %s37 = sadd.s32 %s36, 1
    %s38 = scalar_select %p35, %s36, %s37
    %p41 = pneg %p35
    %p42 = scmp.eq.s32.totalorder %s26, 1
    %p43 = por %p41, %p42
    %p44 = scmp.ne.s32.totalorder %s36, %s39
    %p45 = scmp.eq.s32.totalorder %s26, 0
    %p46 = por %p44, %p45
    %p47 = scmp.ne.s32.totalorder %s36, %s39
    %p48 = scmp.eq.s32.totalorder %s31, 1
    %p49 = por %p47, %p48
    %p50 = scmp.ne.s32.totalorder %s39, %s40
    %p51 = scmp.eq.s32.totalorder %s31, 0
    %p52 = por %p50, %p51
    %p53 = scmp.ne.s32.totalorder %s39, %s40
    %p54 = scmp.eq.s32.totalorder %s32, 1
    %p55 = por %p53, %p54
    %p57 = scmp.ne.s32.totalorder %s40, %s56
    %p58 = scmp.eq.s32.totalorder %s32, 0
    %p59 = por %p57, %p58
    %s60 = ssub.s32 %s26, %s33
    %p61 = scmp.eq.s32.totalorder %s60, 0
    %s63 = sadd.s32 %s62, 1
    %s64 = scalar_select %p61, %s62, %s63
    %p67 = pneg %p61
    %p68 = scmp.eq.s32.totalorder %s26, 1
    %p69 = por %p67, %p68
    %p70 = scmp.ne.s32.totalorder %s62, %s65
    %p71 = scmp.eq.s32.totalorder %s26, 0
    %p72 = por %p70, %p71
    %p73 = scmp.ne.s32.totalorder %s62, %s65
    %p74 = scmp.eq.s32.totalorder %s31, 1
    %p75 = por %p73, %p74
    %p76 = scmp.ne.s32.totalorder %s65, %s66
    %p77 = scmp.eq.s32.totalorder %s31, 0
    %p78 = por %p76, %p77
    %p79 = scmp.ne.s32.totalorder %s65, %s66
    %p80 = scmp.eq.s32.totalorder %s32, 1
    %p81 = por %p79, %p80
    %p83 = scmp.ne.s32.totalorder %s66, %s82
    %p84 = scmp.eq.s32.totalorder %s32, 0
    %p85 = por %p83, %p84
    %s87 = sadd.s32 %s86, 1
    %p90 = scmp.eq.s32.totalorder %s26, 1
    %p91 = scmp.ne.s32.totalorder %s86, %s88
    %p92 = scmp.eq.s32.totalorder %s26, 0
    %p93 = por %p91, %p92
    %p94 = scmp.ne.s32.totalorder %s86, %s88
    %p95 = scmp.eq.s32.totalorder %s31, 1
    %p96 = por %p94, %p95
    %p97 = scmp.ne.s32.totalorder %s88, %s89
    %p98 = scmp.eq.s32.totalorder %s31, 0
    %p99 = por %p97, %p98
    %p100 = scmp.ne.s32.totalorder %s88, %s89
    %p101 = scmp.eq.s32.totalorder %s32, 1
    %p102 = por %p100, %p101
    %p104 = scmp.ne.s32.totalorder %s89, %s103
    %p105 = scmp.eq.s32.totalorder %s32, 0
    %p106 = por %p104, %p105
    %s108 = sadd.s32 %s107, 1
    %p111 = scmp.eq.s32.totalorder %s26, 1
    %p112 = scmp.ne.s32.totalorder %s107, %s109
    %p113 = scmp.eq.s32.totalorder %s26, 0
    %p114 = por %p112, %p113
    %p115 = scmp.ne.s32.totalorder %s107, %s109
    %p116 = scmp.eq.s32.totalorder %s31, 1
    %p117 = por %p115, %p116
    %p118 = scmp.ne.s32.totalorder %s109, %s110
    %p119 = scmp.eq.s32.totalorder %s31, 0
    %p120 = por %p118, %p119
    %p121 = scmp.ne.s32.totalorder %s109, %s110
    %p122 = scmp.eq.s32.totalorder %s32, 1
    %p123 = por %p121, %p122
    %p125 = scmp.ne.s32.totalorder %s110, %s124
    %p126 = scmp.eq.s32.totalorder %s32, 0
    %p127 = por %p125, %p126
    %s129 = sadd.s32 %s128, 1
    %p132 = scmp.eq.s32.totalorder %s26, 1
    %p133 = scmp.ne.s32.totalorder %s128, %s130
    %p134 = scmp.eq.s32.totalorder %s26, 0
    %p135 = por %p133, %p134
    %p136 = scmp.ne.s32.totalorder %s128, %s130
    %p137 = scmp.eq.s32.totalorder %s31, 1
    %p138 = por %p136, %p137
    %p139 = scmp.ne.s32.totalorder %s130, %s131
    %p140 = scmp.eq.s32.totalorder %s31, 0
    %p141 = por %p139, %p140
    %p142 = scmp.ne.s32.totalorder %s130, %s131
    %p143 = scmp.eq.s32.totalorder %s32, 1
    %p144 = por %p142, %p143
    %p146 = scmp.ne.s32.totalorder %s131, %s145
    %p147 = scmp.eq.s32.totalorder %s32, 0
    %p148 = por %p146, %p147
    %s150 = sadd.s32 %s149, 1
    %p153 = scmp.eq.s32.totalorder %s26, 1
    %p154 = scmp.ne.s32.totalorder %s149, %s151
    %p155 = scmp.eq.s32.totalorder %s26, 0
    %p156 = por %p154, %p155
    %p157 = scmp.ne.s32.totalorder %s149, %s151
    %p158 = scmp.eq.s32.totalorder %s31, 1
    %p159 = por %p157, %p158
    %p160 = scmp.ne.s32.totalorder %s151, %s152
    %p161 = scmp.eq.s32.totalorder %s31, 0
    %p162 = por %p160, %p161
    %p163 = scmp.ne.s32.totalorder %s151, %s152
    %p164 = scmp.eq.s32.totalorder %s32, 1
    %p165 = por %p163, %p164
    %p167 = scmp.ne.s32.totalorder %s152, %s166
    %p168 = scmp.eq.s32.totalorder %s32, 0
    %p169 = por %p167, %p168
    %s171 = sadd.s32 %s170, 1
    %p174 = scmp.eq.s32.totalorder %s26, 1
    %p175 = scmp.ne.s32.totalorder %s170, %s172
    %p176 = scmp.eq.s32.totalorder %s26, 0
    %p177 = por %p175, %p176
    %p178 = scmp.ne.s32.totalorder %s170, %s172
    %p179 = scmp.eq.s32.totalorder %s31, 1
    %p180 = por %p178, %p179
    %p181 = scmp.ne.s32.totalorder %s172, %s173
    %p182 = scmp.eq.s32.totalorder %s31, 0
    %p183 = por %p181, %p182
    %p184 = scmp.ne.s32.totalorder %s172, %s173
    %p185 = scmp.eq.s32.totalorder %s32, 1
    %p186 = por %p184, %p185
    %p188 = scmp.ne.s32.totalorder %s173, %s187
    %p189 = scmp.eq.s32.totalorder %s32, 0
    %p190 = por %p188, %p189
    %s192 = sadd.s32 %s191, 1
    %p195 = scmp.eq.s32.totalorder %s26, 1
    %p196 = scmp.ne.s32.totalorder %s191, %s193
    %p197 = scmp.eq.s32.totalorder %s26, 0
    %p198 = por %p196, %p197
    %p199 = scmp.ne.s32.totalorder %s191, %s193
    %p200 = scmp.eq.s32.totalorder %s31, 1
    %p201 = por %p199, %p200
    %p202 = scmp.ne.s32.totalorder %s193, %s194
    %p203 = scmp.eq.s32.totalorder %s31, 0
    %p204 = por %p202, %p203
    %p205 = scmp.ne.s32.totalorder %s193, %s194
    %p206 = scmp.eq.s32.totalorder %s32, 1
    %p207 = por %p205, %p206
    %p209 = scmp.ne.s32.totalorder %s194, %s208
    %p210 = scmp.eq.s32.totalorder %s32, 0
    %p211 = por %p209, %p210
    %s213 = sadd.s32 %s212, 1
    %p216 = scmp.eq.s32.totalorder %s26, 1
    %p217 = scmp.ne.s32.totalorder %s212, %s214
    %p218 = scmp.eq.s32.totalorder %s26, 0
    %p219 = por %p217, %p218
    %p220 = scmp.ne.s32.totalorder %s212, %s214
    %p221 = scmp.eq.s32.totalorder %s31, 1
    %p222 = por %p220, %p221
    %p223 = scmp.ne.s32.totalorder %s214, %s215
    %p224 = scmp.eq.s32.totalorder %s31, 0
    %p225 = por %p223, %p224
    %p226 = scmp.ne.s32.totalorder %s214, %s215
    %p227 = scmp.eq.s32.totalorder %s32, 1
    %p228 = por %p226, %p227
    %p230 = scmp.ne.s32.totalorder %s215, %s229
    %p231 = scmp.eq.s32.totalorder %s32, 0
    %p232 = por %p230, %p231
    %s234 = sadd.s32 %s233, 1
    %p237 = scmp.eq.s32.totalorder %s26, 1
    %p238 = scmp.ne.s32.totalorder %s233, %s235
    %p239 = scmp.eq.s32.totalorder %s26, 0
    %p240 = por %p238, %p239
    %p241 = scmp.ne.s32.totalorder %s233, %s235
    %p242 = scmp.eq.s32.totalorder %s31, 1
    %p243 = por %p241, %p242
    %p244 = scmp.ne.s32.totalorder %s235, %s236
    %p245 = scmp.eq.s32.totalorder %s31, 0
    %p246 = por %p244, %p245
    %p247 = scmp.ne.s32.totalorder %s235, %s236
    %p248 = scmp.eq.s32.totalorder %s32, 1
    %p249 = por %p247, %p248
    %p251 = scmp.ne.s32.totalorder %s236, %s250
    %p252 = scmp.eq.s32.totalorder %s32, 0
    %p253 = por %p251, %p252
    %s255 = sadd.s32 %s254, 1
    %p258 = scmp.eq.s32.totalorder %s26, 1
    %p259 = scmp.ne.s32.totalorder %s254, %s256
    %p260 = scmp.eq.s32.totalorder %s26, 0
    %p261 = por %p259, %p260
    %p262 = scmp.ne.s32.totalorder %s254, %s256
    %p263 = scmp.eq.s32.totalorder %s31, 1
    %p264 = por %p262, %p263
    %p265 = scmp.ne.s32.totalorder %s256, %s257
    %p266 = scmp.eq.s32.totalorder %s31, 0
    %p267 = por %p265, %p266
    %p268 = scmp.ne.s32.totalorder %s256, %s257
    %p269 = scmp.eq.s32.totalorder %s32, 1
    %p270 = por %p268, %p269
    %p272 = scmp.ne.s32.totalorder %s257, %s271
    %p273 = scmp.eq.s32.totalorder %s32, 0
    %p274 = por %p272, %p273
    %s276 = sadd.s32 %s275, 1
    %p279 = scmp.eq.s32.totalorder %s26, 1
    %p280 = scmp.ne.s32.totalorder %s275, %s277
    %p281 = scmp.eq.s32.totalorder %s26, 0
    %p282 = por %p280, %p281
    %p283 = scmp.ne.s32.totalorder %s275, %s277
    %p284 = scmp.eq.s32.totalorder %s31, 1
    %p285 = por %p283, %p284
    %p286 = scmp.ne.s32.totalorder %s277, %s278
    %p287 = scmp.eq.s32.totalorder %s31, 0
    %p288 = por %p286, %p287
    %p289 = scmp.ne.s32.totalorder %s277, %s278
    %p290 = scmp.eq.s32.totalorder %s32, 1
    %p291 = por %p289, %p290
    %p293 = scmp.ne.s32.totalorder %s278, %s292
    %p294 = scmp.eq.s32.totalorder %s32, 0
    %p295 = por %p293, %p294
    %s297 = sadd.s32 %s296, 1
    %p300 = scmp.eq.s32.totalorder %s26, 1
    %p301 = scmp.ne.s32.totalorder %s296, %s298
    %p302 = scmp.eq.s32.totalorder %s26, 0
    %p303 = por %p301, %p302
    %p304 = scmp.ne.s32.totalorder %s296, %s298
    %p305 = scmp.eq.s32.totalorder %s31, 1
    %p306 = por %p304, %p305
    %p307 = scmp.ne.s32.totalorder %s298, %s299
    %p308 = scmp.eq.s32.totalorder %s31, 0
    %p309 = por %p307, %p308
    %p310 = scmp.ne.s32.totalorder %s298, %s299
    %p311 = scmp.eq.s32.totalorder %s32, 1
    %p312 = por %p310, %p311
    %p314 = scmp.ne.s32.totalorder %s299, %s313
    %p315 = scmp.eq.s32.totalorder %s32, 0
    %p316 = por %p314, %p315
    %s318 = sadd.s32 %s317, 1
    %p321 = scmp.eq.s32.totalorder %s26, 1
    %p322 = scmp.ne.s32.totalorder %s317, %s319
    %p323 = scmp.eq.s32.totalorder %s26, 0
    %p324 = por %p322, %p323
    %p325 = scmp.ne.s32.totalorder %s317, %s319
    %p326 = scmp.eq.s32.totalorder %s31, 1
    %p327 = por %p325, %p326
    %p328 = scmp.ne.s32.totalorder %s319, %s320
    %p329 = scmp.eq.s32.totalorder %s31, 0
    %p330 = por %p328, %p329
    %p331 = scmp.ne.s32.totalorder %s319, %s320
    %p332 = scmp.eq.s32.totalorder %s32, 1
    %p333 = por %p331, %p332
    %p335 = scmp.ne.s32.totalorder %s320, %s334
    %p336 = scmp.eq.s32.totalorder %s32, 0
    %p337 = por %p335, %p336
    %s339 = sadd.s32 %s338, 1
    %p342 = scmp.eq.s32.totalorder %s26, 1
    %p343 = scmp.ne.s32.totalorder %s338, %s340
    %p344 = scmp.eq.s32.totalorder %s26, 0
    %p345 = por %p343, %p344
    %p346 = scmp.ne.s32.totalorder %s338, %s340
    %p347 = scmp.eq.s32.totalorder %s31, 1
    %p348 = por %p346, %p347
    %p349 = scmp.ne.s32.totalorder %s340, %s341
    %p350 = scmp.eq.s32.totalorder %s31, 0
    %p351 = por %p349, %p350
    %p352 = scmp.ne.s32.totalorder %s340, %s341
    %p353 = scmp.eq.s32.totalorder %s32, 1
    %p354 = por %p352, %p353
    %p356 = scmp.ne.s32.totalorder %s341, %s355
    %p357 = scmp.eq.s32.totalorder %s32, 0
    %p358 = por %p356, %p357
    %s360 = sadd.s32 %s359, 1
    %p363 = scmp.eq.s32.totalorder %s26, 1
    %p364 = scmp.ne.s32.totalorder %s359, %s361
    %p365 = scmp.eq.s32.totalorder %s26, 0
    %p366 = por %p364, %p365
    %p367 = scmp.ne.s32.totalorder %s359, %s361
    %p368 = scmp.eq.s32.totalorder %s31, 1
    %p369 = por %p367, %p368
    %p370 = scmp.ne.s32.totalorder %s361, %s362
    %p371 = scmp.eq.s32.totalorder %s31, 0
    %p372 = por %p370, %p371
    %p373 = scmp.ne.s32.totalorder %s361, %s362
    %p374 = scmp.eq.s32.totalorder %s32, 1
    %p375 = por %p373, %p374
    %p377 = scmp.ne.s32.totalorder %s362, %s376
    %p378 = scmp.eq.s32.totalorder %s32, 0
    %p379 = por %p377, %p378
    %s381 = sadd.s32 %s380, 1
    %p384 = scmp.eq.s32.totalorder %s26, 1
    %p385 = scmp.ne.s32.totalorder %s380, %s382
    %p386 = scmp.eq.s32.totalorder %s26, 0
    %p387 = por %p385, %p386
    %p388 = scmp.ne.s32.totalorder %s380, %s382
    %p389 = scmp.eq.s32.totalorder %s31, 1
    %p390 = por %p388, %p389
    %p391 = scmp.ne.s32.totalorder %s382, %s383
    %p392 = scmp.eq.s32.totalorder %s31, 0
    %p393 = por %p391, %p392
    %p394 = scmp.ne.s32.totalorder %s382, %s383
    %p395 = scmp.eq.s32.totalorder %s32, 1
    %p396 = por %p394, %p395
    %p398 = scmp.ne.s32.totalorder %s383, %s397
    %p399 = scmp.eq.s32.totalorder %s32, 0
    %p400 = por %p398, %p399
    %s402 = sadd.s32 %s401, 1
    %p405 = scmp.eq.s32.totalorder %s26, 1
    %p406 = scmp.ne.s32.totalorder %s401, %s403
    %p407 = scmp.eq.s32.totalorder %s26, 0
    %p408 = por %p406, %p407
    %p409 = scmp.ne.s32.totalorder %s401, %s403
    %p410 = scmp.eq.s32.totalorder %s31, 1
    %p411 = por %p409, %p410
    %p412 = scmp.ne.s32.totalorder %s403, %s404
    %p413 = scmp.eq.s32.totalorder %s31, 0
    %p414 = por %p412, %p413
    %p415 = scmp.ne.s32.totalorder %s403, %s404
    %p416 = scmp.eq.s32.totalorder %s32, 1
    %p417 = por %p415, %p416
    %p419 = scmp.ne.s32.totalorder %s404, %s418
    %p420 = scmp.eq.s32.totalorder %s32, 0
    %p421 = por %p419, %p420
    %s423 = sadd.s32 %s422, 1
    %p426 = scmp.eq.s32.totalorder %s26, 1
    %p427 = scmp.ne.s32.totalorder %s422, %s424
    %p428 = scmp.eq.s32.totalorder %s26, 0
    %p429 = por %p427, %p428
    %p430 = scmp.ne.s32.totalorder %s422, %s424
    %p431 = scmp.eq.s32.totalorder %s31, 1
    %p432 = por %p430, %p431
    %p433 = scmp.ne.s32.totalorder %s424, %s425
    %p434 = scmp.eq.s32.totalorder %s31, 0
    %p435 = por %p433, %p434
    %p436 = scmp.ne.s32.totalorder %s424, %s425
    %p437 = scmp.eq.s32.totalorder %s32, 1
    %p438 = por %p436, %p437
    %p440 = scmp.ne.s32.totalorder %s425, %s439
    %p441 = scmp.eq.s32.totalorder %s32, 0
    %p442 = por %p440, %p441
    %s444 = sadd.s32 %s443, 1
    %p447 = scmp.eq.s32.totalorder %s26, 1
    %p448 = scmp.ne.s32.totalorder %s443, %s445
    %p449 = scmp.eq.s32.totalorder %s26, 0
    %p450 = por %p448, %p449
    %p451 = scmp.ne.s32.totalorder %s443, %s445
    %p452 = scmp.eq.s32.totalorder %s31, 1
    %p453 = por %p451, %p452
    %p454 = scmp.ne.s32.totalorder %s445, %s446
    %p455 = scmp.eq.s32.totalorder %s31, 0
    %p456 = por %p454, %p455
    %p457 = scmp.ne.s32.totalorder %s445, %s446
    %p458 = scmp.eq.s32.totalorder %s32, 1
    %p459 = por %p457, %p458
    %p461 = scmp.ne.s32.totalorder %s446, %s460
    %p462 = scmp.eq.s32.totalorder %s32, 0
    %p463 = por %p461, %p462
    %s464 = ssub.s32 %s26, %s33
    %p465 = scmp.eq.s32.totalorder %s464, 0
    %s467 = sadd.s32 %s466, 1
    %s468 = scalar_select %p465, %s466, %s467
    %p471 = pneg %p465
    %p472 = scmp.eq.s32.totalorder %s26, 1
    %p473 = por %p471, %p472
    %p474 = scmp.ne.s32.totalorder %s466, %s469
    %p475 = scmp.eq.s32.totalorder %s26, 0
    %p476 = por %p474, %p475
    %p477 = scmp.ne.s32.totalorder %s466, %s469
    %p478 = scmp.eq.s32.totalorder %s31, 1
    %p479 = por %p477, %p478
    %p480 = scmp.ne.s32.totalorder %s469, %s470
    %p481 = scmp.eq.s32.totalorder %s31, 0
    %p482 = por %p480, %p481
    %p483 = scmp.ne.s32.totalorder %s469, %s470
    %p484 = scmp.eq.s32.totalorder %s32, 1
    %p485 = por %p483, %p484
    %p487 = scmp.ne.s32.totalorder %s470, %s486
    %p488 = scmp.eq.s32.totalorder %s32, 0
    %p489 = por %p487, %p488
    %p490 = scmp.le.s32.totalorder 1, %s26
    %p491 = scmp.lt.s32.totalorder %s26, 3
    %p492 = pnand %p490, %p491
    %p493 = pneg %p492
    // Predicated region
    $region9: #{sam_with_bbox_forward.1} parent=5 // pred_check
      _
    $region10: #{sam_with_bbox_forward.1} parent=5 // pred_check_branch
      %495 = sbr.rel (%p492) target = $region12
    $region11: #{sam_with_bbox_forward.1} parent=5 // pred_region
      %s496 = ssub.s32 %s26, 1
      // Predicated region
      $region13: #{sam_with_bbox_forward.1} parent=11 // pred_check
        %p497 = pneg %p99
      $region14: #{sam_with_bbox_forward.1} parent=11 // pred_check_branch
        %499 = sbr.rel (%p497) target = $region16
      $region15: #{sam_with_bbox_forward.1} parent=11 // pred_region
        _
      $region16: #{sam_with_bbox_forward.1} parent=11 // pred_fallthru
        _
      // Predicated region
      $region17: #{sam_with_bbox_forward.1} parent=11 // pred_check
        %p500 = pneg %p120
      $region18: #{sam_with_bbox_forward.1} parent=11 // pred_check_branch
        %502 = sbr.rel (%p500) target = $region20
      $region19: #{sam_with_bbox_forward.1} parent=11 // pred_region
        _
      $region20: #{sam_with_bbox_forward.1} parent=11 // pred_fallthru
        _
      // Predicated region
      $region21: #{sam_with_bbox_forward.1} parent=11 // pred_check
        %p503 = pneg %p141
      $region22: #{sam_with_bbox_forward.1} parent=11 // pred_check_branch
        %505 = sbr.rel (%p503) target = $region24
      $region23: #{sam_with_bbox_forward.1} parent=11 // pred_region
        _
      $region24: #{sam_with_bbox_forward.1} parent=11 // pred_fallthru
        _
      // Predicated region
      $region25: #{sam_with_bbox_forward.1} parent=11 // pred_check
        %p506 = pneg %p162
      $region26: #{sam_with_bbox_forward.1} parent=11 // pred_check_branch
        %508 = sbr.rel (%p506) target = $region28
      $region27: #{sam_with_bbox_forward.1} parent=11 // pred_region
        _
      $region28: #{sam_with_bbox_forward.1} parent=11 // pred_fallthru
        _
      // Predicated region
      $region29: #{sam_with_bbox_forward.1} parent=11 // pred_check
        %p509 = pneg %p183
      $region30: #{sam_with_bbox_forward.1} parent=11 // pred_check_branch
        %511 = sbr.rel (%p509) target = $region32
      $region31: #{sam_with_bbox_forward.1} parent=11 // pred_region
        _
      $region32: #{sam_with_bbox_forward.1} parent=11 // pred_fallthru
        _
      // Predicated region
      $region33: #{sam_with_bbox_forward.1} parent=11 // pred_check
        %p512 = pneg %p204
      $region34: #{sam_with_bbox_forward.1} parent=11 // pred_check_branch
        %514 = sbr.rel (%p512) target = $region36
      $region35: #{sam_with_bbox_forward.1} parent=11 // pred_region
        _
      $region36: #{sam_with_bbox_forward.1} parent=11 // pred_fallthru
        _
      // Predicated region
      $region37: #{sam_with_bbox_forward.1} parent=11 // pred_check
        %p515 = pneg %p225
      $region38: #{sam_with_bbox_forward.1} parent=11 // pred_check_branch
        %517 = sbr.rel (%p515) target = $region40
      $region39: #{sam_with_bbox_forward.1} parent=11 // pred_region
        _
      $region40: #{sam_with_bbox_forward.1} parent=11 // pred_fallthru
        _
      // Predicated region
      $region41: #{sam_with_bbox_forward.1} parent=11 // pred_check
        %p518 = pneg %p246
      $region42: #{sam_with_bbox_forward.1} parent=11 // pred_check_branch
        %520 = sbr.rel (%p518) target = $region44
      $region43: #{sam_with_bbox_forward.1} parent=11 // pred_region
        _
      $region44: #{sam_with_bbox_forward.1} parent=11 // pred_fallthru
        _
      // Predicated region
      $region45: #{sam_with_bbox_forward.1} parent=11 // pred_check
        %p521 = pneg %p267
      $region46: #{sam_with_bbox_forward.1} parent=11 // pred_check_branch
        %523 = sbr.rel (%p521) target = $region48
      $region47: #{sam_with_bbox_forward.1} parent=11 // pred_region
        _
      $region48: #{sam_with_bbox_forward.1} parent=11 // pred_fallthru
        _
      // Predicated region
      $region49: #{sam_with_bbox_forward.1} parent=11 // pred_check
        %p524 = pneg %p288
      $region50: #{sam_with_bbox_forward.1} parent=11 // pred_check_branch
        %526 = sbr.rel (%p524) target = $region52
      $region51: #{sam_with_bbox_forward.1} parent=11 // pred_region
        _
      $region52: #{sam_with_bbox_forward.1} parent=11 // pred_fallthru
        _
      // Predicated region
      $region53: #{sam_with_bbox_forward.1} parent=11 // pred_check
        %p527 = pneg %p309
      $region54: #{sam_with_bbox_forward.1} parent=11 // pred_check_branch
        %529 = sbr.rel (%p527) target = $region56
      $region55: #{sam_with_bbox_forward.1} parent=11 // pred_region
        _
      $region56: #{sam_with_bbox_forward.1} parent=11 // pred_fallthru
        _
      // Predicated region
      $region57: #{sam_with_bbox_forward.1} parent=11 // pred_check
        %p530 = pneg %p330
      $region58: #{sam_with_bbox_forward.1} parent=11 // pred_check_branch
        %532 = sbr.rel (%p530) target = $region60
      $region59: #{sam_with_bbox_forward.1} parent=11 // pred_region
        _
      $region60: #{sam_with_bbox_forward.1} parent=11 // pred_fallthru
        _
      // Predicated region
      $region61: #{sam_with_bbox_forward.1} parent=11 // pred_check
        %p533 = pneg %p351
      $region62: #{sam_with_bbox_forward.1} parent=11 // pred_check_branch
        %535 = sbr.rel (%p533) target = $region64
      $region63: #{sam_with_bbox_forward.1} parent=11 // pred_region
        _
      $region64: #{sam_with_bbox_forward.1} parent=11 // pred_fallthru
        _
      // Predicated region
      $region65: #{sam_with_bbox_forward.1} parent=11 // pred_check
        %p536 = pneg %p372
      $region66: #{sam_with_bbox_forward.1} parent=11 // pred_check_branch
        %538 = sbr.rel (%p536) target = $region68
      $region67: #{sam_with_bbox_forward.1} parent=11 // pred_region
        _
      $region68: #{sam_with_bbox_forward.1} parent=11 // pred_fallthru
        _
      // Predicated region
      $region69: #{sam_with_bbox_forward.1} parent=11 // pred_check
        %p539 = pneg %p393
      $region70: #{sam_with_bbox_forward.1} parent=11 // pred_check_branch
        %541 = sbr.rel (%p539) target = $region72
      $region71: #{sam_with_bbox_forward.1} parent=11 // pred_region
        _
      $region72: #{sam_with_bbox_forward.1} parent=11 // pred_fallthru
        _
      // Predicated region
      $region73: #{sam_with_bbox_forward.1} parent=11 // pred_check
        %p542 = pneg %p414
      $region74: #{sam_with_bbox_forward.1} parent=11 // pred_check_branch
        %544 = sbr.rel (%p542) target = $region76
      $region75: #{sam_with_bbox_forward.1} parent=11 // pred_region
        _
      $region76: #{sam_with_bbox_forward.1} parent=11 // pred_fallthru
        _
      // Predicated region
      $region77: #{sam_with_bbox_forward.1} parent=11 // pred_check
        %p545 = pneg %p435
      $region78: #{sam_with_bbox_forward.1} parent=11 // pred_check_branch
        %547 = sbr.rel (%p545) target = $region80
      $region79: #{sam_with_bbox_forward.1} parent=11 // pred_region
        _
      $region80: #{sam_with_bbox_forward.1} parent=11 // pred_fallthru
        _
      // Predicated region
      $region81: #{sam_with_bbox_forward.1} parent=11 // pred_check
        %p548 = pneg %p456
      $region82: #{sam_with_bbox_forward.1} parent=11 // pred_check_branch
        %550 = sbr.rel (%p548) target = $region84
      $region83: #{sam_with_bbox_forward.1} parent=11 // pred_region
        _
      $region84: #{sam_with_bbox_forward.1} parent=11 // pred_fallthru
        _
    $region12: #{sam_with_bbox_forward.1} parent=5 // pred_fallthru
      _
    %p551 = scmp.lt.s32.totalorder %s26, 2
    // Predicated region
    $region85: #{sam_with_bbox_forward.1} parent=5 // pred_check
      %p552 = pneg %p551
    $region86: #{sam_with_bbox_forward.1} parent=5 // pred_check_branch
      %554 = sbr.rel (%p552) target = $region88
    $region87: #{sam_with_bbox_forward.1} parent=5 // pred_region
      // Predicated region
      $region89: #{sam_with_bbox_forward.1} parent=87 // pred_check
        %p555 = pneg %p46
      $region90: #{sam_with_bbox_forward.1} parent=87 // pred_check_branch
        %557 = sbr.rel (%p555) target = $region92
      $region91: #{sam_with_bbox_forward.1} parent=87 // pred_region
        %p558 = scmp.lt.s32.totalorder %s26, 1
        %s559 = scalar_select %p558, %s26, 1
        %s560 = smul.addr %s559, 4
        %s561 = smul.addr %s560, 8
        %s562 = scalar_lea.vmem %s0, %s561
      $region92: #{sam_with_bbox_forward.1} parent=87 // pred_fallthru
        _
      // Predicated region
      $region93: #{sam_with_bbox_forward.1} parent=87 // pred_check
        %p563 = pneg %p72
      $region94: #{sam_with_bbox_forward.1} parent=87 // pred_check_branch
        %565 = sbr.rel (%p563) target = $region96
      $region95: #{sam_with_bbox_forward.1} parent=87 // pred_region
        %p566 = scmp.lt.s32.totalorder %s26, 1
        %s567 = scalar_select %p566, %s26, 1
        %s568 = smul.addr %s567, 8
        %s569 = scalar_lea.vmem %s1, %s568
      $region96: #{sam_with_bbox_forward.1} parent=87 // pred_fallthru
        _
    $region88: #{sam_with_bbox_forward.1} parent=5 // pred_fallthru
      _
    %p570 = scmp.le.s32.totalorder 1, %s26
    %p571 = scmp.lt.s32.totalorder %s26, 3
    %p572 = pnand %p570, %p571
    %p573 = pneg %p572
    // Predicated region
    $region97: #{sam_with_bbox_forward.1} parent=5 // pred_check
      _
    $region98: #{sam_with_bbox_forward.1} parent=5 // pred_check_branch
      %575 = sbr.rel (%p572) target = $region100
    $region99: #{sam_with_bbox_forward.1} parent=5 // pred_region
      %s576 = ssub.s32 %s26, 1
      %p577 = scmp.lt.s32.totalorder %s31, 1
      %s578 = scalar_select %p577, %s31, 1
      %s579 = smul.addr %s578, 4
      %s580 = smul.addr %s579, 8
      %s581 = scalar_lea.vmem %s0, %s580
      %p582 = pneg %p52
      %p583 = pneg %p49
      %p584 = scmp.lt.s32.totalorder %s31, 1
      %s585 = scalar_select %p584, %s31, 1
      %s586 = smul.addr %s585, 8
      %s587 = scalar_lea.vmem %s1, %s586
      %p588 = pneg %p78
      %p589 = pneg %p75
      %p590 = pneg %p99
      %p591 = pneg %p96
      %p592 = pneg %p120
      %p593 = pneg %p117
      %p594 = pneg %p141
      %p595 = pneg %p138
      %p596 = pneg %p162
      %p597 = pneg %p159
      %p598 = pneg %p183
      %p599 = pneg %p180
      %p600 = pneg %p204
      %p601 = pneg %p201
      %p602 = pneg %p225
      %p603 = pneg %p222
      %p604 = pneg %p246
      %p605 = pneg %p243
      %p606 = pneg %p267
      %p607 = pneg %p264
      %p608 = pneg %p288
      %p609 = pneg %p285
      %p610 = pneg %p309
      %p611 = pneg %p306
      %p612 = pneg %p330
      %p613 = pneg %p327
      %p614 = pneg %p351
      %p615 = pneg %p348
      %p616 = pneg %p372
      %p617 = pneg %p369
      %p618 = pneg %p393
      %p619 = pneg %p390
      %p620 = pneg %p414
      %p621 = pneg %p411
      %p622 = pneg %p435
      %p623 = pneg %p432
      %p624 = pneg %p456
      %p625 = pneg %p453
      %p626 = pneg %p482
      %p627 = pneg %p479
      %p628 = scmp.lt.s32.totalorder %s31, 1
      %s629 = scalar_select %p628, %s31, 1
      %s630 = smul.addr %s629, 2
      %s631 = smul.addr %s630, 8
      %s632 = scalar_lea.vmem %s20, %s631
      %p633 = scmp.lt.s32.totalorder %s31, 1
      %s634 = scalar_select %p633, %s31, 1
      %s635 = smul.addr %s634, 4
      %s636 = smul.addr %s635, 8
      %s637 = scalar_lea.vmem %s0, %s636
      %p638 = scmp.lt.s32.totalorder %s31, 1
      %s639 = scalar_select %p638, %s31, 1
      %s640 = smul.addr %s639, 8
      %s641 = scalar_lea.vmem %s1, %s640
      %p642 = scmp.lt.s32.totalorder %s31, 1
      %s643 = scalar_select %p642, %s31, 1
      %s644 = smul.addr %s643, 2
      %s645 = smul.addr %s644, 8
      %s646 = scalar_lea.vmem %s20, %s645
      %v648 = vld [vmem:[%s637] sm:$0xff]
      %v649 = vld [vmem:[%s637 + $0x8] sm:$0xff]
      %v650 = vld [vmem:[%s637 + $0x10] sm:$0xff]
      %v651 = vld [vmem:[%s637 + $0x18] sm:$0xff]
      %v652 = vpack.c.bf16 %v650, %v648
      %v653 = vpack.c.bf16 %v651, %v649
      %v654 = vld [vmem:[%s3] sm:$0xf]
      %v655 = vld [vmem:[%s3 + $0x4] sm:$0xf]
      %v656 = vld [vmem:[%s3 + $0x8] sm:$0xf]
      %v657 = vld [vmem:[%s3 + $0xc] sm:$0xf]
      %v658 = vld [vmem:[%s3 + $0x10] sm:$0xf]
      %v659 = vld [vmem:[%s3 + $0x14] sm:$0xf]
      %v660 = vld [vmem:[%s3 + $0x18] sm:$0xf]
      %v661 = vld [vmem:[%s3 + $0x1c] sm:$0xf]
      %v662 = vld [vmem:[%s3 + $0x20] sm:$0xf]
      %v663 = vld [vmem:[%s3 + $0x24] sm:$0xf]
      %v664 = vld [vmem:[%s3 + $0x28] sm:$0xf]
      %v665 = vld [vmem:[%s3 + $0x2c] sm:$0xf]
      %v666 = vld [vmem:[%s3 + $0x30] sm:$0xf]
      %v667 = vld [vmem:[%s3 + $0x34] sm:$0xf]
      %v668 = vld [vmem:[%s3 + $0x38] sm:$0xf]
      %v669 = vld [vmem:[%s3 + $0x3c] sm:$0xf]
      %v670 = vld [vmem:[%s3 + $0x40] sm:$0xf]
      %v671 = vld [vmem:[%s3 + $0x44] sm:$0xf]
      %v672 = vld [vmem:[%s3 + $0x48] sm:$0xf]
      %v673 = vld [vmem:[%s3 + $0x4c] sm:$0xf]
      %v674 = vld [vmem:[%s3 + $0x50] sm:$0xf]
      %v675 = vld [vmem:[%s3 + $0x54] sm:$0xf]
      %v676 = vld [vmem:[%s3 + $0x58] sm:$0xf]
      %v677 = vld [vmem:[%s3 + $0x5c] sm:$0xf]
      %v678 = vld [vmem:[%s2] sm:$0x1]
      %v679 = vlaneseq
      %v680 = vshrl.u32 %v679, 7
      %v681 = vsub.s32 0, %v680
      %v682 = vrot.slane %v678, %v681
      %v707 = vunpack.c.l.b16 %v654
      %v708 = vunpack.c.l.b16 %v655
      %v709 = vunpack.c.l.b16 %v656
      %v710 = vunpack.c.l.b16 %v657
      %v711 = vunpack.c.l.b16 %v658
      %v712 = vunpack.c.l.b16 %v659
      %v713 = vunpack.c.l.b16 %v660
      %v714 = vunpack.c.l.b16 %v661
      %v715 = vunpack.c.l.b16 %v662
      %v716 = vunpack.c.l.b16 %v663
      %v717 = vunpack.c.l.b16 %v664
      %v718 = vunpack.c.l.b16 %v665
      %v719 = vunpack.c.l.b16 %v666
      %v720 = vunpack.c.l.b16 %v667
      %v721 = vunpack.c.l.b16 %v668
      %v722 = vunpack.c.l.b16 %v669
      %v723 = vunpack.c.l.b16 %v670
      %v724 = vunpack.c.l.b16 %v671
      %v725 = vunpack.c.l.b16 %v672
      %v726 = vunpack.c.l.b16 %v673
      %v727 = vunpack.c.l.b16 %v674
      %v728 = vunpack.c.l.b16 %v675
      %v729 = vunpack.c.l.b16 %v676
      %v730 = vunpack.c.l.b16 %v677
      %v731 = vpack.c.b16 %v708, %v707
      %v732 = vpack.c.b16 %v710, %v709
      %v733 = vpack.c.b16 %v712, %v711
      %v734 = vpack.c.b16 %v714, %v713
      %v735 = vpack.c.b16 %v716, %v715
      %v736 = vpack.c.b16 %v718, %v717
      %v737 = vpack.c.b16 %v720, %v719
      %v738 = vpack.c.b16 %v722, %v721
      %v739 = vpack.c.b16 %v724, %v723
      %v740 = vpack.c.b16 %v726, %v725
      %v741 = vpack.c.b16 %v728, %v727
      %v742 = vpack.c.b16 %v730, %v729
      %vm755 = vcmask 523264
      %v757 = vsel %vm755, %v653, 0
      %759 = vmatprep.subr.bf16.mxu0 0
      %760 = vmatpush1.bf16.msra.mxu0 %v731
      %761 = vmatprep.subr.bf16.mxu0 0
      %762 = vmatpush1.bf16.msra.mxu0 %v732
      %763 = vmatprep.subr.bf16.mxu0 0
      %764 = vmatpush1.bf16.msra.mxu0 %v733
      %765 = vmatprep.subr.bf16.mxu0 0
      %766 = vmatpush1.bf16.msra.mxu0 %v734
      %767 = vmatprep.subr.bf16.mxu0 0
      %768 = vmatpush1.bf16.msra.mxu0 %v735
      %769 = vmatprep.subr.bf16.mxu0 0
      %770 = vmatpush1.bf16.msra.mxu0 %v736
      %771 = vmatprep.subr.bf16.mxu0 0
      %772 = vmatpush1.bf16.msra.mxu0 %v737
      %773 = vmatprep.subr.bf16.mxu0 0
      %774 = vmatpush1.bf16.msra.mxu0 %v738
      %775 = vmatprep.subr.bf16.mxu0 0
      %776 = vmatpush1.bf16.msra.mxu0 %v739
      %777 = vmatprep.subr.bf16.mxu0 0
      %778 = vmatpush1.bf16.msra.mxu0 %v740
      %779 = vmatprep.subr.bf16.mxu0 0
      %780 = vmatpush1.bf16.msra.mxu0 %v741
      %781 = vmatprep.subr.bf16.mxu0 0
      %782 = vmatpush1.bf16.msra.mxu0 %v742
      %783 = vmatprep.subr.bf16.mxu0 0
      %784 = vmatpush1.bf16.msra.mxu0 0
      %785 = vmatprep.subr.bf16.mxu0 0
      %786 = vmatpush1.bf16.msra.mxu0 0
      %787 = vmatprep.subr.bf16.mxu0 0
      %788 = vmatpush1.bf16.msra.mxu0 0
      %789 = vmatprep.subr.bf16.mxu0 0
      %790 = vmatpush1.bf16.msra.mxu0 0
      %791 = vmatprep.mubr.bf16.mxu0 %v757
      %792 = vmatmul.mubr.bf16.gmra.mrb[0].mxu0 %v652
      %v793 = vpop.f32.mrb[0].mxu0
      %v794 = vadd.f32 %v682, %v793
      %v795 = vpop.f32.mrb[0].mxu0
      %v796 = vpop.f32.mrb[0].mxu0
      %v797 = vadd.f32 %v682, %v796
      %v798 = vpop.f32.mrb[0].mxu0
      %799 = vdwg.mxu0
      %v800 = vld [vmem:[%s4] sm:$0xff]
      %v801 = vld [vmem:[%s4 + $0x8] sm:$0xff]
      %v802 = vadd.f32 %v794, %v800
      %v803 = vadd.f32 %v797, %v801
      %vm804 = vcmask 261120
      %v805 = vsel %vm804, %v802, 0.0
      %806 = vadd.xlane.f32.xlu0 %v805
      %v807 = vpop.xlane.xlu0 %806
      %v808 = vsel %vm804, %v803, 0.0
      %809 = vadd.xlane.f32.xlu0 %v808
      %v810 = vpop.xlane.xlu0 %809
      %v811 = vrcp.pop 32.0
      %v812 = vmul.f32 %v807, %v811
      %v813 = vmul.f32 %v810, %v811
      %v814 = vsub.f32 %v802, %v812
      %v815 = vsub.f32 %v803, %v813
      %v816 = vmul.f32 %v814, %v814
      %v817 = vmul.f32 %v815, %v815
      %v818 = vsel %vm804, %v816, 0.0
      %819 = vadd.xlane.f32.xlu0 %v818
      %v820 = vpop.xlane.xlu0 %819
      %v821 = vsel %vm804, %v817, 0.0
      %822 = vadd.xlane.f32.xlu0 %v821
      %v823 = vpop.xlane.xlu0 %822
      %v824 = vmul.f32 %v820, %v811
      %v825 = vmul.f32 %v823, %v811
      %v826 = vadd.f32 %v824, 1e-06
      %v827 = vadd.f32 %v825, 1e-06
      %v828 = vrsqrt.pop %v826
      %v829 = vrsqrt.pop %v827
      %v830 = vmul.f32 %v814, %v828
      %v831 = vmul.f32 %v815, %v829
      %v832 = vld [vmem:[%s2 + $0xf] sm:$0x1]
      %v833 = vlaneseq
      %v834 = vshrl.u32 %v833, 7
      %v835 = vsub.s32 0, %v834
      %v836 = vrot.slane %v832, %v835
      %v837 = vmul.f32 %v830, %v836
      %v838 = vmul.f32 %v831, %v836
      %v839 = vld [vmem:[%s2 + $0x10] sm:$0x1]
      %v840 = vlaneseq
      %v841 = vshrl.u32 %v840, 7
      %v842 = vsub.s32 0, %v841
      %v843 = vrot.slane %v839, %v842
      %v844 = vadd.f32 %v837, %v843
      %v845 = vadd.f32 %v838, %v843
      %v846 = vpack.c.bf16 %v845, %v844
      %v847 = vld [vmem:[%s6] sm:$0xf]
      %v848 = vld [vmem:[%s6 + $0x4] sm:$0xf]
      %v849 = vld [vmem:[%s6 + $0x8] sm:$0xf]
      %v850 = vld [vmem:[%s6 + $0xc] sm:$0xf]
      %v851 = vld [vmem:[%s2 + $0x1] sm:$0x1]
      %v852 = vlaneseq
      %v853 = vshrl.u32 %v852, 7
      %v854 = vsub.s32 0, %v853
      %v855 = vrot.slane %v851, %v854
      %v860 = vunpack.c.l.b16 %v847
      %v861 = vunpack.c.l.b16 %v848
      %v862 = vunpack.c.l.b16 %v849
      %v863 = vunpack.c.l.b16 %v850
      %v864 = vpack.c.b16 %v861, %v860
      %v865 = vpack.c.b16 %v863, %v862
      %v869 = vsel %vm804, %v846, 0
      %871 = vmatprep.subr.bf16.mxu0 0
      %872 = vmatpush1.bf16.msra.mxu0 %v864
      %873 = vmatprep.subr.bf16.mxu0 0
      %874 = vmatpush1.bf16.msra.mxu0 %v865
      %875 = vmatprep.subr.bf16.mxu0 0
      %876 = vmatpush1.bf16.msra.mxu0 0
      %877 = vmatprep.subr.bf16.mxu0 0
      %878 = vmatpush1.bf16.msra.mxu0 0
      %879 = vmatprep.subr.bf16.mxu0 0
      %880 = vmatpush1.bf16.msra.mxu0 0
      %881 = vmatprep.subr.bf16.mxu0 0
      %882 = vmatpush1.bf16.msra.mxu0 0
      %883 = vmatprep.subr.bf16.mxu0 0
      %884 = vmatpush1.bf16.msra.mxu0 0
      %885 = vmatprep.subr.bf16.mxu0 0
      %886 = vmatpush1.bf16.msra.mxu0 0
      %887 = vmatprep.subr.bf16.mxu0 0
      %888 = vmatpush1.bf16.msra.mxu0 0
      %889 = vmatprep.subr.bf16.mxu0 0
      %890 = vmatpush1.bf16.msra.mxu0 0
      %891 = vmatprep.subr.bf16.mxu0 0
      %892 = vmatpush1.bf16.msra.mxu0 0
      %893 = vmatprep.subr.bf16.mxu0 0
      %894 = vmatpush1.bf16.msra.mxu0 0
      %895 = vmatprep.subr.bf16.mxu0 0
      %896 = vmatpush1.bf16.msra.mxu0 0
      %897 = vmatprep.subr.bf16.mxu0 0
      %898 = vmatpush1.bf16.msra.mxu0 0
      %899 = vmatprep.subr.bf16.mxu0 0
      %900 = vmatpush1.bf16.msra.mxu0 0
      %901 = vmatprep.subr.bf16.mxu0 0
      %902 = vmatpush1.bf16.msra.mxu0 0
      %903 = vmatprep.mubr.bf16.mxu0 0
      %904 = vmatmul.mubr.bf16.gmra.mrb[0].mxu0 %v869
      %v905 = vpop.f32.mrb[0].mxu0
      %v906 = vadd.f32 %v855, %v905
      %v907 = vpop.f32.mrb[0].mxu0
      %v908 = vpop.f32.mrb[0].mxu0
      %v909 = vadd.f32 %v855, %v908
      %v910 = vpop.f32.mrb[0].mxu0
      %911 = vdwg.mxu0
      %v912 = vpack.c.bf16 %v909, %v906
      %914 = vrot.lane.b32.xlu0 %v912, 96
      %v915 = vpop.permute.xlu0 %914
      %v917 = vsel %vm804, %v912, 0
      %v920 = vsel %vm804, %v915, 0
      %922 = vmatprep.subr.bf16.mxu0 0
      %923 = vmatpush1.bf16.xpose.msra.mxu0 %v920
      %924 = vmatprep.subr.bf16.mxu0 0
      %925 = vmatpush1.bf16.xpose.msra.mxu0 0
      %926 = vmatprep.subr.bf16.mxu0 0
      %927 = vmatpush1.bf16.xpose.msra.mxu0 0
      %928 = vmatprep.subr.bf16.mxu0 0
      %929 = vmatpush1.bf16.xpose.msra.mxu0 0
      %930 = vmatprep.subr.bf16.mxu0 0
      %931 = vmatpush1.bf16.xpose.msra.mxu0 0
      %932 = vmatprep.subr.bf16.mxu0 0
      %933 = vmatpush1.bf16.xpose.msra.mxu0 0
      %934 = vmatprep.subr.bf16.mxu0 0
      %935 = vmatpush1.bf16.xpose.msra.mxu0 0
      %936 = vmatprep.subr.bf16.mxu0 0
      %937 = vmatpush1.bf16.xpose.msra.mxu0 0
      %938 = vmatprep.subr.bf16.mxu0 0
      %939 = vmatpush1.bf16.xpose.msra.mxu0 0
      %940 = vmatprep.subr.bf16.mxu0 0
      %941 = vmatpush1.bf16.xpose.msra.mxu0 0
      %942 = vmatprep.subr.bf16.mxu0 0
      %943 = vmatpush1.bf16.xpose.msra.mxu0 0
      %944 = vmatprep.subr.bf16.mxu0 0
      %945 = vmatpush1.bf16.xpose.msra.mxu0 0
      %946 = vmatprep.subr.bf16.mxu0 0
      %947 = vmatpush1.bf16.xpose.msra.mxu0 0
      %948 = vmatprep.subr.bf16.mxu0 0
      %949 = vmatpush1.bf16.xpose.msra.mxu0 0
      %950 = vmatprep.subr.bf16.mxu0 0
      %951 = vmatpush1.bf16.xpose.msra.mxu0 0
      %952 = vmatprep.subr.bf16.mxu0 0
      %953 = vmatpush1.bf16.xpose.msra.mxu0 0
      %954 = vmatprep.mubr.bf16.mxu0 0
      %955 = vmatmul.mubr.bf16.gmra.mrb[0].mxu0 %v917
      %v956 = vpop.f32.mrb[0].mxu0
      %v957 = vadd.f32 0.0, %v956
      %v958 = vpop.f32.mrb[0].mxu0
      %v959 = vpop.f32.mrb[0].mxu0
      %v960 = vadd.f32 0.0, %v959
      %v961 = vpop.f32.mrb[0].mxu0
      %962 = vdwg.mxu0
      %vm963 = vcmask 130048
      %v964 = vsel %vm963, %v957, -inf
      %965 = vmax.xlane.f32.xlu0 %v964
      %v966 = vpop.xlane.xlu0 %965
      %v967 = vsel %vm963, %v960, -inf
      %968 = vmax.xlane.f32.xlu0 %v967
      %v969 = vpop.xlane.xlu0 %968
      %v970 = vsub.f32 %v957, %v966
      %v971 = vsub.f32 %v960, %v969
      %v972 = vmul.f32 %v970, 1.442695
      %v973 = vpow.pop %v972
      %v974 = vmul.f32 %v971, 1.442695
      %v975 = vpow.pop %v974
      %v976 = vsel %vm963, %v973, 0.0
      %977 = vadd.xlane.f32.xlu0 %v976
      %v978 = vpop.xlane.xlu0 %977
      %v979 = vsel %vm963, %v975, 0.0
      %980 = vadd.xlane.f32.xlu0 %v979
      %v981 = vpop.xlane.xlu0 %980
      %v982 = vrcp.pop %v978
      %v983 = vrcp.pop %v981
      %v984 = vmul.f32 %v973, %v982
      %v985 = vmul.f32 %v975, %v983
      %v986 = vpack.c.bf16 %v985, %v984
      %987 = vrot.lane.b32.xlu0 %v912, 64
      %v988 = vpop.permute.xlu0 %987
      %v991 = vsel %vm963, %v986, 0
      %993 = vmatprep.subr.bf16.mxu0 0
      %994 = vmatpush1.bf16.msra.mxu0 %v988
      %995 = vmatprep.subr.bf16.mxu0 0
      %996 = vmatpush1.bf16.msra.mxu0 0
      %997 = vmatprep.subr.bf16.mxu0 0
      %998 = vmatpush1.bf16.msra.mxu0 0
      %999 = vmatprep.subr.bf16.mxu0 0
      %1000 = vmatpush1.bf16.msra.mxu0 0
      %1001 = vmatprep.subr.bf16.mxu0 0
      %1002 = vmatpush1.bf16.msra.mxu0 0
      %1003 = vmatprep.subr.bf16.mxu0 0
      %1004 = vmatpush1.bf16.msra.mxu0 0
      %1005 = vmatprep.subr.bf16.mxu0 0
      %1006 = vmatpush1.bf16.msra.mxu0 0
      %1007 = vmatprep.subr.bf16.mxu0 0
      %1008 = vmatpush1.bf16.msra.mxu0 0
      %1009 = vmatprep.subr.bf16.mxu0 0
      %1010 = vmatpush1.bf16.msra.mxu0 0
      %1011 = vmatprep.subr.bf16.mxu0 0
      %1012 = vmatpush1.bf16.msra.mxu0 0
      %1013 = vmatprep.subr.bf16.mxu0 0
      %1014 = vmatpush1.bf16.msra.mxu0 0
      %1015 = vmatprep.subr.bf16.mxu0 0
      %1016 = vmatpush1.bf16.msra.mxu0 0
      %1017 = vmatprep.subr.bf16.mxu0 0
      %1018 = vmatpush1.bf16.msra.mxu0 0
      %1019 = vmatprep.subr.bf16.mxu0 0
      %1020 = vmatpush1.bf16.msra.mxu0 0
      %1021 = vmatprep.subr.bf16.mxu0 0
      %1022 = vmatpush1.bf16.msra.mxu0 0
      %1023 = vmatprep.subr.bf16.mxu0 0
      %1024 = vmatpush1.bf16.msra.mxu0 0
      %1025 = vmatprep.mubr.bf16.mxu0 0
      %1026 = vmatmul.mubr.bf16.gmra.mrb[0].mxu0 %v991
      %v1027 = vpop.f32.mrb[0].mxu0
      %v1028 = vadd.f32 0.0, %v1027
      %v1029 = vpop.f32.mrb[0].mxu0
      %v1030 = vpop.f32.mrb[0].mxu0
      %v1031 = vadd.f32 0.0, %v1030
      %v1032 = vpop.f32.mrb[0].mxu0
      %1033 = vdwg.mxu0
      %v1034 = vpack.c.bf16 %v1031, %v1028
      %v1035 = vld [vmem:[%s7] sm:$0xf]
      %v1036 = vld [vmem:[%s7 + $0x4] sm:$0xf]
      %v1037 = vld [vmem:[%s7 + $0x8] sm:$0xf]
      %v1038 = vld [vmem:[%s7 + $0xc] sm:$0xf]
      %v1039 = vld [vmem:[%s2 + $0x2] sm:$0x1]
      %v1040 = vlaneseq
      %v1041 = vshrl.u32 %v1040, 7
      %v1042 = vsub.s32 0, %v1041
      %v1043 = vrot.slane %v1039, %v1042
      %v1048 = vunpack.c.l.b16 %v1035
      %v1049 = vunpack.c.l.b16 %v1036
      %v1050 = vunpack.c.l.b16 %v1037
      %v1051 = vunpack.c.l.b16 %v1038
      %v1052 = vpack.c.b16 %v1049, %v1048
      %v1053 = vpack.c.b16 %v1051, %v1050
      %v1057 = vsel %vm804, %v1034, 0
      %1059 = vmatprep.subr.bf16.mxu0 0
      %1060 = vmatpush1.bf16.msra.mxu0 %v1052
      %1061 = vmatprep.subr.bf16.mxu0 0
      %1062 = vmatpush1.bf16.msra.mxu0 %v1053
      %1063 = vmatprep.subr.bf16.mxu0 0
      %1064 = vmatpush1.bf16.msra.mxu0 0
      %1065 = vmatprep.subr.bf16.mxu0 0
      %1066 = vmatpush1.bf16.msra.mxu0 0
      %1067 = vmatprep.subr.bf16.mxu0 0
      %1068 = vmatpush1.bf16.msra.mxu0 0
      %1069 = vmatprep.subr.bf16.mxu0 0
      %1070 = vmatpush1.bf16.msra.mxu0 0
      %1071 = vmatprep.subr.bf16.mxu0 0
      %1072 = vmatpush1.bf16.msra.mxu0 0
      %1073 = vmatprep.subr.bf16.mxu0 0
      %1074 = vmatpush1.bf16.msra.mxu0 0
      %1075 = vmatprep.subr.bf16.mxu0 0
      %1076 = vmatpush1.bf16.msra.mxu0 0
      %1077 = vmatprep.subr.bf16.mxu0 0
      %1078 = vmatpush1.bf16.msra.mxu0 0
      %1079 = vmatprep.subr.bf16.mxu0 0
      %1080 = vmatpush1.bf16.msra.mxu0 0
      %1081 = vmatprep.subr.bf16.mxu0 0
      %1082 = vmatpush1.bf16.msra.mxu0 0
      %1083 = vmatprep.subr.bf16.mxu0 0
      %1084 = vmatpush1.bf16.msra.mxu0 0
      %1085 = vmatprep.subr.bf16.mxu0 0
      %1086 = vmatpush1.bf16.msra.mxu0 0
      %1087 = vmatprep.subr.bf16.mxu0 0
      %1088 = vmatpush1.bf16.msra.mxu0 0
      %1089 = vmatprep.subr.bf16.mxu0 0
      %1090 = vmatpush1.bf16.msra.mxu0 0
      %1091 = vmatprep.mubr.bf16.mxu0 0
      %1092 = vmatmul.mubr.bf16.gmra.mrb[0].mxu0 %v1057
      %v1093 = vpop.f32.mrb[0].mxu0
      %v1094 = vadd.f32 %v1043, %v1093
      %v1095 = vpop.f32.mrb[0].mxu0
      %v1096 = vpop.f32.mrb[0].mxu0
      %v1097 = vadd.f32 %v1043, %v1096
      %v1098 = vpop.f32.mrb[0].mxu0
      %1099 = vdwg.mxu0
      %v1100 = vadd.f32 %v802, %v1094
      %v1101 = vadd.f32 %v803, %v1097
      %v1102 = vsel %vm804, %v1100, 0.0
      %1103 = vadd.xlane.f32.xlu0 %v1102
      %v1104 = vpop.xlane.xlu0 %1103
      %v1105 = vsel %vm804, %v1101, 0.0
      %1106 = vadd.xlane.f32.xlu0 %v1105
      %v1107 = vpop.xlane.xlu0 %1106
      %v1108 = vmul.f32 %v1104, %v811
      %v1109 = vmul.f32 %v1107, %v811
      %v1110 = vsub.f32 %v1100, %v1108
      %v1111 = vsub.f32 %v1101, %v1109
      %v1112 = vmul.f32 %v1110, %v1110
      %v1113 = vmul.f32 %v1111, %v1111
      %v1114 = vsel %vm804, %v1112, 0.0
      %1115 = vadd.xlane.f32.xlu0 %v1114
      %v1116 = vpop.xlane.xlu0 %1115
      %v1117 = vsel %vm804, %v1113, 0.0
      %1118 = vadd.xlane.f32.xlu0 %v1117
      %v1119 = vpop.xlane.xlu0 %1118
      %v1120 = vmul.f32 %v1116, %v811
      %v1121 = vmul.f32 %v1119, %v811
      %v1122 = vadd.f32 %v1120, 1e-06
      %v1123 = vadd.f32 %v1121, 1e-06
      %v1124 = vrsqrt.pop %v1122
      %v1125 = vrsqrt.pop %v1123
      %v1126 = vmul.f32 %v1110, %v1124
      %v1127 = vmul.f32 %v1111, %v1125
      %v1128 = vld [vmem:[%s2 + $0x11] sm:$0x1]
      %v1129 = vlaneseq
      %v1130 = vshrl.u32 %v1129, 7
      %v1131 = vsub.s32 0, %v1130
      %v1132 = vrot.slane %v1128, %v1131
      %v1133 = vmul.f32 %v1126, %v1132
      %v1134 = vmul.f32 %v1127, %v1132
      %v1135 = vld [vmem:[%s2 + $0x12] sm:$0x1]
      %v1136 = vlaneseq
      %v1137 = vshrl.u32 %v1136, 7
      %v1138 = vsub.s32 0, %v1137
      %v1139 = vrot.slane %v1135, %v1138
      %v1140 = vadd.f32 %v1133, %v1139
      %v1141 = vadd.f32 %v1134, %v1139
      %v1142 = vpack.c.bf16 %v1141, %v1140
      %v1143 = vld [vmem:[%s8] sm:$0xf]
      %v1144 = vld [vmem:[%s8 + $0x4] sm:$0xf]
      %v1145 = vld [vmem:[%s8 + $0x8] sm:$0xf]
      %v1146 = vld [vmem:[%s8 + $0xc] sm:$0xf]
      %v1147 = vld [vmem:[%s2 + $0x3] sm:$0x1]
      %v1148 = vlaneseq
      %v1149 = vshrl.u32 %v1148, 7
      %v1150 = vsub.s32 0, %v1149
      %v1151 = vrot.slane %v1147, %v1150
      %v1156 = vunpack.c.l.b16 %v1143
      %v1157 = vunpack.c.l.b16 %v1144
      %v1158 = vunpack.c.l.b16 %v1145
      %v1159 = vunpack.c.l.b16 %v1146
      %v1160 = vpack.c.b16 %v1157, %v1156
      %v1161 = vpack.c.b16 %v1159, %v1158
      %v1165 = vsel %vm804, %v1142, 0
      %1167 = vmatprep.subr.bf16.mxu0 0
      %1168 = vmatpush1.bf16.msra.mxu0 %v1160
      %1169 = vmatprep.subr.bf16.mxu0 0
      %1170 = vmatpush1.bf16.msra.mxu0 %v1161
      %1171 = vmatprep.subr.bf16.mxu0 0
      %1172 = vmatpush1.bf16.msra.mxu0 0
      %1173 = vmatprep.subr.bf16.mxu0 0
      %1174 = vmatpush1.bf16.msra.mxu0 0
      %1175 = vmatprep.subr.bf16.mxu0 0
      %1176 = vmatpush1.bf16.msra.mxu0 0
      %1177 = vmatprep.subr.bf16.mxu0 0
      %1178 = vmatpush1.bf16.msra.mxu0 0
      %1179 = vmatprep.subr.bf16.mxu0 0
      %1180 = vmatpush1.bf16.msra.mxu0 0
      %1181 = vmatprep.subr.bf16.mxu0 0
      %1182 = vmatpush1.bf16.msra.mxu0 0
      %1183 = vmatprep.subr.bf16.mxu0 0
      %1184 = vmatpush1.bf16.msra.mxu0 0
      %1185 = vmatprep.subr.bf16.mxu0 0
      %1186 = vmatpush1.bf16.msra.mxu0 0
      %1187 = vmatprep.subr.bf16.mxu0 0
      %1188 = vmatpush1.bf16.msra.mxu0 0
      %1189 = vmatprep.subr.bf16.mxu0 0
      %1190 = vmatpush1.bf16.msra.mxu0 0
      %1191 = vmatprep.subr.bf16.mxu0 0
      %1192 = vmatpush1.bf16.msra.mxu0 0
      %1193 = vmatprep.subr.bf16.mxu0 0
      %1194 = vmatpush1.bf16.msra.mxu0 0
      %1195 = vmatprep.subr.bf16.mxu0 0
      %1196 = vmatpush1.bf16.msra.mxu0 0
      %1197 = vmatprep.subr.bf16.mxu0 0
      %1198 = vmatpush1.bf16.msra.mxu0 0
      %1199 = vmatprep.mubr.bf16.mxu0 0
      %1200 = vmatmul.mubr.bf16.gmra.mrb[0].mxu0 %v1165
      %v1201 = vpop.f32.mrb[0].mxu0
      %v1202 = vadd.f32 %v1151, %v1201
      %v1203 = vpop.f32.mrb[0].mxu0
      %v1204 = vpop.f32.mrb[0].mxu0
      %v1205 = vadd.f32 %v1151, %v1204
      %v1206 = vpop.f32.mrb[0].mxu0
      %1207 = vdwg.mxu0
      %v1208 = vmul.f32 %v1202, %v1202
      %v1209 = vmul.f32 %v1205, %v1205
      %v1210 = vmul.f32 %v1202, %v1208
      %v1211 = vmul.f32 %v1205, %v1209
      %v1212 = vmul.f32 %v1210, 0.044715
      %v1213 = vmul.f32 %v1211, 0.044715
      %v1214 = vadd.f32 %v1202, %v1212
      %v1215 = vadd.f32 %v1205, %v1213
      %v1216 = vmul.f32 %v1214, 0.7978846
      %v1217 = vmul.f32 %v1215, 0.7978846
      %v1218 = vtanh.pop %v1216
      %v1219 = vtanh.pop %v1217
      %v1220 = vadd.f32 %v1218, 1.0
      %v1221 = vadd.f32 %v1219, 1.0
      %v1222 = vmul.f32 %v1220, 0.5
      %v1223 = vmul.f32 %v1221, 0.5
      %v1224 = vmul.f32 %v1202, %v1222
      %v1225 = vmul.f32 %v1205, %v1223
      %v1226 = vpack.c.bf16 %v1225, %v1224
      %v1227 = vld [vmem:[%s9] sm:$0xf]
      %v1228 = vld [vmem:[%s9 + $0x4] sm:$0xf]
      %v1229 = vld [vmem:[%s9 + $0x8] sm:$0xf]
      %v1230 = vld [vmem:[%s9 + $0xc] sm:$0xf]
      %v1231 = vld [vmem:[%s9 + $0x10] sm:$0xf]
      %v1232 = vld [vmem:[%s9 + $0x14] sm:$0xf]
      %v1233 = vld [vmem:[%s9 + $0x18] sm:$0xf]
      %v1234 = vld [vmem:[%s9 + $0x1c] sm:$0xf]
      %v1235 = vld [vmem:[%s2 + $0x4] sm:$0x1]
      %v1236 = vlaneseq
      %v1237 = vshrl.u32 %v1236, 7
      %v1238 = vsub.s32 0, %v1237
      %v1239 = vrot.slane %v1235, %v1238
      %v1248 = vunpack.c.l.b16 %v1227
      %v1249 = vunpack.c.l.b16 %v1228
      %v1250 = vunpack.c.l.b16 %v1229
      %v1251 = vunpack.c.l.b16 %v1230
      %v1252 = vunpack.c.l.b16 %v1231
      %v1253 = vunpack.c.l.b16 %v1232
      %v1254 = vunpack.c.l.b16 %v1233
      %v1255 = vunpack.c.l.b16 %v1234
      %v1256 = vpack.c.b16 %v1249, %v1248
      %v1257 = vpack.c.b16 %v1251, %v1250
      %v1258 = vpack.c.b16 %v1253, %v1252
      %v1259 = vpack.c.b16 %v1255, %v1254
      %v1265 = vsel %vm755, %v1226, 0
      %1267 = vmatprep.subr.bf16.mxu0 0
      %1268 = vmatpush1.bf16.msra.mxu0 %v1256
      %1269 = vmatprep.subr.bf16.mxu0 0
      %1270 = vmatpush1.bf16.msra.mxu0 %v1257
      %1271 = vmatprep.subr.bf16.mxu0 0
      %1272 = vmatpush1.bf16.msra.mxu0 %v1258
      %1273 = vmatprep.subr.bf16.mxu0 0
      %1274 = vmatpush1.bf16.msra.mxu0 %v1259
      %1275 = vmatprep.subr.bf16.mxu0 0
      %1276 = vmatpush1.bf16.msra.mxu0 0
      %1277 = vmatprep.subr.bf16.mxu0 0
      %1278 = vmatpush1.bf16.msra.mxu0 0
      %1279 = vmatprep.subr.bf16.mxu0 0
      %1280 = vmatpush1.bf16.msra.mxu0 0
      %1281 = vmatprep.subr.bf16.mxu0 0
      %1282 = vmatpush1.bf16.msra.mxu0 0
      %1283 = vmatprep.subr.bf16.mxu0 0
      %1284 = vmatpush1.bf16.msra.mxu0 0
      %1285 = vmatprep.subr.bf16.mxu0 0
      %1286 = vmatpush1.bf16.msra.mxu0 0
      %1287 = vmatprep.subr.bf16.mxu0 0
      %1288 = vmatpush1.bf16.msra.mxu0 0
      %1289 = vmatprep.subr.bf16.mxu0 0
      %1290 = vmatpush1.bf16.msra.mxu0 0
      %1291 = vmatprep.subr.bf16.mxu0 0
      %1292 = vmatpush1.bf16.msra.mxu0 0
      %1293 = vmatprep.subr.bf16.mxu0 0
      %1294 = vmatpush1.bf16.msra.mxu0 0
      %1295 = vmatprep.subr.bf16.mxu0 0
      %1296 = vmatpush1.bf16.msra.mxu0 0
      %1297 = vmatprep.subr.bf16.mxu0 0
      %1298 = vmatpush1.bf16.msra.mxu0 0
      %1299 = vmatprep.mubr.bf16.mxu0 0
      %1300 = vmatmul.mubr.bf16.gmra.mrb[0].mxu0 %v1265
      %v1301 = vpop.f32.mrb[0].mxu0
      %v1302 = vadd.f32 %v1239, %v1301
      %v1303 = vpop.f32.mrb[0].mxu0
      %v1304 = vpop.f32.mrb[0].mxu0
      %v1305 = vadd.f32 %v1239, %v1304
      %v1306 = vpop.f32.mrb[0].mxu0
      %1307 = vdwg.mxu0
      %v1308 = vadd.f32 %v1100, %v1302
      %v1309 = vadd.f32 %v1101, %v1305
      %v1310 = vld [vmem:[%s2 + $0xe] sm:$0x1]
      %v1311 = vlaneseq
      %v1312 = vshrl.u32 %v1311, 7
      %v1313 = vsub.s32 0, %v1312
      %v1314 = vrot.slane %v1310, %v1313
      %v1315 = vadd.f32 %v1308, %v1314
      %v1316 = vadd.f32 %v1309, %v1314
      %v1317 = vld [vmem:[%s641] sm:$0x7f]
      %v1318 = vpack.c.bf16 %v1317, %v1317
      %v1319 = vld [vmem:[%s10] sm:$0xf]
      %v1320 = vld [vmem:[%s10 + $0x4] sm:$0xf]
      %v1321 = vld [vmem:[%s10 + $0x8] sm:$0xf]
      %v1322 = vld [vmem:[%s10 + $0xc] sm:$0xf]
      %v1323 = vld [vmem:[%s2 + $0x5] sm:$0x1]
      %v1324 = vlaneseq
      %v1325 = vshrl.u32 %v1324, 7
      %v1326 = vsub.s32 0, %v1325
      %v1327 = vrot.slane %v1323, %v1326
      %v1332 = vunpack.c.l.b16 %v1319
      %v1333 = vunpack.c.l.b16 %v1320
      %v1334 = vunpack.c.l.b16 %v1321
      %v1335 = vunpack.c.l.b16 %v1322
      %v1336 = vpack.c.b16 %v1333, %v1332
      %v1337 = vpack.c.b16 %v1335, %v1334
      %v1341 = vsel %vm804, %v1318, 0
      %1343 = vmatprep.subr.bf16.mxu0 0
      %1344 = vmatpush1.bf16.msra.mxu0 %v1336
      %1345 = vmatprep.subr.bf16.mxu0 0
      %1346 = vmatpush1.bf16.msra.mxu0 %v1337
      %1347 = vmatprep.subr.bf16.mxu0 0
      %1348 = vmatpush1.bf16.msra.mxu0 0
      %1349 = vmatprep.subr.bf16.mxu0 0
      %1350 = vmatpush1.bf16.msra.mxu0 0
      %1351 = vmatprep.subr.bf16.mxu0 0
      %1352 = vmatpush1.bf16.msra.mxu0 0
      %1353 = vmatprep.subr.bf16.mxu0 0
      %1354 = vmatpush1.bf16.msra.mxu0 0
      %1355 = vmatprep.subr.bf16.mxu0 0
      %1356 = vmatpush1.bf16.msra.mxu0 0
      %1357 = vmatprep.subr.bf16.mxu0 0
      %1358 = vmatpush1.bf16.msra.mxu0 0
      %1359 = vmatprep.subr.bf16.mxu0 0
      %1360 = vmatpush1.bf16.msra.mxu0 0
      %1361 = vmatprep.subr.bf16.mxu0 0
      %1362 = vmatpush1.bf16.msra.mxu0 0
      %1363 = vmatprep.subr.bf16.mxu0 0
      %1364 = vmatpush1.bf16.msra.mxu0 0
      %1365 = vmatprep.subr.bf16.mxu0 0
      %1366 = vmatpush1.bf16.msra.mxu0 0
      %1367 = vmatprep.subr.bf16.mxu0 0
      %1368 = vmatpush1.bf16.msra.mxu0 0
      %1369 = vmatprep.subr.bf16.mxu0 0
      %1370 = vmatpush1.bf16.msra.mxu0 0
      %1371 = vmatprep.subr.bf16.mxu0 0
      %1372 = vmatpush1.bf16.msra.mxu0 0
      %1373 = vmatprep.subr.bf16.mxu0 0
      %1374 = vmatpush1.bf16.msra.mxu0 0
      %1375 = vmatprep.mubr.bf16.mxu0 0
      %1376 = vmatmul.mubr.bf16.gmra.mrb[0].mxu0 %v1341
      %v1377 = vpop.f32.mrb[0].mxu0
      %v1378 = vadd.f32 %v1327, %v1377
      %v1379 = vpop.f32.mrb[0].mxu0
      %v1380 = vpop.f32.mrb[0].mxu0
      %v1381 = vpop.f32.mrb[0].mxu0
      %1382 = vdwg.mxu0
      %v1383 = vpack.c.bf16 %v1316, %v1315
      %v1384 = vld [vmem:[%s11] sm:$0xf]
      %v1385 = vld [vmem:[%s11 + $0x4] sm:$0xf]
      %v1386 = vld [vmem:[%s11 + $0x8] sm:$0xf]
      %v1387 = vld [vmem:[%s11 + $0xc] sm:$0xf]
      %v1388 = vld [vmem:[%s2 + $0x6] sm:$0x1]
      %v1389 = vlaneseq
      %v1390 = vshrl.u32 %v1389, 7
      %v1391 = vsub.s32 0, %v1390
      %v1392 = vrot.slane %v1388, %v1391
      %v1397 = vunpack.c.l.b16 %v1384
      %v1398 = vunpack.c.l.b16 %v1385
      %v1399 = vunpack.c.l.b16 %v1386
      %v1400 = vunpack.c.l.b16 %v1387
      %v1401 = vpack.c.b16 %v1398, %v1397
      %v1402 = vpack.c.b16 %v1400, %v1399
      %v1406 = vsel %vm804, %v1383, 0
      %1408 = vmatprep.subr.bf16.mxu0 0
      %1409 = vmatpush1.bf16.msra.mxu0 %v1401
      %1410 = vmatprep.subr.bf16.mxu0 0
      %1411 = vmatpush1.bf16.msra.mxu0 %v1402
      %1412 = vmatprep.subr.bf16.mxu0 0
      %1413 = vmatpush1.bf16.msra.mxu0 0
      %1414 = vmatprep.subr.bf16.mxu0 0
      %1415 = vmatpush1.bf16.msra.mxu0 0
      %1416 = vmatprep.subr.bf16.mxu0 0
      %1417 = vmatpush1.bf16.msra.mxu0 0
      %1418 = vmatprep.subr.bf16.mxu0 0
      %1419 = vmatpush1.bf16.msra.mxu0 0
      %1420 = vmatprep.subr.bf16.mxu0 0
      %1421 = vmatpush1.bf16.msra.mxu0 0
      %1422 = vmatprep.subr.bf16.mxu0 0
      %1423 = vmatpush1.bf16.msra.mxu0 0
      %1424 = vmatprep.subr.bf16.mxu0 0
      %1425 = vmatpush1.bf16.msra.mxu0 0
      %1426 = vmatprep.subr.bf16.mxu0 0
      %1427 = vmatpush1.bf16.msra.mxu0 0
      %1428 = vmatprep.subr.bf16.mxu0 0
      %1429 = vmatpush1.bf16.msra.mxu0 0
      %1430 = vmatprep.subr.bf16.mxu0 0
      %1431 = vmatpush1.bf16.msra.mxu0 0
      %1432 = vmatprep.subr.bf16.mxu0 0
      %1433 = vmatpush1.bf16.msra.mxu0 0
      %1434 = vmatprep.subr.bf16.mxu0 0
      %1435 = vmatpush1.bf16.msra.mxu0 0
      %1436 = vmatprep.subr.bf16.mxu0 0
      %1437 = vmatpush1.bf16.msra.mxu0 0
      %1438 = vmatprep.subr.bf16.mxu0 0
      %1439 = vmatpush1.bf16.msra.mxu0 0
      %1440 = vmatprep.mubr.bf16.mxu0 0
      %1441 = vmatmul.mubr.bf16.gmra.mrb[0].mxu0 %v1406
      %v1442 = vpop.f32.mrb[0].mxu0
      %v1443 = vadd.f32 %v1392, %v1442
      %v1444 = vpop.f32.mrb[0].mxu0
      %v1445 = vpop.f32.mrb[0].mxu0
      %v1446 = vadd.f32 %v1392, %v1445
      %v1447 = vpop.f32.mrb[0].mxu0
      %1448 = vdwg.mxu0
      %v1449 = vld [vmem:[%s5] sm:$0xff]
      %v1450 = vld [vmem:[%s5 + $0x8] sm:$0xff]
      %v1451 = vadd.f32 %v1443, %v1449
      %v1452 = vadd.f32 %v1446, %v1450
      %v1453 = vpack.c.bf16 %v1378, %v1378
      %v1454 = vpack.c.bf16 %v1452, %v1451
      %v1456 = vsel %vm804, %v1453, 0
      %v1459 = vsel %vm804, %v1454, 0
      %1461 = vmatprep.subr.bf16.mxu0 0
      %1462 = vmatpush1.bf16.xpose.msra.mxu0 %v1459
      %1463 = vmatprep.subr.bf16.mxu0 0
      %1464 = vmatpush1.bf16.xpose.msra.mxu0 0
      %1465 = vmatprep.subr.bf16.mxu0 0
      %1466 = vmatpush1.bf16.xpose.msra.mxu0 0
      %1467 = vmatprep.subr.bf16.mxu0 0
      %1468 = vmatpush1.bf16.xpose.msra.mxu0 0
      %1469 = vmatprep.subr.bf16.mxu0 0
      %1470 = vmatpush1.bf16.xpose.msra.mxu0 0
      %1471 = vmatprep.subr.bf16.mxu0 0
      %1472 = vmatpush1.bf16.xpose.msra.mxu0 0
      %1473 = vmatprep.subr.bf16.mxu0 0
      %1474 = vmatpush1.bf16.xpose.msra.mxu0 0
      %1475 = vmatprep.subr.bf16.mxu0 0
      %1476 = vmatpush1.bf16.xpose.msra.mxu0 0
      %1477 = vmatprep.subr.bf16.mxu0 0
      %1478 = vmatpush1.bf16.xpose.msra.mxu0 0
      %1479 = vmatprep.subr.bf16.mxu0 0
      %1480 = vmatpush1.bf16.xpose.msra.mxu0 0
      %1481 = vmatprep.subr.bf16.mxu0 0
      %1482 = vmatpush1.bf16.xpose.msra.mxu0 0
      %1483 = vmatprep.subr.bf16.mxu0 0
      %1484 = vmatpush1.bf16.xpose.msra.mxu0 0
      %1485 = vmatprep.subr.bf16.mxu0 0
      %1486 = vmatpush1.bf16.xpose.msra.mxu0 0
      %1487 = vmatprep.subr.bf16.mxu0 0
      %1488 = vmatpush1.bf16.xpose.msra.mxu0 0
      %1489 = vmatprep.subr.bf16.mxu0 0
      %1490 = vmatpush1.bf16.xpose.msra.mxu0 0
      %1491 = vmatprep.subr.bf16.mxu0 0
      %1492 = vmatpush1.bf16.xpose.msra.mxu0 0
      %1493 = vmatprep.mubr.bf16.mxu0 0
      %1494 = vmatmul.mubr.bf16.gmra.mrb[0].mxu0 %v1456
      %v1495 = vpop.f32.mrb[0].mxu0
      %v1496 = vadd.f32 0.0, %v1495
      %v1497 = vpop.f32.mrb[0].mxu0
      %v1498 = vpop.f32.mrb[0].mxu0
      %v1499 = vpop.f32.mrb[0].mxu0
      %1500 = vdwg.mxu0
      %vm1501 = vcmask 129024
      %v1502 = vsel %vm1501, %v1496, -inf
      %1503 = vmax.xlane.f32.xlu0 %v1502
      %v1504 = vpop.xlane.xlu0 %1503
      %v1505 = vsub.f32 %v1496, %v1504
      %v1506 = vmul.f32 %v1505, 1.442695
      %v1507 = vpow.pop %v1506
      %v1508 = vsel %vm1501, %v1507, 0.0
      %1509 = vadd.xlane.f32.xlu0 %v1508
      %v1510 = vpop.xlane.xlu0 %1509
      %v1511 = vrcp.pop %v1510
      %v1512 = vmul.f32 %v1507, %v1511
      %v1513 = vpack.c.bf16 %v1512, %v1512
      %v1514 = vpack.c.bf16 %v1446, %v1443
      %1516 = vrot.lane.b32.xlu0 %v1514, 96
      %v1517 = vpop.permute.xlu0 %1516
      %v1520 = vsel %vm963, %v1513, 0
      %1522 = vmatprep.subr.bf16.mxu0 0
      %1523 = vmatpush1.bf16.msra.mxu0 %v1517
      %1524 = vmatprep.subr.bf16.mxu0 0
      %1525 = vmatpush1.bf16.msra.mxu0 0
      %1526 = vmatprep.subr.bf16.mxu0 0
      %1527 = vmatpush1.bf16.msra.mxu0 0
      %1528 = vmatprep.subr.bf16.mxu0 0
      %1529 = vmatpush1.bf16.msra.mxu0 0
      %1530 = vmatprep.subr.bf16.mxu0 0
      %1531 = vmatpush1.bf16.msra.mxu0 0
      %1532 = vmatprep.subr.bf16.mxu0 0
      %1533 = vmatpush1.bf16.msra.mxu0 0
      %1534 = vmatprep.subr.bf16.mxu0 0
      %1535 = vmatpush1.bf16.msra.mxu0 0
      %1536 = vmatprep.subr.bf16.mxu0 0
      %1537 = vmatpush1.bf16.msra.mxu0 0
      %1538 = vmatprep.subr.bf16.mxu0 0
      %1539 = vmatpush1.bf16.msra.mxu0 0
      %1540 = vmatprep.subr.bf16.mxu0 0
      %1541 = vmatpush1.bf16.msra.mxu0 0
      %1542 = vmatprep.subr.bf16.mxu0 0
      %1543 = vmatpush1.bf16.msra.mxu0 0
      %1544 = vmatprep.subr.bf16.mxu0 0
      %1545 = vmatpush1.bf16.msra.mxu0 0
      %1546 = vmatprep.subr.bf16.mxu0 0
      %1547 = vmatpush1.bf16.msra.mxu0 0
      %1548 = vmatprep.subr.bf16.mxu0 0
      %1549 = vmatpush1.bf16.msra.mxu0 0
      %1550 = vmatprep.subr.bf16.mxu0 0
      %1551 = vmatpush1.bf16.msra.mxu0 0
      %1552 = vmatprep.subr.bf16.mxu0 0
      %1553 = vmatpush1.bf16.msra.mxu0 0
      %1554 = vmatprep.mubr.bf16.mxu0 0
      %1555 = vmatmul.mubr.bf16.gmra.mrb[0].mxu0 %v1520
      %v1556 = vpop.f32.mrb[0].mxu0
      %v1557 = vadd.f32 0.0, %v1556
      %v1558 = vpop.f32.mrb[0].mxu0
      %v1559 = vpop.f32.mrb[0].mxu0
      %v1560 = vpop.f32.mrb[0].mxu0
      %1561 = vdwg.mxu0
      %v1562 = vpack.c.bf16 %v1557, %v1557
      %v1563 = vld [vmem:[%s12] sm:$0xf]
      %v1564 = vld [vmem:[%s12 + $0x4] sm:$0xf]
      %v1565 = vld [vmem:[%s12 + $0x8] sm:$0xf]
      %v1566 = vld [vmem:[%s12 + $0xc] sm:$0xf]
      %v1567 = vld [vmem:[%s2 + $0x7] sm:$0x1]
      %v1568 = vlaneseq
      %v1569 = vshrl.u32 %v1568, 7
      %v1570 = vsub.s32 0, %v1569
      %v1571 = vrot.slane %v1567, %v1570
      %v1576 = vunpack.c.l.b16 %v1563
      %v1577 = vunpack.c.l.b16 %v1564
      %v1578 = vunpack.c.l.b16 %v1565
      %v1579 = vunpack.c.l.b16 %v1566
      %v1580 = vpack.c.b16 %v1577, %v1576
      %v1581 = vpack.c.b16 %v1579, %v1578
      %v1585 = vsel %vm804, %v1562, 0
      %1587 = vmatprep.subr.bf16.mxu0 0
      %1588 = vmatpush1.bf16.msra.mxu0 %v1580
      %1589 = vmatprep.subr.bf16.mxu0 0
      %1590 = vmatpush1.bf16.msra.mxu0 %v1581
      %1591 = vmatprep.subr.bf16.mxu0 0
      %1592 = vmatpush1.bf16.msra.mxu0 0
      %1593 = vmatprep.subr.bf16.mxu0 0
      %1594 = vmatpush1.bf16.msra.mxu0 0
      %1595 = vmatprep.subr.bf16.mxu0 0
      %1596 = vmatpush1.bf16.msra.mxu0 0
      %1597 = vmatprep.subr.bf16.mxu0 0
      %1598 = vmatpush1.bf16.msra.mxu0 0
      %1599 = vmatprep.subr.bf16.mxu0 0
      %1600 = vmatpush1.bf16.msra.mxu0 0
      %1601 = vmatprep.subr.bf16.mxu0 0
      %1602 = vmatpush1.bf16.msra.mxu0 0
      %1603 = vmatprep.subr.bf16.mxu0 0
      %1604 = vmatpush1.bf16.msra.mxu0 0
      %1605 = vmatprep.subr.bf16.mxu0 0
      %1606 = vmatpush1.bf16.msra.mxu0 0
      %1607 = vmatprep.subr.bf16.mxu0 0
      %1608 = vmatpush1.bf16.msra.mxu0 0
      %1609 = vmatprep.subr.bf16.mxu0 0
      %1610 = vmatpush1.bf16.msra.mxu0 0
      %1611 = vmatprep.subr.bf16.mxu0 0
      %1612 = vmatpush1.bf16.msra.mxu0 0
      %1613 = vmatprep.subr.bf16.mxu0 0
      %1614 = vmatpush1.bf16.msra.mxu0 0
      %1615 = vmatprep.subr.bf16.mxu0 0
      %1616 = vmatpush1.bf16.msra.mxu0 0
      %1617 = vmatprep.subr.bf16.mxu0 0
      %1618 = vmatpush1.bf16.msra.mxu0 0
      %1619 = vmatprep.mubr.bf16.mxu0 0
      %1620 = vmatmul.mubr.bf16.gmra.mrb[0].mxu0 %v1585
      %v1621 = vpop.f32.mrb[0].mxu0
      %v1622 = vadd.f32 %v1571, %v1621
      %v1623 = vpop.f32.mrb[0].mxu0
      %v1624 = vpop.f32.mrb[0].mxu0
      %v1625 = vpop.f32.mrb[0].mxu0
      %1626 = vdwg.mxu0
      %v1627 = vadd.f32 %v1317, %v1622
      %vm1628 = vcmask 260096
      %v1629 = vsel %vm1628, %v1627, 0.0
      %1630 = vadd.xlane.f32.xlu0 %v1629
      %v1631 = vpop.xlane.xlu0 %1630
      %v1632 = vmul.f32 %v1631, %v811
      %v1633 = vsub.f32 %v1627, %v1632
      %v1634 = vmul.f32 %v1633, %v1633
      %v1635 = vsel %vm1628, %v1634, 0.0
      %1636 = vadd.xlane.f32.xlu0 %v1635
      %v1637 = vpop.xlane.xlu0 %1636
      %v1638 = vmul.f32 %v1637, %v811
      %v1639 = vadd.f32 %v1638, 1e-06
      %v1640 = vrsqrt.pop %v1639
      %v1641 = vmul.f32 %v1633, %v1640
      %v1642 = vld [vmem:[%s2 + $0x13] sm:$0x1]
      %v1643 = vlaneseq
      %v1644 = vshrl.u32 %v1643, 7
      %v1645 = vsub.s32 0, %v1644
      %v1646 = vrot.slane %v1642, %v1645
      %v1647 = vmul.f32 %v1641, %v1646
      %v1648 = vld [vmem:[%s2 + $0x14] sm:$0x1]
      %v1649 = vlaneseq
      %v1650 = vshrl.u32 %v1649, 7
      %v1651 = vsub.s32 0, %v1650
      %v1652 = vrot.slane %v1648, %v1651
      %v1653 = vadd.f32 %v1647, %v1652
      %v1654 = vpack.c.bf16 %v1653, %v1653
      %v1655 = vld [vmem:[%s13] sm:$0xf]
      %v1656 = vld [vmem:[%s13 + $0x4] sm:$0xf]
      %v1657 = vld [vmem:[%s13 + $0x8] sm:$0xf]
      %v1658 = vld [vmem:[%s13 + $0xc] sm:$0xf]
      %v1659 = vld [vmem:[%s2 + $0x8] sm:$0x1]
      %v1660 = vlaneseq
      %v1661 = vshrl.u32 %v1660, 7
      %v1662 = vsub.s32 0, %v1661
      %v1663 = vrot.slane %v1659, %v1662
      %v1668 = vunpack.c.l.b16 %v1655
      %v1669 = vunpack.c.l.b16 %v1656
      %v1670 = vunpack.c.l.b16 %v1657
      %v1671 = vunpack.c.l.b16 %v1658
      %v1672 = vpack.c.b16 %v1669, %v1668
      %v1673 = vpack.c.b16 %v1671, %v1670
      %v1677 = vsel %vm804, %v1654, 0
      %1679 = vmatprep.subr.bf16.mxu0 0
      %1680 = vmatpush1.bf16.msra.mxu0 %v1672
      %1681 = vmatprep.subr.bf16.mxu0 0
      %1682 = vmatpush1.bf16.msra.mxu0 %v1673
      %1683 = vmatprep.subr.bf16.mxu0 0
      %1684 = vmatpush1.bf16.msra.mxu0 0
      %1685 = vmatprep.subr.bf16.mxu0 0
      %1686 = vmatpush1.bf16.msra.mxu0 0
      %1687 = vmatprep.subr.bf16.mxu0 0
      %1688 = vmatpush1.bf16.msra.mxu0 0
      %1689 = vmatprep.subr.bf16.mxu0 0
      %1690 = vmatpush1.bf16.msra.mxu0 0
      %1691 = vmatprep.subr.bf16.mxu0 0
      %1692 = vmatpush1.bf16.msra.mxu0 0
      %1693 = vmatprep.subr.bf16.mxu0 0
      %1694 = vmatpush1.bf16.msra.mxu0 0
      %1695 = vmatprep.subr.bf16.mxu0 0
      %1696 = vmatpush1.bf16.msra.mxu0 0
      %1697 = vmatprep.subr.bf16.mxu0 0
      %1698 = vmatpush1.bf16.msra.mxu0 0
      %1699 = vmatprep.subr.bf16.mxu0 0
      %1700 = vmatpush1.bf16.msra.mxu0 0
      %1701 = vmatprep.subr.bf16.mxu0 0
      %1702 = vmatpush1.bf16.msra.mxu0 0
      %1703 = vmatprep.subr.bf16.mxu0 0
      %1704 = vmatpush1.bf16.msra.mxu0 0
      %1705 = vmatprep.subr.bf16.mxu0 0
      %1706 = vmatpush1.bf16.msra.mxu0 0
      %1707 = vmatprep.subr.bf16.mxu0 0
      %1708 = vmatpush1.bf16.msra.mxu0 0
      %1709 = vmatprep.subr.bf16.mxu0 0
      %1710 = vmatpush1.bf16.msra.mxu0 0
      %1711 = vmatprep.mubr.bf16.mxu0 0
      %1712 = vmatmul.mubr.bf16.gmra.mrb[0].mxu0 %v1677
      %v1713 = vpop.f32.mrb[0].mxu0
      %v1714 = vadd.f32 %v1663, %v1713
      %v1715 = vpop.f32.mrb[0].mxu0
      %v1716 = vpop.f32.mrb[0].mxu0
      %v1717 = vpop.f32.mrb[0].mxu0
      %1718 = vdwg.mxu0
      %v1719 = vmul.f32 %v1714, %v1714
      %v1720 = vmul.f32 %v1714, %v1719
      %v1721 = vmul.f32 %v1720, 0.044715
      %v1722 = vadd.f32 %v1714, %v1721
      %v1723 = vmul.f32 %v1722, 0.7978846
      %v1724 = vtanh.pop %v1723
      %v1725 = vadd.f32 %v1724, 1.0
      %v1726 = vmul.f32 %v1725, 0.5
      %v1727 = vmul.f32 %v1714, %v1726
      %v1728 = vpack.c.bf16 %v1727, %v1727
      %v1729 = vld [vmem:[%s14] sm:$0xf]
      %v1730 = vld [vmem:[%s14 + $0x4] sm:$0xf]
      %v1731 = vld [vmem:[%s14 + $0x8] sm:$0xf]
      %v1732 = vld [vmem:[%s14 + $0xc] sm:$0xf]
      %v1733 = vld [vmem:[%s14 + $0x10] sm:$0xf]
      %v1734 = vld [vmem:[%s14 + $0x14] sm:$0xf]
      %v1735 = vld [vmem:[%s14 + $0x18] sm:$0xf]
      %v1736 = vld [vmem:[%s14 + $0x1c] sm:$0xf]
      %v1737 = vld [vmem:[%s2 + $0x9] sm:$0x1]
      %v1738 = vlaneseq
      %v1739 = vshrl.u32 %v1738, 7
      %v1740 = vsub.s32 0, %v1739
      %v1741 = vrot.slane %v1737, %v1740
      %v1750 = vunpack.c.l.b16 %v1729
      %v1751 = vunpack.c.l.b16 %v1730
      %v1752 = vunpack.c.l.b16 %v1731
      %v1753 = vunpack.c.l.b16 %v1732
      %v1754 = vunpack.c.l.b16 %v1733
      %v1755 = vunpack.c.l.b16 %v1734
      %v1756 = vunpack.c.l.b16 %v1735
      %v1757 = vunpack.c.l.b16 %v1736
      %v1758 = vpack.c.b16 %v1751, %v1750
      %v1759 = vpack.c.b16 %v1753, %v1752
      %v1760 = vpack.c.b16 %v1755, %v1754
      %v1761 = vpack.c.b16 %v1757, %v1756
      %v1767 = vsel %vm755, %v1728, 0
      %1769 = vmatprep.subr.bf16.mxu0 0
      %1770 = vmatpush1.bf16.msra.mxu0 %v1758
      %1771 = vmatprep.subr.bf16.mxu0 0
      %1772 = vmatpush1.bf16.msra.mxu0 %v1759
      %1773 = vmatprep.subr.bf16.mxu0 0
      %1774 = vmatpush1.bf16.msra.mxu0 %v1760
      %1775 = vmatprep.subr.bf16.mxu0 0
      %1776 = vmatpush1.bf16.msra.mxu0 %v1761
      %1777 = vmatprep.subr.bf16.mxu0 0
      %1778 = vmatpush1.bf16.msra.mxu0 0
      %1779 = vmatprep.subr.bf16.mxu0 0
      %1780 = vmatpush1.bf16.msra.mxu0 0
      %1781 = vmatprep.subr.bf16.mxu0 0
      %1782 = vmatpush1.bf16.msra.mxu0 0
      %1783 = vmatprep.subr.bf16.mxu0 0
      %1784 = vmatpush1.bf16.msra.mxu0 0
      %1785 = vmatprep.subr.bf16.mxu0 0
      %1786 = vmatpush1.bf16.msra.mxu0 0
      %1787 = vmatprep.subr.bf16.mxu0 0
      %1788 = vmatpush1.bf16.msra.mxu0 0
      %1789 = vmatprep.subr.bf16.mxu0 0
      %1790 = vmatpush1.bf16.msra.mxu0 0
      %1791 = vmatprep.subr.bf16.mxu0 0
      %1792 = vmatpush1.bf16.msra.mxu0 0
      %1793 = vmatprep.subr.bf16.mxu0 0
      %1794 = vmatpush1.bf16.msra.mxu0 0
      %1795 = vmatprep.subr.bf16.mxu0 0
      %1796 = vmatpush1.bf16.msra.mxu0 0
      %1797 = vmatprep.subr.bf16.mxu0 0
      %1798 = vmatpush1.bf16.msra.mxu0 0
      %1799 = vmatprep.subr.bf16.mxu0 0
      %1800 = vmatpush1.bf16.msra.mxu0 0
      %1801 = vmatprep.mubr.bf16.mxu0 0
      %1802 = vmatmul.mubr.bf16.gmra.mrb[0].mxu0 %v1767
      %v1803 = vpop.f32.mrb[0].mxu0
      %v1804 = vadd.f32 %v1741, %v1803
      %v1805 = vpop.f32.mrb[0].mxu0
      %v1806 = vpop.f32.mrb[0].mxu0
      %v1807 = vpop.f32.mrb[0].mxu0
      %1808 = vdwg.mxu0
      %v1809 = vadd.f32 %v1653, %v1804
      %v1810 = vsel %vm1628, %v1809, 0.0
      %1811 = vadd.xlane.f32.xlu0 %v1810
      %v1812 = vpop.xlane.xlu0 %1811
      %v1813 = vmul.f32 %v1812, %v811
      %v1814 = vsub.f32 %v1809, %v1813
      %v1815 = vmul.f32 %v1814, %v1814
      %v1816 = vsel %vm1628, %v1815, 0.0
      %1817 = vadd.xlane.f32.xlu0 %v1816
      %v1818 = vpop.xlane.xlu0 %1817
      %v1819 = vmul.f32 %v1818, %v811
      %v1820 = vadd.f32 %v1819, 1e-06
      %v1821 = vrsqrt.pop %v1820
      %v1822 = vmul.f32 %v1814, %v1821
      %v1823 = vld [vmem:[%s2 + $0x15] sm:$0x1]
      %v1824 = vlaneseq
      %v1825 = vshrl.u32 %v1824, 7
      %v1826 = vsub.s32 0, %v1825
      %v1827 = vrot.slane %v1823, %v1826
      %v1828 = vmul.f32 %v1822, %v1827
      %v1829 = vld [vmem:[%s2 + $0x16] sm:$0x1]
      %v1830 = vlaneseq
      %v1831 = vshrl.u32 %v1830, 7
      %v1832 = vsub.s32 0, %v1831
      %v1833 = vrot.slane %v1829, %v1832
      %v1834 = vadd.f32 %v1828, %v1833
      %v1835 = vpack.c.bf16 %v1834, %v1834
      %v1836 = vld [vmem:[%s17] sm:$0xf]
      %v1837 = vld [vmem:[%s17 + $0x4] sm:$0xf]
      %v1838 = vld [vmem:[%s17 + $0x8] sm:$0xf]
      %v1839 = vld [vmem:[%s17 + $0xc] sm:$0xf]
      %v1840 = vld [vmem:[%s2 + $0xc] sm:$0x1]
      %v1842 = vshrl.u32 %v1835, 16
      %v1848 = vunpack.c.l.b16 %v1836
      %v1849 = vunpack.c.l.b16 %v1837
      %v1850 = vunpack.c.l.b16 %v1838
      %v1851 = vunpack.c.l.b16 %v1839
      %v1852 = vpack.c.b16 %v1849, %v1848
      %v1853 = vpack.c.b16 %v1851, %v1850
      %v1857 = vsel %vm804, %v1842, 0
      %1859 = vmatprep.subr.bf16.mxu0 0
      %1860 = vmatpush1.bf16.msra.mxu0 %v1852
      %1861 = vmatprep.subr.bf16.mxu0 0
      %1862 = vmatpush1.bf16.msra.mxu0 %v1853
      %1863 = vmatprep.subr.bf16.mxu0 0
      %1864 = vmatpush1.bf16.msra.mxu0 0
      %1865 = vmatprep.subr.bf16.mxu0 0
      %1866 = vmatpush1.bf16.msra.mxu0 0
      %1867 = vmatprep.subr.bf16.mxu0 0
      %1868 = vmatpush1.bf16.msra.mxu0 0
      %1869 = vmatprep.subr.bf16.mxu0 0
      %1870 = vmatpush1.bf16.msra.mxu0 0
      %1871 = vmatprep.subr.bf16.mxu0 0
      %1872 = vmatpush1.bf16.msra.mxu0 0
      %1873 = vmatprep.subr.bf16.mxu0 0
      %1874 = vmatpush1.bf16.msra.mxu0 0
      %1875 = vmatprep.subr.bf16.mxu0 0
      %1876 = vmatpush1.bf16.msra.mxu0 0
      %1877 = vmatprep.subr.bf16.mxu0 0
      %1878 = vmatpush1.bf16.msra.mxu0 0
      %1879 = vmatprep.subr.bf16.mxu0 0
      %1880 = vmatpush1.bf16.msra.mxu0 0
      %1881 = vmatprep.subr.bf16.mxu0 0
      %1882 = vmatpush1.bf16.msra.mxu0 0
      %1883 = vmatprep.subr.bf16.mxu0 0
      %1884 = vmatpush1.bf16.msra.mxu0 0
      %1885 = vmatprep.subr.bf16.mxu0 0
      %1886 = vmatpush1.bf16.msra.mxu0 0
      %1887 = vmatprep.subr.bf16.mxu0 0
      %1888 = vmatpush1.bf16.msra.mxu0 0
      %1889 = vmatprep.subr.bf16.mxu0 0
      %1890 = vmatpush1.bf16.msra.mxu0 0
      %1891 = vmatprep.mubr.bf16.mxu0 0
      %1892 = vmatmul.mubr.bf16.gmra.mrb[0].mxu0 %v1857
      %v1893 = vpop.f32.mrb[0].mxu0
      %v1894 = vadd.f32 %v1840, %v1893
      %v1895 = vpop.f32.mrb[0].mxu0
      %v1896 = vpop.f32.mrb[0].mxu0
      %v1897 = vpop.f32.mrb[0].mxu0
      %1898 = vdwg.mxu0
      %v1899 = vmul.f32 %v1894, %v1894
      %v1900 = vmul.f32 %v1894, %v1899
      %v1901 = vmul.f32 %v1900, 0.044715
      %v1902 = vadd.f32 %v1894, %v1901
      %v1903 = vmul.f32 %v1902, 0.7978846
      %v1904 = vtanh.pop %v1903
      %v1905 = vadd.f32 %v1904, 1.0
      %v1906 = vmul.f32 %v1905, 0.5
      %v1907 = vmul.f32 %v1894, %v1906
      %v1908 = vpack.c.bf16 %v1907, %v1907
      %v1909 = vld [vmem:[%s18] sm:$0xf]
      %v1910 = vld [vmem:[%s18 + $0x4] sm:$0xf]
      %v1911 = vld [vmem:[%s18 + $0x8] sm:$0xf]
      %v1912 = vld [vmem:[%s18 + $0xc] sm:$0xf]
      %v1913 = vld [vmem:[%s2 + $0xd] sm:$0x1]
      %v1918 = vunpack.c.l.b16 %v1909
      %v1919 = vunpack.c.l.b16 %v1910
      %v1920 = vunpack.c.l.b16 %v1911
      %v1921 = vunpack.c.l.b16 %v1912
      %v1922 = vpack.c.b16 %v1919, %v1918
      %v1923 = vpack.c.b16 %v1921, %v1920
      %v1927 = vsel %vm804, %v1908, 0
      %1929 = vmatprep.subr.bf16.mxu0 0
      %1930 = vmatpush1.bf16.msra.mxu0 %v1922
      %1931 = vmatprep.subr.bf16.mxu0 0
      %1932 = vmatpush1.bf16.msra.mxu0 %v1923
      %1933 = vmatprep.subr.bf16.mxu0 0
      %1934 = vmatpush1.bf16.msra.mxu0 0
      %1935 = vmatprep.subr.bf16.mxu0 0
      %1936 = vmatpush1.bf16.msra.mxu0 0
      %1937 = vmatprep.subr.bf16.mxu0 0
      %1938 = vmatpush1.bf16.msra.mxu0 0
      %1939 = vmatprep.subr.bf16.mxu0 0
      %1940 = vmatpush1.bf16.msra.mxu0 0
      %1941 = vmatprep.subr.bf16.mxu0 0
      %1942 = vmatpush1.bf16.msra.mxu0 0
      %1943 = vmatprep.subr.bf16.mxu0 0
      %1944 = vmatpush1.bf16.msra.mxu0 0
      %1945 = vmatprep.subr.bf16.mxu0 0
      %1946 = vmatpush1.bf16.msra.mxu0 0
      %1947 = vmatprep.subr.bf16.mxu0 0
      %1948 = vmatpush1.bf16.msra.mxu0 0
      %1949 = vmatprep.subr.bf16.mxu0 0
      %1950 = vmatpush1.bf16.msra.mxu0 0
      %1951 = vmatprep.subr.bf16.mxu0 0
      %1952 = vmatpush1.bf16.msra.mxu0 0
      %1953 = vmatprep.subr.bf16.mxu0 0
      %1954 = vmatpush1.bf16.msra.mxu0 0
      %1955 = vmatprep.subr.bf16.mxu0 0
      %1956 = vmatpush1.bf16.msra.mxu0 0
      %1957 = vmatprep.subr.bf16.mxu0 0
      %1958 = vmatpush1.bf16.msra.mxu0 0
      %1959 = vmatprep.subr.bf16.mxu0 0
      %1960 = vmatpush1.bf16.msra.mxu0 0
      %1961 = vmatprep.mubr.bf16.mxu0 0
      %1962 = vmatmul.mubr.bf16.gmra.mrb[0].mxu0 %v1927
      %v1963 = vpop.f32.mrb[0].mxu0
      %v1964 = vadd.f32 %v1913, %v1963
      %v1965 = vpop.f32.mrb[0].mxu0
      %v1966 = vpop.f32.mrb[0].mxu0
      %v1967 = vpop.f32.mrb[0].mxu0
      %1968 = vdwg.mxu0
      %v1969 = vld [vmem:[%s15] sm:$0xf]
      %v1970 = vld [vmem:[%s15 + $0x4] sm:$0xf]
      %v1971 = vld [vmem:[%s15 + $0x8] sm:$0xf]
      %v1972 = vld [vmem:[%s15 + $0xc] sm:$0xf]
      %v1973 = vld [vmem:[%s2 + $0xa] sm:$0x1]
      %v1974 = vlaneseq
      %v1975 = vshrl.u32 %v1974, 7
      %v1976 = vsub.s32 0, %v1975
      %v1977 = vrot.slane %v1973, %v1976
      %v1982 = vunpack.c.l.b16 %v1969
      %v1983 = vunpack.c.l.b16 %v1970
      %v1984 = vunpack.c.l.b16 %v1971
      %v1985 = vunpack.c.l.b16 %v1972
      %v1986 = vpack.c.b16 %v1983, %v1982
      %v1987 = vpack.c.b16 %v1985, %v1984
      %1990 = vmatprep.subr.bf16.mxu0 0
      %1991 = vmatpush1.bf16.msra.mxu0 %v1986
      %1992 = vmatprep.subr.bf16.mxu0 0
      %1993 = vmatpush1.bf16.msra.mxu0 %v1987
      %1994 = vmatprep.subr.bf16.mxu0 0
      %1995 = vmatpush1.bf16.msra.mxu0 0
      %1996 = vmatprep.subr.bf16.mxu0 0
      %1997 = vmatpush1.bf16.msra.mxu0 0
      %1998 = vmatprep.subr.bf16.mxu0 0
      %1999 = vmatpush1.bf16.msra.mxu0 0
      %2000 = vmatprep.subr.bf16.mxu0 0
      %2001 = vmatpush1.bf16.msra.mxu0 0
      %2002 = vmatprep.subr.bf16.mxu0 0
      %2003 = vmatpush1.bf16.msra.mxu0 0
      %2004 = vmatprep.subr.bf16.mxu0 0
      %2005 = vmatpush1.bf16.msra.mxu0 0
      %2006 = vmatprep.subr.bf16.mxu0 0
      %2007 = vmatpush1.bf16.msra.mxu0 0
      %2008 = vmatprep.subr.bf16.mxu0 0
      %2009 = vmatpush1.bf16.msra.mxu0 0
      %2010 = vmatprep.subr.bf16.mxu0 0
      %2011 = vmatpush1.bf16.msra.mxu0 0
      %2012 = vmatprep.subr.bf16.mxu0 0
      %2013 = vmatpush1.bf16.msra.mxu0 0
      %2014 = vmatprep.subr.bf16.mxu0 0
      %2015 = vmatpush1.bf16.msra.mxu0 0
      %2016 = vmatprep.subr.bf16.mxu0 0
      %2017 = vmatpush1.bf16.msra.mxu0 0
      %2018 = vmatprep.subr.bf16.mxu0 0
      %2019 = vmatpush1.bf16.msra.mxu0 0
      %2020 = vmatprep.subr.bf16.mxu0 0
      %2021 = vmatpush1.bf16.msra.mxu0 0
      %2022 = vmatprep.mubr.bf16.mxu0 0
      %2023 = vmatmul.mubr.bf16.gmra.mrb[0].mxu0 %v1406
      %v2024 = vpop.f32.mrb[0].mxu0
      %v2025 = vadd.f32 %v1977, %v2024
      %v2026 = vpop.f32.mrb[0].mxu0
      %v2027 = vpop.f32.mrb[0].mxu0
      %v2028 = vadd.f32 %v1977, %v2027
      %v2029 = vpop.f32.mrb[0].mxu0
      %2030 = vdwg.mxu0
      %v2031 = vmul.f32 %v2025, %v2025
      %v2032 = vmul.f32 %v2028, %v2028
      %v2033 = vmul.f32 %v2025, %v2031
      %v2034 = vmul.f32 %v2028, %v2032
      %v2035 = vmul.f32 %v2033, 0.044715
      %v2036 = vmul.f32 %v2034, 0.044715
      %v2037 = vadd.f32 %v2025, %v2035
      %v2038 = vadd.f32 %v2028, %v2036
      %v2039 = vmul.f32 %v2037, 0.7978846
      %v2040 = vmul.f32 %v2038, 0.7978846
      %v2041 = vtanh.pop %v2039
      %v2042 = vtanh.pop %v2040
      %v2043 = vadd.f32 %v2041, 1.0
      %v2044 = vadd.f32 %v2042, 1.0
      %v2045 = vmul.f32 %v2043, 0.5
      %v2046 = vmul.f32 %v2044, 0.5
      %v2047 = vmul.f32 %v2025, %v2045
      %v2048 = vmul.f32 %v2028, %v2046
      %v2049 = vpack.c.bf16 %v2048, %v2047
      %v2050 = vld [vmem:[%s16] sm:$0xf]
      %v2051 = vld [vmem:[%s16 + $0x4] sm:$0xf]
      %v2052 = vld [vmem:[%s16 + $0x8] sm:$0xf]
      %v2053 = vld [vmem:[%s16 + $0xc] sm:$0xf]
      %v2054 = vld [vmem:[%s16 + $0x10] sm:$0xf]
      %v2055 = vld [vmem:[%s16 + $0x14] sm:$0xf]
      %v2056 = vld [vmem:[%s16 + $0x18] sm:$0xf]
      %v2057 = vld [vmem:[%s16 + $0x1c] sm:$0xf]
      %v2058 = vld [vmem:[%s2 + $0xb] sm:$0x1]
      %v2059 = vlaneseq
      %v2060 = vshrl.u32 %v2059, 7
      %v2061 = vsub.s32 0, %v2060
      %v2062 = vrot.slane %v2058, %v2061
      %v2071 = vunpack.c.l.b16 %v2050
      %v2072 = vunpack.c.l.b16 %v2051
      %v2073 = vunpack.c.l.b16 %v2052
      %v2074 = vunpack.c.l.b16 %v2053
      %v2075 = vunpack.c.l.b16 %v2054
      %v2076 = vunpack.c.l.b16 %v2055
      %v2077 = vunpack.c.l.b16 %v2056
      %v2078 = vunpack.c.l.b16 %v2057
      %v2079 = vpack.c.b16 %v2072, %v2071
      %v2080 = vpack.c.b16 %v2074, %v2073
      %v2081 = vpack.c.b16 %v2076, %v2075
      %v2082 = vpack.c.b16 %v2078, %v2077
      %v2088 = vsel %vm755, %v2049, 0
      %2090 = vmatprep.subr.bf16.mxu0 0
      %2091 = vmatpush1.bf16.msra.mxu0 %v2079
      %2092 = vmatprep.subr.bf16.mxu0 0
      %2093 = vmatpush1.bf16.msra.mxu0 %v2080
      %2094 = vmatprep.subr.bf16.mxu0 0
      %2095 = vmatpush1.bf16.msra.mxu0 %v2081
      %2096 = vmatprep.subr.bf16.mxu0 0
      %2097 = vmatpush1.bf16.msra.mxu0 %v2082
      %2098 = vmatprep.subr.bf16.mxu0 0
      %2099 = vmatpush1.bf16.msra.mxu0 0
      %2100 = vmatprep.subr.bf16.mxu0 0
      %2101 = vmatpush1.bf16.msra.mxu0 0
      %2102 = vmatprep.subr.bf16.mxu0 0
      %2103 = vmatpush1.bf16.msra.mxu0 0
      %2104 = vmatprep.subr.bf16.mxu0 0
      %2105 = vmatpush1.bf16.msra.mxu0 0
      %2106 = vmatprep.subr.bf16.mxu0 0
      %2107 = vmatpush1.bf16.msra.mxu0 0
      %2108 = vmatprep.subr.bf16.mxu0 0
      %2109 = vmatpush1.bf16.msra.mxu0 0
      %2110 = vmatprep.subr.bf16.mxu0 0
      %2111 = vmatpush1.bf16.msra.mxu0 0
      %2112 = vmatprep.subr.bf16.mxu0 0
      %2113 = vmatpush1.bf16.msra.mxu0 0
      %2114 = vmatprep.subr.bf16.mxu0 0
      %2115 = vmatpush1.bf16.msra.mxu0 0
      %2116 = vmatprep.subr.bf16.mxu0 0
      %2117 = vmatpush1.bf16.msra.mxu0 0
      %2118 = vmatprep.subr.bf16.mxu0 0
      %2119 = vmatpush1.bf16.msra.mxu0 0
      %2120 = vmatprep.subr.bf16.mxu0 0
      %2121 = vmatpush1.bf16.msra.mxu0 0
      %2122 = vmatprep.mubr.bf16.mxu0 0
      %2123 = vmatmul.mubr.bf16.gmra.mrb[0].mxu0 %v2088
      %v2124 = vpop.f32.mrb[0].mxu0
      %v2125 = vadd.f32 %v2062, %v2124
      %v2126 = vpop.f32.mrb[0].mxu0
      %v2127 = vpop.f32.mrb[0].mxu0
      %v2128 = vadd.f32 %v2062, %v2127
      %v2129 = vpop.f32.mrb[0].mxu0
      %2130 = vdwg.mxu0
      %v2131 = vmul.f32 %v2125, %v2125
      %v2132 = vmul.f32 %v2128, %v2128
      %v2133 = vmul.f32 %v2125, %v2131
      %v2134 = vmul.f32 %v2128, %v2132
      %v2135 = vmul.f32 %v2133, 0.044715
      %v2136 = vmul.f32 %v2134, 0.044715
      %v2137 = vadd.f32 %v2125, %v2135
      %v2138 = vadd.f32 %v2128, %v2136
      %v2139 = vmul.f32 %v2137, 0.7978846
      %v2140 = vmul.f32 %v2138, 0.7978846
      %v2141 = vtanh.pop %v2139
      %v2142 = vtanh.pop %v2140
      %v2143 = vadd.f32 %v2141, 1.0
      %v2144 = vadd.f32 %v2142, 1.0
      %v2145 = vmul.f32 %v2143, 0.5
      %v2146 = vmul.f32 %v2144, 0.5
      %v2147 = vmul.f32 %v2125, %v2145
      %v2148 = vmul.f32 %v2128, %v2146
      %v2149 = vlaneseq
      %v2150 = vshrl.u32 %v2149, 7
      %v2151 = vsub.s32 0, %v2150
      %v2152 = vrot.slane %v1964, %v2151
      %v2153 = vmul.f32 %v2147, %v2152
      %v2154 = vmul.f32 %v2148, %v2152
      %v2155 = vpack.c.bf16 %v2154, %v2153
      %v2156 = vld [vmem:[%s19] sm:$0xf]
      %v2157 = vld [vmem:[%s19 + $0x4] sm:$0xf]
      %v2158 = vld [vmem:[%s19 + $0x8] sm:$0xf]
      %v2159 = vld [vmem:[%s19 + $0xc] sm:$0xf]
      %v2160 = vld [vmem:[%s19 + $0x10] sm:$0xf]
      %v2161 = vld [vmem:[%s19 + $0x14] sm:$0xf]
      %v2162 = vld [vmem:[%s19 + $0x18] sm:$0xf]
      %v2163 = vld [vmem:[%s19 + $0x1c] sm:$0xf]
      %v2164 = vld [vmem:[%s19 + $0x20] sm:$0xf]
      %v2165 = vld [vmem:[%s19 + $0x24] sm:$0xf]
      %v2166 = vld [vmem:[%s19 + $0x28] sm:$0xf]
      %v2167 = vld [vmem:[%s19 + $0x2c] sm:$0xf]
      %v2168 = vld [vmem:[%s19 + $0x30] sm:$0xf]
      %v2169 = vld [vmem:[%s19 + $0x34] sm:$0xf]
      %v2170 = vld [vmem:[%s19 + $0x38] sm:$0xf]
      %v2171 = vld [vmem:[%s19 + $0x3c] sm:$0xf]
      %v2188 = vunpack.c.l.b16 %v2156
      %v2189 = vunpack.c.l.b16 %v2157
      %v2190 = vunpack.c.l.b16 %v2158
      %v2191 = vunpack.c.l.b16 %v2159
      %v2192 = vunpack.c.l.b16 %v2160
      %v2193 = vunpack.c.l.b16 %v2161
      %v2194 = vunpack.c.l.b16 %v2162
      %v2195 = vunpack.c.l.b16 %v2163
      %v2196 = vunpack.c.l.b16 %v2164
      %v2197 = vunpack.c.l.b16 %v2165
      %v2198 = vunpack.c.l.b16 %v2166
      %v2199 = vunpack.c.l.b16 %v2167
      %v2200 = vunpack.c.l.b16 %v2168
      %v2201 = vunpack.c.l.b16 %v2169
      %v2202 = vunpack.c.l.b16 %v2170
      %v2203 = vunpack.c.l.b16 %v2171
      %v2204 = vpack.c.b16 %v2189, %v2188
      %v2205 = vpack.c.b16 %v2191, %v2190
      %v2206 = vpack.c.b16 %v2193, %v2192
      %v2207 = vpack.c.b16 %v2195, %v2194
      %v2208 = vpack.c.b16 %v2197, %v2196
      %v2209 = vpack.c.b16 %v2199, %v2198
      %v2210 = vpack.c.b16 %v2201, %v2200
      %v2211 = vpack.c.b16 %v2203, %v2202
      %2220 = vmatprep.subr.bf16.mxu0 0
      %2221 = vmatpush1.bf16.msra.mxu0 %v2204
      %2222 = vmatprep.subr.bf16.mxu0 0
      %2223 = vmatpush1.bf16.msra.mxu0 %v2205
      %2224 = vmatprep.subr.bf16.mxu0 0
      %2225 = vmatpush1.bf16.msra.mxu0 %v2206
      %2226 = vmatprep.subr.bf16.mxu0 0
      %2227 = vmatpush1.bf16.msra.mxu0 %v2207
      %2228 = vmatprep.subr.bf16.mxu0 0
      %2229 = vmatpush1.bf16.msra.mxu0 %v2208
      %2230 = vmatprep.subr.bf16.mxu0 0
      %2231 = vmatpush1.bf16.msra.mxu0 %v2209
      %2232 = vmatprep.subr.bf16.mxu0 0
      %2233 = vmatpush1.bf16.msra.mxu0 %v2210
      %2234 = vmatprep.subr.bf16.mxu0 0
      %2235 = vmatpush1.bf16.msra.mxu0 %v2211
      %2236 = vmatprep.subr.bf16.mxu0 0
      %2237 = vmatpush1.bf16.msra.mxu0 0
      %2238 = vmatprep.subr.bf16.mxu0 0
      %2239 = vmatpush1.bf16.msra.mxu0 0
      %2240 = vmatprep.subr.bf16.mxu0 0
      %2241 = vmatpush1.bf16.msra.mxu0 0
      %2242 = vmatprep.subr.bf16.mxu0 0
      %2243 = vmatpush1.bf16.msra.mxu0 0
      %2244 = vmatprep.subr.bf16.mxu0 0
      %2245 = vmatpush1.bf16.msra.mxu0 0
      %2246 = vmatprep.subr.bf16.mxu0 0
      %2247 = vmatpush1.bf16.msra.mxu0 0
      %2248 = vmatprep.subr.bf16.mxu0 0
      %2249 = vmatpush1.bf16.msra.mxu0 0
      %2250 = vmatprep.subr.bf16.mxu0 0
      %2251 = vmatpush1.bf16.msra.mxu0 0
      %2252 = vmatprep.mubr.bf16.mxu0 0
      %2253 = vmatmul.mubr.bf16.gmra.mrb[0].mxu0 %v2155
      %v2254 = vpop.f32.mrb[0].mxu0
      %v2255 = vadd.f32 0.0, %v2254
      %v2256 = vpop.f32.mrb[0].mxu0
      %v2257 = vpop.f32.mrb[0].mxu0
      %v2258 = vadd.f32 0.0, %v2257
      %v2259 = vpop.f32.mrb[0].mxu0
      %2260 = vdwg.mxu0
      %2261 = vst.msk [vmem:[%s646] sm:$0xff] %vm963, %v2255
      %2262 = vst.msk [vmem:[%s646 + $0x8] sm:$0xff] %vm963, %v2258
      %p2263 = scmp.lt.s32.totalorder %s31, 1
      %s2264 = scalar_select %p2263, %s31, 1
      %s2265 = smul.addr %s2264, 2
      %s2266 = smul.addr %s2265, 8
      %s2267 = scalar_lea.vmem %s20, %s2266
      // Predicated region
      $region101: #{sam_with_bbox_forward.1} parent=99 // pred_check
        %p2268 = pneg %p479
      $region102: #{sam_with_bbox_forward.1} parent=99 // pred_check_branch
        %2270 = sbr.rel (%p2268) target = $region104
      $region103: #{sam_with_bbox_forward.1} parent=99 // pred_region
        _
      $region104: #{sam_with_bbox_forward.1} parent=99 // pred_fallthru
        _
    $region100: #{sam_with_bbox_forward.1} parent=5 // pred_fallthru
      _
    %p2271 = scmp.le.s32.totalorder 2, %s26
    // Predicated region
    $region105: #{sam_with_bbox_forward.1} parent=5 // pred_check
      %p2272 = pneg %p2271
    $region106: #{sam_with_bbox_forward.1} parent=5 // pred_check_branch
      %2274 = sbr.rel (%p2272) target = $region108
    $region107: #{sam_with_bbox_forward.1} parent=5 // pred_region
      %s2275 = ssub.s32 %s26, 2
      // Predicated region
      $region109: #{sam_with_bbox_forward.1} parent=107 // pred_check
        %p2276 = pneg %p485
      $region110: #{sam_with_bbox_forward.1} parent=107 // pred_check_branch
        %2278 = sbr.rel (%p2276) target = $region112
      $region111: #{sam_with_bbox_forward.1} parent=107 // pred_region
        %p2279 = scmp.lt.s32.totalorder %s32, 1
        %s2280 = scalar_select %p2279, %s32, 1
        %s2281 = smul.addr %s2280, 2
        %s2282 = smul.addr %s2281, 8
        %s2283 = scalar_lea.vmem %s20, %s2282
      $region112: #{sam_with_bbox_forward.1} parent=107 // pred_fallthru
        _
    $region108: #{sam_with_bbox_forward.1} parent=5 // pred_fallthru
      _
  $region6: #{sam_with_bbox_forward.1} parent=0 // loop_footer
    %s30 = sadd.s32 1, %s26
  $region7: #{sam_with_bbox_forward.1} parent=0 // loop_footer_branch
    %25 = sbr.rel target = $region3
  $region8: #{sam_with_bbox_forward.1} parent=0 // loop_exit
    _

</llo_original>
